<compile_context>
chip_gen: v6e
topology: v6e:2x2x1
jax: 0.10.0
libtpu: 0.0.40
codegen_flags: <defaults>
</compile_context>

<pallas_src>
import math

import jax
import jax.numpy as jnp
from jax.experimental import pallas as pl
from jax.experimental.pallas import tpu as pltpu


def _round_up(v, m):
    return ((v + m - 1) // m) * m


def rff_fused_kernel(x_ref, rw_ref, off_ref, w_ref, b_ref, out_ref):
    """One fused step per batch tile: proj -> cos -> fused head matmul + bias."""
    # proj = x @ random_weights + offset       (tile_b, N), f32 MXU accumulation.
    proj = (
        jnp.dot(x_ref[...], rw_ref[...], preferred_element_type=jnp.float32)
        + off_ref[...]
    )
    # Feature map.  sqrt(2/N) is folded into w_ref by the wrapper.  When w_ref is
    # bf16 (v6e/v7x fast path) the cast before cos uses the bf16 EUP and the second
    # contraction is a native bf16 MXU matmul with f32 accumulation.
    feat = jnp.cos(proj.astype(w_ref.dtype))
    out_ref[...] = (
        jnp.dot(feat, w_ref[...], preferred_element_type=jnp.float32) + b_ref[...]
    ).astype(out_ref.dtype)


def make_fused_params(
    random_weights,   # (input_dim, n_components)
    random_offset,    # (n_components,)
    proj_weight,      # (output_dim, n_components)  PyTorch Linear layout
    proj_bias,        # (output_dim,)
    sv_weights,       # (output_dim, n_components)
    sv_bias,          # (output_dim,)
    *,
    use_bf16_features: bool = False,
):
    """Head fusion + scale folding.  Call once per parameter update, not per forward.

    feat@Wp.T + feat@Wsv.T == feat@(Wp+Wsv).T, and the sqrt(2/N) feature scale is
    folded into that combined weight so the kernel only does cos().
    """
    N = random_weights.shape[1]
    scale = math.sqrt(2.0 / N)
    w_comb = (proj_weight + sv_weights).T.astype(jnp.float32) * scale   # (N, O)
    if use_bf16_features:
        w_comb = w_comb.astype(jnp.bfloat16)   # v6e/v7x: bf16 EUP cos + bf16 MXU
    b_comb = (proj_bias + sv_bias).reshape(1, -1).astype(jnp.float32)   # (1, O)
    off_2d = random_offset.reshape(1, -1).astype(jnp.float32)           # (1, N)
    rw = random_weights.astype(jnp.float32)                             # (D, N)
    return rw, off_2d, w_comb, b_comb


def _vmem_estimate_bytes(tile_b, D, N, O, w_itemsize):
    """Rough padded-footprint estimate for the kernel's VMEM usage per step."""
    Dp, Np, Op = _round_up(D, 128), _round_up(N, 128), _round_up(O, 128)
    resident = (
        _round_up(D, 8) * Np * 4        # random_weights
        + 8 * Np * 4                    # offset row
        + _round_up(N, 8) * Op * w_itemsize   # fused head weight
        + 8 * Op * 4                    # fused bias row
    )
    pipelined = 2 * tile_b * (Dp + Op) * 4   # double-buffered x / out tiles
    temps = 3 * tile_b * Np * 4              # proj / feat intermediates + headroom
    return resident + pipelined + temps


def _pick_tile_b(B, D, N, O, w_itemsize):
    if B <= 8:
        return max(B, 1)
    # >= 2 grid steps so v7x's second TensorCore participates; tiles as large as
    # possible (multiple of 8, up to 1024) to amortize ~0.35us per-step overhead.
    tile = min(1024, max(8, ((B // 2) // 8) * 8))
    # Keep the per-step footprint well under every chip's scoped-VMEM budget
    # (v5e 16 MiB default raised via vmem_limit_bytes, v7x 64 MiB physical).
    while tile > 8 and _vmem_estimate_bytes(tile, D, N, O, w_itemsize) > (40 << 20):
        tile = max(8, ((tile // 2) // 8) * 8)
    return tile


# Probed on first call: whether this JAX build accepts pipeline_mode=pl.Buffered(1)
# on constant-index resident operands.
_SINGLE_BUFFER_RESIDENTS_OK = None


def differentiable_kernel_forward(x, rw, off_2d, w_comb, b_comb, *, tile_b=None):
    """x: (B, D) f32.  Fused params come from make_fused_params()."""
    global _SINGLE_BUFFER_RESIDENTS_OK

    B, D = x.shape
    Dn, N = rw.shape
    assert D == Dn, "input_dim mismatch"
    O = w_comb.shape[1]
    w_itemsize = jnp.dtype(w_comb.dtype).itemsize

    if tile_b is None:
        tile_b = _pick_tile_b(B, D, N, O, w_itemsize)
    tile_b = min(tile_b, max(B, 1))

    # Pad the batch to a multiple of tile_b (tail rows sliced off below).
    B_pad = _round_up(B, tile_b)
    x_p = x if B_pad == B else jnp.pad(x, ((0, B_pad - B), (0, 0)))

    grid = (B_pad // tile_b,)
    vmem_limit = int(
        min(max(32 << 20, 2 * _vmem_estimate_bytes(tile_b, D, N, O, w_itemsize)),
            48 << 20)
    )

    def _call(single_buffer_residents: bool):
        res_kw = (
            dict(pipeline_mode=pl.Buffered(1)) if single_buffer_residents else {}
        )
        return pl.pallas_call(
            rff_fused_kernel,
            out_shape=jax.ShapeDtypeStruct((B_pad, O), x.dtype),
            grid=grid,
            in_specs=[
                pl.BlockSpec((tile_b, D), lambda i: (i, 0)),            # x batch tile
                pl.BlockSpec((D, N), lambda i: (0, 0), **res_kw),       # random_weights
                pl.BlockSpec((1, N), lambda i: (0, 0), **res_kw),       # random_offset
                pl.BlockSpec((N, O), lambda i: (0, 0), **res_kw),       # fused head weight
                pl.BlockSpec((1, O), lambda i: (0, 0), **res_kw),       # fused bias
            ],
            out_specs=pl.BlockSpec((tile_b, O), lambda i: (i, 0)),
            compiler_params=pltpu.CompilerParams(
                dimension_semantics=("parallel",),   # batch tiles are independent
                vmem_limit_bytes=vmem_limit,
            ),
        )(x_p, rw, off_2d, w_comb, b_comb)

    if _SINGLE_BUFFER_RESIDENTS_OK is None:
        try:
            out = jax.block_until_ready(_call(True))
            _SINGLE_BUFFER_RESIDENTS_OK = True
        except Exception:
            _SINGLE_BUFFER_RESIDENTS_OK = False
            out = _call(False)
    else:
        out = _call(_SINGLE_BUFFER_RESIDENTS_OK)

    return out[:B] if B_pad != B else out


def reference_forward(x, random_weights, random_offset, proj_weight, proj_bias,
                      sv_weights, sv_bias):
    N = random_weights.shape[1]
    proj = x @ random_weights + random_offset
    feat = jnp.cos(proj) * math.sqrt(2.0 / N)
    output = feat @ proj_weight.T + proj_bias
    sv_output = feat @ sv_weights.T + sv_bias
    return output + sv_output


if __name__ == "__main__":
    # Small shapes consistent with the module.
    B, input_dim, output_dim, n_components = 8, 32, 16, 1024
    gamma = 0.1

    key = jax.random.PRNGKey(0)
    k_x, k_x2, k_rw, k_off, k_pw, k_pb, k_sw, k_sb = jax.random.split(key, 8)

    x = jax.random.normal(k_x, (B, input_dim), dtype=jnp.float32)

    # Deterministic parameter init (mirrors shapes in __init__).
    random_weights = jax.random.normal(
        k_rw, (input_dim, n_components), dtype=jnp.float32
    ) * math.sqrt(2.0 * gamma)
    random_offset = jax.random.uniform(
        k_off, (n_components,), dtype=jnp.float32
    ) * (2.0 * math.pi)
    proj_weight = jax.random.normal(k_pw, (output_dim, n_components), jnp.float32) * 0.02
    proj_bias = jax.random.normal(k_pb, (output_dim,), jnp.float32) * 0.02
    # Module inits these to zeros; use small nonzero values so the sv path is exercised.
    sv_weights = jax.random.normal(k_sw, (output_dim, n_components), jnp.float32) * 0.02
    sv_bias = jax.random.normal(k_sb, (output_dim,), jnp.float32) * 0.02

    # Fused params computed once (hoisted out of the per-forward hot path).
    fused_f32 = make_fused_params(random_weights, random_offset, proj_weight,
                                  proj_bias, sv_weights, sv_bias)

    # 1) Single-tile path (B=8).
    out = jax.block_until_ready(differentiable_kernel_forward(x, *fused_f32))
    ref = reference_forward(x, random_weights, random_offset, proj_weight,
                            proj_bias, sv_weights, sv_bias)
    assert out.shape == (B, output_dim)
    assert jnp.allclose(out, ref, atol=1e-4, rtol=1e-4), (
        f"max err {float(jnp.max(jnp.abs(out - ref)))}"
    )

    # 2) Multi-step "parallel" grid + padded (non-multiple) batch path.
    B2 = 40
    x2 = jax.random.normal(k_x2, (B2, input_dim), dtype=jnp.float32)
    out2 = jax.block_until_ready(differentiable_kernel_forward(x2, *fused_f32))
    ref2 = reference_forward(x2, random_weights, random_offset, proj_weight,
                             proj_bias, sv_weights, sv_bias)
    assert out2.shape == (B2, output_dim)
    assert jnp.allclose(out2, ref2, atol=1e-4, rtol=1e-4), (
        f"max err {float(jnp.max(jnp.abs(out2 - ref2)))}"
    )

    # 3) Optional bf16 feature path (v6e/v7x EUP/MXU fast path); looser tolerance.
    fused_bf16 = make_fused_params(random_weights, random_offset, proj_weight,
                                   proj_bias, sv_weights, sv_bias,
                                   use_bf16_features=True)
    out_bf16 = jax.block_until_ready(differentiable_kernel_forward(x, *fused_bf16))
    assert out_bf16.shape == (B, output_dim)
    assert float(jnp.max(jnp.abs(out_bf16 - ref))) < 5e-2

    print("KERNEL_OK")
</pallas_src>

<mosaic_0001>
module attributes {stable_mosaic.version = 11 : i64} {
  func.func @rff_fused_kernel(%arg0: i32, %arg1: memref<8x32xf32, #tpu.memory_space<vmem>>, %arg2: memref<32x1024xf32, #tpu.memory_space<vmem>>, %arg3: memref<1x1024xf32, #tpu.memory_space<vmem>>, %arg4: memref<1024x16xf32, #tpu.memory_space<vmem>>, %arg5: memref<1x16xf32, #tpu.memory_space<vmem>>, %arg6: memref<8x16xf32, #tpu.memory_space<vmem>>) attributes {dimension_semantics = [#tpu.dimension_semantics<parallel>], iteration_bounds = array<i64: 1>, scalar_prefetch = 0 : i64, scratch_operands = 0 : i64, tpu.core_type = #tpu.core_type<tc>, window_params = [{transform_indices = @transform_0, window_bounds = array<i64: 8, 32>}, {pipeline_mode = #tpu.pipeline_mode<synchronous>, transform_indices = @transform_1, window_bounds = array<i64: 32, 1024>}, {pipeline_mode = #tpu.pipeline_mode<synchronous>, transform_indices = @transform_2, window_bounds = array<i64: 1, 1024>}, {pipeline_mode = #tpu.pipeline_mode<synchronous>, transform_indices = @transform_3, window_bounds = array<i64: 1024, 16>}, {pipeline_mode = #tpu.pipeline_mode<synchronous>, transform_indices = @transform_4, window_bounds = array<i64: 1, 16>}, {transform_indices = @transform_5, window_bounds = array<i64: 8, 16>}]} {
    %c0 = arith.constant 0 : index
    %c0_0 = arith.constant 0 : index
    %0 = vector.load %arg1[%c0, %c0_0] : memref<8x32xf32, #tpu.memory_space<vmem>>, vector<8x32xf32>
    %c0_1 = arith.constant 0 : index
    %c0_2 = arith.constant 0 : index
    %1 = vector.load %arg2[%c0_1, %c0_2] : memref<32x1024xf32, #tpu.memory_space<vmem>>, vector<32x1024xf32>
    %cst = arith.constant dense<0.000000e+00> : vector<8x1024xf32>
    %2 = tpu.matmul %0, %1, %cst {dimension_numbers = #tpu.dot_dimension_numbers<[1], [0], [0], [1], [0, 0, 1, 1], [], []>} : vector<8x32xf32>, vector<32x1024xf32>, vector<8x1024xf32> -> vector<8x1024xf32>
    %c0_3 = arith.constant 0 : index
    %c0_4 = arith.constant 0 : index
    %3 = vector.load %arg3[%c0_3, %c0_4] : memref<1x1024xf32, #tpu.memory_space<vmem>>, vector<1x1024xf32>
    %4 = vector.broadcast %3 : vector<1x1024xf32> to vector<8x1024xf32>
    %5 = arith.addf %2, %4 : vector<8x1024xf32>
    %6 = math.cos %5 : vector<8x1024xf32>
    %c0_5 = arith.constant 0 : index
    %c0_6 = arith.constant 0 : index
    %7 = vector.load %arg4[%c0_5, %c0_6] : memref<1024x16xf32, #tpu.memory_space<vmem>>, vector<1024x16xf32>
    %cst_7 = arith.constant dense<0.000000e+00> : vector<8x16xf32>
    %8 = tpu.matmul %6, %7, %cst_7 {dimension_numbers = #tpu.dot_dimension_numbers<[1], [0], [0], [1], [0, 0, 1, 1], [], []>} : vector<8x1024xf32>, vector<1024x16xf32>, vector<8x16xf32> -> vector<8x16xf32>
    %c0_8 = arith.constant 0 : index
    %c0_9 = arith.constant 0 : index
    %9 = vector.load %arg5[%c0_8, %c0_9] : memref<1x16xf32, #tpu.memory_space<vmem>>, vector<1x16xf32>
    %10 = vector.broadcast %9 : vector<1x16xf32> to vector<8x16xf32>
    %11 = arith.addf %8, %10 : vector<8x16xf32>
    %c0_10 = arith.constant 0 : index
    %c0_11 = arith.constant 0 : index
    %12 = vector.load %arg6[%c0_10, %c0_11] : memref<8x16xf32, #tpu.memory_space<vmem>>, vector<8x16xf32>
    tpu.vector_store %arg6[%c0_10, %c0_11], %11 {strides = array<i32>} : memref<8x16xf32, #tpu.memory_space<vmem>>, vector<8x16xf32>,
    return
  }
  func.func @transform_0(%arg0: i32) -> (i32, i32) {
    %c0_i32 = arith.constant 0 : i32
    %c0_i32_0 = arith.constant 0 : i32
    return %arg0, %c0_i32 : i32, i32
  }
  func.func @transform_1(%arg0: i32) -> (i32, i32) {
    %c0_i32 = arith.constant 0 : i32
    %c0_i32_0 = arith.constant 0 : i32
    %c0_i32_1 = arith.constant 0 : i32
    return %c0_i32, %c0_i32_0 : i32, i32
  }
  func.func @transform_2(%arg0: i32) -> (i32, i32) {
    %c0_i32 = arith.constant 0 : i32
    %c0_i32_0 = arith.constant 0 : i32
    %c0_i32_1 = arith.constant 0 : i32
    return %c0_i32, %c0_i32_0 : i32, i32
  }
  func.func @transform_3(%arg0: i32) -> (i32, i32) {
    %c0_i32 = arith.constant 0 : i32
    %c0_i32_0 = arith.constant 0 : i32
    %c0_i32_1 = arith.constant 0 : i32
    return %c0_i32, %c0_i32_0 : i32, i32
  }
  func.func @transform_4(%arg0: i32) -> (i32, i32) {
    %c0_i32 = arith.constant 0 : i32
    %c0_i32_0 = arith.constant 0 : i32
    %c0_i32_1 = arith.constant 0 : i32
    return %c0_i32, %c0_i32_0 : i32, i32
  }
  func.func @transform_5(%arg0: i32) -> (i32, i32) {
    %c0_i32 = arith.constant 0 : i32
    %c0_i32_0 = arith.constant 0 : i32
    return %arg0, %c0_i32 : i32, i32
  }
}

module attributes {stable_mosaic.version = 11 : i64} {
  func.func @rff_fused_kernel(%arg0: i32, %arg1: memref<8x32xf32, #tpu.memory_space<vmem>>, %arg2: memref<32x1024xf32, #tpu.memory_space<vmem>>, %arg3: memref<1x1024xf32, #tpu.memory_space<vmem>>, %arg4: memref<1024x16xf32, #tpu.memory_space<vmem>>, %arg5: memref<1x16xf32, #tpu.memory_space<vmem>>, %arg6: memref<8x16xf32, #tpu.memory_space<vmem>>) attributes {dimension_semantics = [#tpu.dimension_semantics<parallel>], iteration_bounds = array<i64: 1>, scalar_prefetch = 0 : i64, scratch_operands = 0 : i64, tpu.core_type = #tpu.core_type<tc>, window_params = [{transform_indices = @transform_0, window_bounds = array<i64: 8, 32>}, {pipeline_mode = #tpu.pipeline_mode<synchronous>, transform_indices = @transform_1, window_bounds = array<i64: 32, 1024>}, {pipeline_mode = #tpu.pipeline_mode<synchronous>, transform_indices = @transform_2, window_bounds = array<i64: 1, 1024>}, {pipeline_mode = #tpu.pipeline_mode<synchronous>, transform_indices = @transform_3, window_bounds = array<i64: 1024, 16>}, {pipeline_mode = #tpu.pipeline_mode<synchronous>, transform_indices = @transform_4, window_bounds = array<i64: 1, 16>}, {transform_indices = @transform_5, window_bounds = array<i64: 8, 16>}]} {
    %c0 = arith.constant 0 : index
    %c0_0 = arith.constant 0 : index
    %0 = vector.load %arg1[%c0, %c0_0] : memref<8x32xf32, #tpu.memory_space<vmem>>, vector<8x32xf32>
    %c0_1 = arith.constant 0 : index
    %c0_2 = arith.constant 0 : index
    %1 = vector.load %arg2[%c0_1, %c0_2] : memref<32x1024xf32, #tpu.memory_space<vmem>>, vector<32x1024xf32>
    %cst = arith.constant dense<0.000000e+00> : vector<8x1024xf32>
    %2 = tpu.matmul %0, %1, %cst {dimension_numbers = #tpu.dot_dimension_numbers<[1], [0], [0], [1], [0, 0, 1, 1], [], []>} : vector<8x32xf32>, vector<32x1024xf32>, vector<8x1024xf32> -> vector<8x1024xf32>
    %c0_3 = arith.constant 0 : index
    %c0_4 = arith.constant 0 : index
    %3 = vector.load %arg3[%c0_3, %c0_4] : memref<1x1024xf32, #tpu.memory_space<vmem>>, vector<1x1024xf32>
    %4 = vector.broadcast %3 : vector<1x1024xf32> to vector<8x1024xf32>
    %5 = arith.addf %2, %4 : vector<8x1024xf32>
    %6 = math.cos %5 : vector<8x1024xf32>
    %c0_5 = arith.constant 0 : index
    %c0_6 = arith.constant 0 : index
    %7 = vector.load %arg4[%c0_5, %c0_6] : memref<1024x16xf32, #tpu.memory_space<vmem>>, vector<1024x16xf32>
    %cst_7 = arith.constant dense<0.000000e+00> : vector<8x16xf32>
    %8 = tpu.matmul %6, %7, %cst_7 {dimension_numbers = #tpu.dot_dimension_numbers<[1], [0], [0], [1], [0, 0, 1, 1], [], []>} : vector<8x1024xf32>, vector<1024x16xf32>, vector<8x16xf32> -> vector<8x16xf32>
    %c0_8 = arith.constant 0 : index
    %c0_9 = arith.constant 0 : index
    %9 = vector.load %arg5[%c0_8, %c0_9] : memref<1x16xf32, #tpu.memory_space<vmem>>, vector<1x16xf32>
    %10 = vector.broadcast %9 : vector<1x16xf32> to vector<8x16xf32>
    %11 = arith.addf %8, %10 : vector<8x16xf32>
    %c0_10 = arith.constant 0 : index
    %c0_11 = arith.constant 0 : index
    %12 = vector.load %arg6[%c0_10, %c0_11] : memref<8x16xf32, #tpu.memory_space<vmem>>, vector<8x16xf32>
    tpu.vector_store %arg6[%c0_10, %c0_11], %11 {strides = array<i32>} : memref<8x16xf32, #tpu.memory_space<vmem>>, vector<8x16xf32>,
    return
  }
  func.func @transform_0(%arg0: i32) -> (i32, i32) {
    %c0_i32 = arith.constant 0 : i32
    %c0_i32_0 = arith.constant 0 : i32
    return %arg0, %c0_i32 : i32, i32
  }
  func.func @transform_1(%arg0: i32) -> (i32, i32) {
    %c0_i32 = arith.constant 0 : i32
    %c0_i32_0 = arith.constant 0 : i32
    %c0_i32_1 = arith.constant 0 : i32
    return %c0_i32, %c0_i32_0 : i32, i32
  }
  func.func @transform_2(%arg0: i32) -> (i32, i32) {
    %c0_i32 = arith.constant 0 : i32
    %c0_i32_0 = arith.constant 0 : i32
    %c0_i32_1 = arith.constant 0 : i32
    return %c0_i32, %c0_i32_0 : i32, i32
  }
  func.func @transform_3(%arg0: i32) -> (i32, i32) {
    %c0_i32 = arith.constant 0 : i32
    %c0_i32_0 = arith.constant 0 : i32
    %c0_i32_1 = arith.constant 0 : i32
    return %c0_i32, %c0_i32_0 : i32, i32
  }
  func.func @transform_4(%arg0: i32) -> (i32, i32) {
    %c0_i32 = arith.constant 0 : i32
    %c0_i32_0 = arith.constant 0 : i32
    %c0_i32_1 = arith.constant 0 : i32
    return %c0_i32, %c0_i32_0 : i32, i32
  }
  func.func @transform_5(%arg0: i32) -> (i32, i32) {
    %c0_i32 = arith.constant 0 : i32
    %c0_i32_0 = arith.constant 0 : i32
    return %arg0, %c0_i32 : i32, i32
  }
}

</mosaic_0001>

<llo_original>
// kernel: tpu_custom_call.1
$region0: #{tpu_custom_call.1}
  #allocation0 [shape = 'u32[]', space=smem, size = 0x4, offset = 0x4, fixed_abs, tag = 'smem constant byte address 0x4 - core index']
  #allocation1 [shape = 'u32[144,128]{1,0:T(1,128)}', space=vmem, size = 0x12000, scoped, tag = 'internal scratch']
  %s0 = inlined_call_operand.vmem [shape: f32[8,32], index: 0, kind: input, shape index: {}]
  %s1 = inlined_call_operand.vmem [shape: f32[32,1024], index: 1, kind: input, shape index: {}]
  %s2 = inlined_call_operand.vmem [shape: f32[1,1024], index: 2, kind: input, shape index: {}]
  %s3 = inlined_call_operand.vmem [shape: f32[1024,16], index: 3, kind: input, shape index: {}]
  %s4 = inlined_call_operand.vmem [shape: f32[1,16], index: 4, kind: input, shape index: {}]
  %s5 = inlined_call_operand.hbm [shape: f32[8,16], index: 5, kind: output, shape index: {}]
  %s6 = sld [smem:[#allocation0]]
  $region30: #{tpu_custom_call.1} parent=0
    _
  %s8 = ssub.s32 1, %s6
  %s9 = scalar_select 0, %s8, %s6
  $region1: #{tpu_custom_call.1} parent=0
    #allocation2 [shape = 'u8[4096]{0}', space=vmem, size = 0x1000, scoped, tag = 'output window, operand 0, single buffered']
    #allocation3 [shape = 's32[1]{0}', space=sflag, size = 0x4, scoped, tag = 'scoped memory for tpu_custom_call.1']
    %10 = vsyncpa [#allocation3], 0
    // Predicated region
    $region2: #{tpu_custom_call.1} parent=1 // pred_check
      _
    $region3: #{tpu_custom_call.1} parent=1 // pred_check_branch
      %12 = sbr.rel (0) target = $region5
    $region4: #{tpu_custom_call.1} parent=1 // pred_region
      _
    $region5: #{tpu_custom_call.1} parent=1 // pred_fallthru
      _
    // Predicated region
    $region6: #{tpu_custom_call.1} parent=1 // pred_check
      _
    $region7: #{tpu_custom_call.1} parent=1 // pred_check_branch
      %14 = sbr.rel (0) target = $region9
    $region8: #{tpu_custom_call.1} parent=1 // pred_region
      _
    $region9: #{tpu_custom_call.1} parent=1 // pred_fallthru
      _
    // Predicated region
    $region10: #{tpu_custom_call.1} parent=1 // pred_check
      _
    $region11: #{tpu_custom_call.1} parent=1 // pred_check_branch
      %16 = sbr.rel (0) target = $region13
    $region12: #{tpu_custom_call.1} parent=1 // pred_region
      _
    $region13: #{tpu_custom_call.1} parent=1 // pred_fallthru
      _
    // Predicated region
    $region14: #{tpu_custom_call.1} parent=1 // pred_check
      _
    $region15: #{tpu_custom_call.1} parent=1 // pred_check_branch
      %18 = sbr.rel (0) target = $region17
    $region16: #{tpu_custom_call.1} parent=1 // pred_region
      _
    $region17: #{tpu_custom_call.1} parent=1 // pred_fallthru
      _
    // Predicated region
    $region18: #{tpu_custom_call.1} parent=1 // pred_check
      _
    $region19: #{tpu_custom_call.1} parent=1 // pred_check_branch
      %20 = sbr.rel (0) target = $region21
    $region20: #{tpu_custom_call.1} parent=1 // pred_region
      _
    $region21: #{tpu_custom_call.1} parent=1 // pred_fallthru
      _
    %v21 = vld [vmem:[%s0] sm:$0xff]
    %v22 = vld [vmem:[%s1] sm:$0xff]
    %v23 = vld [vmem:[%s1 + $0x8] sm:$0xff]
    %v24 = vld [vmem:[%s1 + $0x10] sm:$0xff]
    %v25 = vld [vmem:[%s1 + $0x18] sm:$0xff]
    %v26 = vld [vmem:[%s1 + $0x20] sm:$0xff]
    %v27 = vld [vmem:[%s1 + $0x28] sm:$0xff]
    %v28 = vld [vmem:[%s1 + $0x30] sm:$0xff]
    %v29 = vld [vmem:[%s1 + $0x38] sm:$0xff]
    %v30 = vld [vmem:[%s1 + $0x40] sm:$0xff]
    %v31 = vld [vmem:[%s1 + $0x48] sm:$0xff]
    %v32 = vld [vmem:[%s1 + $0x50] sm:$0xff]
    %v33 = vld [vmem:[%s1 + $0x58] sm:$0xff]
    %v34 = vld [vmem:[%s1 + $0x60] sm:$0xff]
    %v35 = vld [vmem:[%s1 + $0x68] sm:$0xff]
    %v36 = vld [vmem:[%s1 + $0x70] sm:$0xff]
    %v37 = vld [vmem:[%s1 + $0x78] sm:$0xff]
    %v38 = vld [vmem:[%s1 + $0x80] sm:$0xff]
    %v39 = vld [vmem:[%s1 + $0x88] sm:$0xff]
    %v40 = vld [vmem:[%s1 + $0x90] sm:$0xff]
    %v41 = vld [vmem:[%s1 + $0x98] sm:$0xff]
    %v42 = vld [vmem:[%s1 + $0xa0] sm:$0xff]
    %v43 = vld [vmem:[%s1 + $0xa8] sm:$0xff]
    %v44 = vld [vmem:[%s1 + $0xb0] sm:$0xff]
    %v45 = vld [vmem:[%s1 + $0xb8] sm:$0xff]
    %v46 = vld [vmem:[%s1 + $0xc0] sm:$0xff]
    %v47 = vld [vmem:[%s1 + $0xc8] sm:$0xff]
    %v48 = vld [vmem:[%s1 + $0xd0] sm:$0xff]
    %v49 = vld [vmem:[%s1 + $0xd8] sm:$0xff]
    %v50 = vld [vmem:[%s1 + $0xe0] sm:$0xff]
    %v51 = vld [vmem:[%s1 + $0xe8] sm:$0xff]
    %v52 = vld [vmem:[%s1 + $0xf0] sm:$0xff]
    %v53 = vld [vmem:[%s1 + $0xf8] sm:$0xff]
    %v54 = vld [vmem:[%s2] sm:$0xff]
    %v56 = vlaneseq
    %v57 = vshrl.u32 %v56, 7
    %v58 = vsub.s32 0, %v57
    %v59 = vrot.slane %v54, %v58
    %v60 = vlaneseq
    %v61 = vshrl.u32 %v60, 7
    %v62 = vsub.s32 1, %v61
    %v63 = vrot.slane %v54, %v62
    %v64 = vlaneseq
    %v65 = vshrl.u32 %v64, 7
    %v66 = vsub.s32 2, %v65
    %v67 = vrot.slane %v54, %v66
    %v68 = vlaneseq
    %v69 = vshrl.u32 %v68, 7
    %v70 = vsub.s32 3, %v69
    %v71 = vrot.slane %v54, %v70
    %v72 = vlaneseq
    %v73 = vshrl.u32 %v72, 7
    %v74 = vsub.s32 4, %v73
    %v75 = vrot.slane %v54, %v74
    %v76 = vlaneseq
    %v77 = vshrl.u32 %v76, 7
    %v78 = vsub.s32 5, %v77
    %v79 = vrot.slane %v54, %v78
    %v80 = vlaneseq
    %v81 = vshrl.u32 %v80, 7
    %v82 = vsub.s32 6, %v81
    %v83 = vrot.slane %v54, %v82
    %v84 = vlaneseq
    %v85 = vshrl.u32 %v84, 7
    %v86 = vsub.s32 7, %v85
    %v87 = vrot.slane %v54, %v86
    %vm96 = vcmask 261120
    %v98 = vsel %vm96, %v21, 0
    %100 = vmatprep.subr.mxu0 0.0
    %101 = vmatpush1.msra.mxu0 0.0
    %102 = vmatprep.subr.mxu0 0.0
    %103 = vmatpush1.msra.mxu0 0.0
    %104 = vmatprep.subr.mxu0 0.0
    %105 = vmatpush1.msra.mxu0 0.0
    %106 = vmatprep.subr.mxu0 0.0
    %107 = vmatpush1.msra.mxu0 0.0
    %108 = vmatprep.subr.mxu0 0.0
    %109 = vmatpush1.msra.mxu0 0.0
    %110 = vmatprep.subr.mxu0 0.0
    %111 = vmatpush1.msra.mxu0 0.0
    %112 = vmatprep.subr.mxu0 0.0
    %113 = vmatpush1.msra.mxu0 0.0
    %114 = vmatprep.subr.mxu0 0.0
    %115 = vmatpush1.msra.mxu0 0.0
    %116 = vmatprep.subr.mxu0 0.0
    %117 = vmatpush1.msra.mxu0 0.0
    %118 = vmatprep.subr.mxu0 0.0
    %119 = vmatpush1.msra.mxu0 0.0
    %120 = vmatprep.subr.mxu0 0.0
    %121 = vmatpush1.msra.mxu0 0.0
    %122 = vmatprep.subr.mxu0 0.0
    %123 = vmatpush1.msra.mxu0 0.0
    %124 = vmatprep.subr.mxu0 %v47
    %125 = vmatpush1.msra.mxu0 %v46
    %126 = vmatprep.subr.mxu0 %v39
    %127 = vmatpush1.msra.mxu0 %v38
    %128 = vmatprep.subr.mxu0 %v31
    %129 = vmatpush1.msra.mxu0 %v30
    %130 = vmatprep.subr.mxu0 %v23
    %131 = vmatpush1.msra.mxu0 %v22
    %132 = vmatprep.subr.mxu0 0.0
    %133 = vmatpush2.msra.mxu0 0.0
    %134 = vmatprep.subr.mxu0 0.0
    %135 = vmatpush2.msra.mxu0 0.0
    %136 = vmatprep.subr.mxu0 0.0
    %137 = vmatpush2.msra.mxu0 0.0
    %138 = vmatprep.subr.mxu0 0.0
    %139 = vmatpush2.msra.mxu0 0.0
    %140 = vmatprep.subr.mxu0 0.0
    %141 = vmatpush2.msra.mxu0 0.0
    %142 = vmatprep.subr.mxu0 0.0
    %143 = vmatpush2.msra.mxu0 0.0
    %144 = vmatprep.subr.mxu0 0.0
    %145 = vmatpush2.msra.mxu0 0.0
    %146 = vmatprep.subr.mxu0 0.0
    %147 = vmatpush2.msra.mxu0 0.0
    %148 = vmatprep.subr.mxu0 0.0
    %149 = vmatpush2.msra.mxu0 0.0
    %150 = vmatprep.subr.mxu0 0.0
    %151 = vmatpush2.msra.mxu0 0.0
    %152 = vmatprep.subr.mxu0 0.0
    %153 = vmatpush2.msra.mxu0 0.0
    %154 = vmatprep.subr.mxu0 0.0
    %155 = vmatpush2.msra.mxu0 0.0
    %156 = vmatprep.subr.mxu0 0.0
    %157 = vmatpush2.msra.mxu0 0.0
    %158 = vmatprep.subr.mxu0 0.0
    %159 = vmatpush2.msra.mxu0 0.0
    %160 = vmatprep.subr.mxu0 0.0
    %161 = vmatpush2.msra.mxu0 0.0
    %162 = vmatprep.subr.mxu0 0.0
    %163 = vmatpush2.msra.mxu0 0.0
    %164 = vmatprep.mubr.f32.mxu0 0.0
    %165 = vmatmul.mubr.f32.gmra.mxu0 %v98
    %v166 = vpop.f32.mrf.mxu0
    %v167 = vadd.f32 %v59, %v166
    %v168 = vpop.f32.mrf.mxu0
    %v169 = vadd.f32 %v63, %v168
    %170 = vdwg.mxu0
    %171 = vmatprep.subr.mxu0 0.0
    %172 = vmatpush1.msra.mxu0 0.0
    %173 = vmatprep.subr.mxu0 0.0
    %174 = vmatpush1.msra.mxu0 0.0
    %175 = vmatprep.subr.mxu0 0.0
    %176 = vmatpush1.msra.mxu0 0.0
    %177 = vmatprep.subr.mxu0 0.0
    %178 = vmatpush1.msra.mxu0 0.0
    %179 = vmatprep.subr.mxu0 0.0
    %180 = vmatpush1.msra.mxu0 0.0
    %181 = vmatprep.subr.mxu0 0.0
    %182 = vmatpush1.msra.mxu0 0.0
    %183 = vmatprep.subr.mxu0 0.0
    %184 = vmatpush1.msra.mxu0 0.0
    %185 = vmatprep.subr.mxu0 0.0
    %186 = vmatpush1.msra.mxu0 0.0
    %187 = vmatprep.subr.mxu0 0.0
    %188 = vmatpush1.msra.mxu0 0.0
    %189 = vmatprep.subr.mxu0 0.0
    %190 = vmatpush1.msra.mxu0 0.0
    %191 = vmatprep.subr.mxu0 0.0
    %192 = vmatpush1.msra.mxu0 0.0
    %193 = vmatprep.subr.mxu0 0.0
    %194 = vmatpush1.msra.mxu0 0.0
    %195 = vmatprep.subr.mxu0 %v49
    %196 = vmatpush1.msra.mxu0 %v48
    %197 = vmatprep.subr.mxu0 %v41
    %198 = vmatpush1.msra.mxu0 %v40
    %199 = vmatprep.subr.mxu0 %v33
    %200 = vmatpush1.msra.mxu0 %v32
    %201 = vmatprep.subr.mxu0 %v25
    %202 = vmatpush1.msra.mxu0 %v24
    %203 = vmatprep.subr.mxu0 0.0
    %204 = vmatpush2.msra.mxu0 0.0
    %205 = vmatprep.subr.mxu0 0.0
    %206 = vmatpush2.msra.mxu0 0.0
    %207 = vmatprep.subr.mxu0 0.0
    %208 = vmatpush2.msra.mxu0 0.0
    %209 = vmatprep.subr.mxu0 0.0
    %210 = vmatpush2.msra.mxu0 0.0
    %211 = vmatprep.subr.mxu0 0.0
    %212 = vmatpush2.msra.mxu0 0.0
    %213 = vmatprep.subr.mxu0 0.0
    %214 = vmatpush2.msra.mxu0 0.0
    %215 = vmatprep.subr.mxu0 0.0
    %216 = vmatpush2.msra.mxu0 0.0
    %217 = vmatprep.subr.mxu0 0.0
    %218 = vmatpush2.msra.mxu0 0.0
    %219 = vmatprep.subr.mxu0 0.0
    %220 = vmatpush2.msra.mxu0 0.0
    %221 = vmatprep.subr.mxu0 0.0
    %222 = vmatpush2.msra.mxu0 0.0
    %223 = vmatprep.subr.mxu0 0.0
    %224 = vmatpush2.msra.mxu0 0.0
    %225 = vmatprep.subr.mxu0 0.0
    %226 = vmatpush2.msra.mxu0 0.0
    %227 = vmatprep.subr.mxu0 0.0
    %228 = vmatpush2.msra.mxu0 0.0
    %229 = vmatprep.subr.mxu0 0.0
    %230 = vmatpush2.msra.mxu0 0.0
    %231 = vmatprep.subr.mxu0 0.0
    %232 = vmatpush2.msra.mxu0 0.0
    %233 = vmatprep.subr.mxu0 0.0
    %234 = vmatpush2.msra.mxu0 0.0
    %235 = vmatprep.mubr.f32.mxu0 0.0
    %236 = vmatmul.mubr.f32.gmra.mxu0 %v98
    %v237 = vpop.f32.mrf.mxu0
    %v238 = vadd.f32 %v67, %v237
    %v239 = vpop.f32.mrf.mxu0
    %v240 = vadd.f32 %v71, %v239
    %241 = vdwg.mxu0
    %242 = vmatprep.subr.mxu0 0.0
    %243 = vmatpush1.msra.mxu0 0.0
    %244 = vmatprep.subr.mxu0 0.0
    %245 = vmatpush1.msra.mxu0 0.0
    %246 = vmatprep.subr.mxu0 0.0
    %247 = vmatpush1.msra.mxu0 0.0
    %248 = vmatprep.subr.mxu0 0.0
    %249 = vmatpush1.msra.mxu0 0.0
    %250 = vmatprep.subr.mxu0 0.0
    %251 = vmatpush1.msra.mxu0 0.0
    %252 = vmatprep.subr.mxu0 0.0
    %253 = vmatpush1.msra.mxu0 0.0
    %254 = vmatprep.subr.mxu0 0.0
    %255 = vmatpush1.msra.mxu0 0.0
    %256 = vmatprep.subr.mxu0 0.0
    %257 = vmatpush1.msra.mxu0 0.0
    %258 = vmatprep.subr.mxu0 0.0
    %259 = vmatpush1.msra.mxu0 0.0
    %260 = vmatprep.subr.mxu0 0.0
    %261 = vmatpush1.msra.mxu0 0.0
    %262 = vmatprep.subr.mxu0 0.0
    %263 = vmatpush1.msra.mxu0 0.0
    %264 = vmatprep.subr.mxu0 0.0
    %265 = vmatpush1.msra.mxu0 0.0
    %266 = vmatprep.subr.mxu0 %v51
    %267 = vmatpush1.msra.mxu0 %v50
    %268 = vmatprep.subr.mxu0 %v43
    %269 = vmatpush1.msra.mxu0 %v42
    %270 = vmatprep.subr.mxu0 %v35
    %271 = vmatpush1.msra.mxu0 %v34
    %272 = vmatprep.subr.mxu0 %v27
    %273 = vmatpush1.msra.mxu0 %v26
    %274 = vmatprep.subr.mxu0 0.0
    %275 = vmatpush2.msra.mxu0 0.0
    %276 = vmatprep.subr.mxu0 0.0
    %277 = vmatpush2.msra.mxu0 0.0
    %278 = vmatprep.subr.mxu0 0.0
    %279 = vmatpush2.msra.mxu0 0.0
    %280 = vmatprep.subr.mxu0 0.0
    %281 = vmatpush2.msra.mxu0 0.0
    %282 = vmatprep.subr.mxu0 0.0
    %283 = vmatpush2.msra.mxu0 0.0
    %284 = vmatprep.subr.mxu0 0.0
    %285 = vmatpush2.msra.mxu0 0.0
    %286 = vmatprep.subr.mxu0 0.0
    %287 = vmatpush2.msra.mxu0 0.0
    %288 = vmatprep.subr.mxu0 0.0
    %289 = vmatpush2.msra.mxu0 0.0
    %290 = vmatprep.subr.mxu0 0.0
    %291 = vmatpush2.msra.mxu0 0.0
    %292 = vmatprep.subr.mxu0 0.0
    %293 = vmatpush2.msra.mxu0 0.0
    %294 = vmatprep.subr.mxu0 0.0
    %295 = vmatpush2.msra.mxu0 0.0
    %296 = vmatprep.subr.mxu0 0.0
    %297 = vmatpush2.msra.mxu0 0.0
    %298 = vmatprep.subr.mxu0 0.0
    %299 = vmatpush2.msra.mxu0 0.0
    %300 = vmatprep.subr.mxu0 0.0
    %301 = vmatpush2.msra.mxu0 0.0
    %302 = vmatprep.subr.mxu0 0.0
    %303 = vmatpush2.msra.mxu0 0.0
    %304 = vmatprep.subr.mxu0 0.0
    %305 = vmatpush2.msra.mxu0 0.0
    %306 = vmatprep.mubr.f32.mxu0 0.0
    %307 = vmatmul.mubr.f32.gmra.mxu0 %v98
    %v308 = vpop.f32.mrf.mxu0
    %v309 = vadd.f32 %v75, %v308
    %v310 = vpop.f32.mrf.mxu0
    %v311 = vadd.f32 %v79, %v310
    %312 = vdwg.mxu0
    %313 = vmatprep.subr.mxu0 0.0
    %314 = vmatpush1.msra.mxu0 0.0
    %315 = vmatprep.subr.mxu0 0.0
    %316 = vmatpush1.msra.mxu0 0.0
    %317 = vmatprep.subr.mxu0 0.0
    %318 = vmatpush1.msra.mxu0 0.0
    %319 = vmatprep.subr.mxu0 0.0
    %320 = vmatpush1.msra.mxu0 0.0
    %321 = vmatprep.subr.mxu0 0.0
    %322 = vmatpush1.msra.mxu0 0.0
    %323 = vmatprep.subr.mxu0 0.0
    %324 = vmatpush1.msra.mxu0 0.0
    %325 = vmatprep.subr.mxu0 0.0
    %326 = vmatpush1.msra.mxu0 0.0
    %327 = vmatprep.subr.mxu0 0.0
    %328 = vmatpush1.msra.mxu0 0.0
    %329 = vmatprep.subr.mxu0 0.0
    %330 = vmatpush1.msra.mxu0 0.0
    %331 = vmatprep.subr.mxu0 0.0
    %332 = vmatpush1.msra.mxu0 0.0
    %333 = vmatprep.subr.mxu0 0.0
    %334 = vmatpush1.msra.mxu0 0.0
    %335 = vmatprep.subr.mxu0 0.0
    %336 = vmatpush1.msra.mxu0 0.0
    %337 = vmatprep.subr.mxu0 %v53
    %338 = vmatpush1.msra.mxu0 %v52
    %339 = vmatprep.subr.mxu0 %v45
    %340 = vmatpush1.msra.mxu0 %v44
    %341 = vmatprep.subr.mxu0 %v37
    %342 = vmatpush1.msra.mxu0 %v36
    %343 = vmatprep.subr.mxu0 %v29
    %344 = vmatpush1.msra.mxu0 %v28
    %345 = vmatprep.subr.mxu0 0.0
    %346 = vmatpush2.msra.mxu0 0.0
    %347 = vmatprep.subr.mxu0 0.0
    %348 = vmatpush2.msra.mxu0 0.0
    %349 = vmatprep.subr.mxu0 0.0
    %350 = vmatpush2.msra.mxu0 0.0
    %351 = vmatprep.subr.mxu0 0.0
    %352 = vmatpush2.msra.mxu0 0.0
    %353 = vmatprep.subr.mxu0 0.0
    %354 = vmatpush2.msra.mxu0 0.0
    %355 = vmatprep.subr.mxu0 0.0
    %356 = vmatpush2.msra.mxu0 0.0
    %357 = vmatprep.subr.mxu0 0.0
    %358 = vmatpush2.msra.mxu0 0.0
    %359 = vmatprep.subr.mxu0 0.0
    %360 = vmatpush2.msra.mxu0 0.0
    %361 = vmatprep.subr.mxu0 0.0
    %362 = vmatpush2.msra.mxu0 0.0
    %363 = vmatprep.subr.mxu0 0.0
    %364 = vmatpush2.msra.mxu0 0.0
    %365 = vmatprep.subr.mxu0 0.0
    %366 = vmatpush2.msra.mxu0 0.0
    %367 = vmatprep.subr.mxu0 0.0
    %368 = vmatpush2.msra.mxu0 0.0
    %369 = vmatprep.subr.mxu0 0.0
    %370 = vmatpush2.msra.mxu0 0.0
    %371 = vmatprep.subr.mxu0 0.0
    %372 = vmatpush2.msra.mxu0 0.0
    %373 = vmatprep.subr.mxu0 0.0
    %374 = vmatpush2.msra.mxu0 0.0
    %375 = vmatprep.subr.mxu0 0.0
    %376 = vmatpush2.msra.mxu0 0.0
    %377 = vmatprep.mubr.f32.mxu0 0.0
    %378 = vmatmul.mubr.f32.gmra.mxu0 %v98
    %v379 = vpop.f32.mrf.mxu0
    %v380 = vadd.f32 %v83, %v379
    %v381 = vpop.f32.mrf.mxu0
    %v382 = vadd.f32 %v87, %v381
    %383 = vdwg.mxu0
    %v384 = vand.u32 2147483647, %v167
    %vm385 = vcmp.le.f32.partialorder %v384, 0.7853982
    %vm386 = vcmp.lt.s32.totalorder %v167, 0
    %v387 = vand.u32 %v167, 2139095040
    %v388 = vshrl.u32 %v387, 23
    %v389 = vsub.s32 %v388, 127
    %v390 = vand.u32 2147483647, %v167
    %v391 = vand.u32 %v390, 8388607
    %v392 = vor.u32 %v391, 8388608
    %v393 = vsub.s32 0, %v392
    %v394 = vadd.s32 %v389, 1
    %vm395 = vcmp.gt.s32.totalorder %v394, 0
    %v396 = vsel %vm395, %v394, 0
    %v397 = vshrl.u32 %v396, 5
    %v398 = vand.u32 %v396, 31
    %v399 = vsub.s32 32, %v398
    %v400 = vshrl.u32 683565275, %v399
    %v401 = vshll.u32 683565275, %v398
    %v402 = vshrl.u32 2475754826, %v399
    %v403 = vor.u32 %v401, %v402
    %v404 = vshll.u32 2475754826, %v398
    %v405 = vshrl.u32 2131351028, %v399
    %v406 = vor.u32 %v404, %v405
    %v407 = vshll.u32 2131351028, %v398
    %v408 = vshrl.u32 2102212464, %v399
    %v409 = vor.u32 %v407, %v408
    %v410 = vshll.u32 2102212464, %v398
    %v411 = vshrl.u32 920167782, %v399
    %v412 = vor.u32 %v410, %v411
    %v413 = vshll.u32 920167782, %v398
    %v414 = vshrl.u32 1326507024, %v399
    %v415 = vor.u32 %v413, %v414
    %vm416 = vcmp.lt.s32.totalorder %v397, 1
    %vm417 = vcmp.lt.s32.totalorder %v397, 2
    %vm418 = vcmp.lt.s32.totalorder %v397, 3
    %vm419 = vcmp.lt.s32.totalorder %v397, 4
    %v420 = vsel %vm416, %v400, %v403
    %v421 = vsel %vm419, %v409, 2102212464
    %v422 = vsel %vm418, %v406, %v421
    %v423 = vsel %vm417, %v420, %v422
    %v424 = vsel %vm416, %v403, %v406
    %v425 = vsel %vm419, %v412, 920167782
    %v426 = vsel %vm418, %v409, %v425
    %v427 = vsel %vm417, %v424, %v426
    %v428 = vsel %vm416, %v406, %v409
    %v429 = vsel %vm419, %v415, 1326507024
    %v430 = vsel %vm418, %v412, %v429
    %v431 = vsel %vm417, %v428, %v430
    %v432 = vshll.u32 %v392, 8
    %v433 = vmul.u32.u64.compose %v432, %v431
    %v434 = vextract.low.u32 %v433
    %v435 = vextract.high.u32 %v433
    %v436 = vmul.u32.u64.compose %v432, %v427
    %v437 = vextract.low.u32 %v436
    %v438 = vextract.high.u32 %v436
    %v439 = vmul.u32 %v432, %v423
    %v440 = vadd.s32 %v435, %v437
    %vm441 = vc.u32 %v435, %v437
    %v442 = vadd.s32 %v438, 1
    %v443 = vsel %vm441, %v442, %v438
    %v444 = vadd.s32 %v439, %v443
    %v445 = vadd.s32 %v444, 536870912
    %v446 = vshrl.u32 %v445, 30
    %v447 = vshll.u32 %v446, 30
    %v448 = vsub.s32 %v444, %v447
    %vm449 = vcmp.lt.s32.totalorder %v448, 0
    %v450 = vsub.s32 0, %v448
    %v451 = vsel %vm449, %v450, %v448
    %v452 = vclz %v451
    %v453 = vsub.s32 %v452, 2
    %vm454 = vcmp.gt.s32.totalorder 0, %v453
    %v455 = vsel %vm454, 0, %v453
    %v456 = vsub.s32 32, %v455
    %v457 = vshll.u32 %v448, %v455
    %v458 = vshrl.u32 %v440, %v456
    %v459 = vor.u32 %v457, %v458
    %v460 = vsub.s32 4294967266, %v455
    %v461 = vadd.s32 %v460, 127
    %v462 = vshll.u32 %v461, 23
    %v463 = vor.u32 4788187, %v462
    %v464 = vand.u32 2147483647, %v463
    %v466 = vcvt.s32.f32 %v459
    %v467 = vmul.f32 %v466, %v464
    %v468 = vxor.u32 %v467, 2147483648
    %v469 = vsel %vm386, %v468, %v467
    %v470 = vsub.s32 4, %v446
    %v471 = vsel %vm386, %v470, %v446
    %v472 = vsel %vm385, %v167, %v469
    %v473 = vsel %vm385, 0, %v471
    %v474 = vcosq.f32.pop %v472
    %v475 = vsinq.f32.pop %v472
    %vm476 = vweird.f32 %v167
    %v477 = vand.u32 %v473, 3
    %vm478 = vcmp.lt.s32.totalorder %v477, 2
    %vm479 = vcmp.eq.s32.totalorder %v477, 0
    %v480 = vxor.u32 %v475, 2147483648
    %v481 = vsel %vm479, %v474, %v480
    %vm482 = vcmp.eq.s32.totalorder %v477, 2
    %v483 = vxor.u32 %v474, 2147483648
    %v484 = vsel %vm482, %v483, %v475
    %v485 = vsel %vm478, %v481, %v484
    %v486 = vsel %vm476, nan, %v485
    %v487 = vand.u32 2147483647, %v169
    %vm488 = vcmp.le.f32.partialorder %v487, 0.7853982
    %vm489 = vcmp.lt.s32.totalorder %v169, 0
    %v490 = vand.u32 %v169, 2139095040
    %v491 = vshrl.u32 %v490, 23
    %v492 = vsub.s32 %v491, 127
    %v493 = vand.u32 2147483647, %v169
    %v494 = vand.u32 %v493, 8388607
    %v495 = vor.u32 %v494, 8388608
    %v496 = vsub.s32 0, %v495
    %v497 = vadd.s32 %v492, 1
    %vm498 = vcmp.gt.s32.totalorder %v497, 0
    %v499 = vsel %vm498, %v497, 0
    %v500 = vshrl.u32 %v499, 5
    %v501 = vand.u32 %v499, 31
    %v502 = vsub.s32 32, %v501
    %v503 = vshrl.u32 683565275, %v502
    %v504 = vshll.u32 683565275, %v501
    %v505 = vshrl.u32 2475754826, %v502
    %v506 = vor.u32 %v504, %v505
    %v507 = vshll.u32 2475754826, %v501
    %v508 = vshrl.u32 2131351028, %v502
    %v509 = vor.u32 %v507, %v508
    %v510 = vshll.u32 2131351028, %v501
    %v511 = vshrl.u32 2102212464, %v502
    %v512 = vor.u32 %v510, %v511
    %v513 = vshll.u32 2102212464, %v501
    %v514 = vshrl.u32 920167782, %v502
    %v515 = vor.u32 %v513, %v514
    %v516 = vshll.u32 920167782, %v501
    %v517 = vshrl.u32 1326507024, %v502
    %v518 = vor.u32 %v516, %v517
    %vm519 = vcmp.lt.s32.totalorder %v500, 1
    %vm520 = vcmp.lt.s32.totalorder %v500, 2
    %vm521 = vcmp.lt.s32.totalorder %v500, 3
    %vm522 = vcmp.lt.s32.totalorder %v500, 4
    %v523 = vsel %vm519, %v503, %v506
    %v524 = vsel %vm522, %v512, 2102212464
    %v525 = vsel %vm521, %v509, %v524
    %v526 = vsel %vm520, %v523, %v525
    %v527 = vsel %vm519, %v506, %v509
    %v528 = vsel %vm522, %v515, 920167782
    %v529 = vsel %vm521, %v512, %v528
    %v530 = vsel %vm520, %v527, %v529
    %v531 = vsel %vm519, %v509, %v512
    %v532 = vsel %vm522, %v518, 1326507024
    %v533 = vsel %vm521, %v515, %v532
    %v534 = vsel %vm520, %v531, %v533
    %v535 = vshll.u32 %v495, 8
    %v536 = vmul.u32.u64.compose %v535, %v534
    %v537 = vextract.low.u32 %v536
    %v538 = vextract.high.u32 %v536
    %v539 = vmul.u32.u64.compose %v535, %v530
    %v540 = vextract.low.u32 %v539
    %v541 = vextract.high.u32 %v539
    %v542 = vmul.u32 %v535, %v526
    %v543 = vadd.s32 %v538, %v540
    %vm544 = vc.u32 %v538, %v540
    %v545 = vadd.s32 %v541, 1
    %v546 = vsel %vm544, %v545, %v541
    %v547 = vadd.s32 %v542, %v546
    %v548 = vadd.s32 %v547, 536870912
    %v549 = vshrl.u32 %v548, 30
    %v550 = vshll.u32 %v549, 30
    %v551 = vsub.s32 %v547, %v550
    %vm552 = vcmp.lt.s32.totalorder %v551, 0
    %v553 = vsub.s32 0, %v551
    %v554 = vsel %vm552, %v553, %v551
    %v555 = vclz %v554
    %v556 = vsub.s32 %v555, 2
    %vm557 = vcmp.gt.s32.totalorder 0, %v556
    %v558 = vsel %vm557, 0, %v556
    %v559 = vsub.s32 32, %v558
    %v560 = vshll.u32 %v551, %v558
    %v561 = vshrl.u32 %v543, %v559
    %v562 = vor.u32 %v560, %v561
    %v563 = vsub.s32 4294967266, %v558
    %v564 = vadd.s32 %v563, 127
    %v565 = vshll.u32 %v564, 23
    %v566 = vor.u32 4788187, %v565
    %v567 = vand.u32 2147483647, %v566
    %v569 = vcvt.s32.f32 %v562
    %v570 = vmul.f32 %v569, %v567
    %v571 = vxor.u32 %v570, 2147483648
    %v572 = vsel %vm489, %v571, %v570
    %v573 = vsub.s32 4, %v549
    %v574 = vsel %vm489, %v573, %v549
    %v575 = vsel %vm488, %v169, %v572
    %v576 = vsel %vm488, 0, %v574
    %v577 = vcosq.f32.pop %v575
    %v578 = vsinq.f32.pop %v575
    %vm579 = vweird.f32 %v169
    %v580 = vand.u32 %v576, 3
    %vm581 = vcmp.lt.s32.totalorder %v580, 2
    %vm582 = vcmp.eq.s32.totalorder %v580, 0
    %v583 = vxor.u32 %v578, 2147483648
    %v584 = vsel %vm582, %v577, %v583
    %vm585 = vcmp.eq.s32.totalorder %v580, 2
    %v586 = vxor.u32 %v577, 2147483648
    %v587 = vsel %vm585, %v586, %v578
    %v588 = vsel %vm581, %v584, %v587
    %v589 = vsel %vm579, nan, %v588
    %v590 = vand.u32 2147483647, %v238
    %vm591 = vcmp.le.f32.partialorder %v590, 0.7853982
    %vm592 = vcmp.lt.s32.totalorder %v238, 0
    %v593 = vand.u32 %v238, 2139095040
    %v594 = vshrl.u32 %v593, 23
    %v595 = vsub.s32 %v594, 127
    %v596 = vand.u32 2147483647, %v238
    %v597 = vand.u32 %v596, 8388607
    %v598 = vor.u32 %v597, 8388608
    %v599 = vsub.s32 0, %v598
    %v600 = vadd.s32 %v595, 1
    %vm601 = vcmp.gt.s32.totalorder %v600, 0
    %v602 = vsel %vm601, %v600, 0
    %v603 = vshrl.u32 %v602, 5
    %v604 = vand.u32 %v602, 31
    %v605 = vsub.s32 32, %v604
    %v606 = vshrl.u32 683565275, %v605
    %v607 = vshll.u32 683565275, %v604
    %v608 = vshrl.u32 2475754826, %v605
    %v609 = vor.u32 %v607, %v608
    %v610 = vshll.u32 2475754826, %v604
    %v611 = vshrl.u32 2131351028, %v605
    %v612 = vor.u32 %v610, %v611
    %v613 = vshll.u32 2131351028, %v604
    %v614 = vshrl.u32 2102212464, %v605
    %v615 = vor.u32 %v613, %v614
    %v616 = vshll.u32 2102212464, %v604
    %v617 = vshrl.u32 920167782, %v605
    %v618 = vor.u32 %v616, %v617
    %v619 = vshll.u32 920167782, %v604
    %v620 = vshrl.u32 1326507024, %v605
    %v621 = vor.u32 %v619, %v620
    %vm622 = vcmp.lt.s32.totalorder %v603, 1
    %vm623 = vcmp.lt.s32.totalorder %v603, 2
    %vm624 = vcmp.lt.s32.totalorder %v603, 3
    %vm625 = vcmp.lt.s32.totalorder %v603, 4
    %v626 = vsel %vm622, %v606, %v609
    %v627 = vsel %vm625, %v615, 2102212464
    %v628 = vsel %vm624, %v612, %v627
    %v629 = vsel %vm623, %v626, %v628
    %v630 = vsel %vm622, %v609, %v612
    %v631 = vsel %vm625, %v618, 920167782
    %v632 = vsel %vm624, %v615, %v631
    %v633 = vsel %vm623, %v630, %v632
    %v634 = vsel %vm622, %v612, %v615
    %v635 = vsel %vm625, %v621, 1326507024
    %v636 = vsel %vm624, %v618, %v635
    %v637 = vsel %vm623, %v634, %v636
    %v638 = vshll.u32 %v598, 8
    %v639 = vmul.u32.u64.compose %v638, %v637
    %v640 = vextract.low.u32 %v639
    %v641 = vextract.high.u32 %v639
    %v642 = vmul.u32.u64.compose %v638, %v633
    %v643 = vextract.low.u32 %v642
    %v644 = vextract.high.u32 %v642
    %v645 = vmul.u32 %v638, %v629
    %v646 = vadd.s32 %v641, %v643
    %vm647 = vc.u32 %v641, %v643
    %v648 = vadd.s32 %v644, 1
    %v649 = vsel %vm647, %v648, %v644
    %v650 = vadd.s32 %v645, %v649
    %v651 = vadd.s32 %v650, 536870912
    %v652 = vshrl.u32 %v651, 30
    %v653 = vshll.u32 %v652, 30
    %v654 = vsub.s32 %v650, %v653
    %vm655 = vcmp.lt.s32.totalorder %v654, 0
    %v656 = vsub.s32 0, %v654
    %v657 = vsel %vm655, %v656, %v654
    %v658 = vclz %v657
    %v659 = vsub.s32 %v658, 2
    %vm660 = vcmp.gt.s32.totalorder 0, %v659
    %v661 = vsel %vm660, 0, %v659
    %v662 = vsub.s32 32, %v661
    %v663 = vshll.u32 %v654, %v661
    %v664 = vshrl.u32 %v646, %v662
    %v665 = vor.u32 %v663, %v664
    %v666 = vsub.s32 4294967266, %v661
    %v667 = vadd.s32 %v666, 127
    %v668 = vshll.u32 %v667, 23
    %v669 = vor.u32 4788187, %v668
    %v670 = vand.u32 2147483647, %v669
    %v672 = vcvt.s32.f32 %v665
    %v673 = vmul.f32 %v672, %v670
    %v674 = vxor.u32 %v673, 2147483648
    %v675 = vsel %vm592, %v674, %v673
    %v676 = vsub.s32 4, %v652
    %v677 = vsel %vm592, %v676, %v652
    %v678 = vsel %vm591, %v238, %v675
    %v679 = vsel %vm591, 0, %v677
    %v680 = vcosq.f32.pop %v678
    %v681 = vsinq.f32.pop %v678
    %vm682 = vweird.f32 %v238
    %v683 = vand.u32 %v679, 3
    %vm684 = vcmp.lt.s32.totalorder %v683, 2
    %vm685 = vcmp.eq.s32.totalorder %v683, 0
    %v686 = vxor.u32 %v681, 2147483648
    %v687 = vsel %vm685, %v680, %v686
    %vm688 = vcmp.eq.s32.totalorder %v683, 2
    %v689 = vxor.u32 %v680, 2147483648
    %v690 = vsel %vm688, %v689, %v681
    %v691 = vsel %vm684, %v687, %v690
    %v692 = vsel %vm682, nan, %v691
    %v693 = vand.u32 2147483647, %v240
    %vm694 = vcmp.le.f32.partialorder %v693, 0.7853982
    %vm695 = vcmp.lt.s32.totalorder %v240, 0
    %v696 = vand.u32 %v240, 2139095040
    %v697 = vshrl.u32 %v696, 23
    %v698 = vsub.s32 %v697, 127
    %v699 = vand.u32 2147483647, %v240
    %v700 = vand.u32 %v699, 8388607
    %v701 = vor.u32 %v700, 8388608
    %v702 = vsub.s32 0, %v701
    %v703 = vadd.s32 %v698, 1
    %vm704 = vcmp.gt.s32.totalorder %v703, 0
    %v705 = vsel %vm704, %v703, 0
    %v706 = vshrl.u32 %v705, 5
    %v707 = vand.u32 %v705, 31
    %v708 = vsub.s32 32, %v707
    %v709 = vshrl.u32 683565275, %v708
    %v710 = vshll.u32 683565275, %v707
    %v711 = vshrl.u32 2475754826, %v708
    %v712 = vor.u32 %v710, %v711
    %v713 = vshll.u32 2475754826, %v707
    %v714 = vshrl.u32 2131351028, %v708
    %v715 = vor.u32 %v713, %v714
    %v716 = vshll.u32 2131351028, %v707
    %v717 = vshrl.u32 2102212464, %v708
    %v718 = vor.u32 %v716, %v717
    %v719 = vshll.u32 2102212464, %v707
    %v720 = vshrl.u32 920167782, %v708
    %v721 = vor.u32 %v719, %v720
    %v722 = vshll.u32 920167782, %v707
    %v723 = vshrl.u32 1326507024, %v708
    %v724 = vor.u32 %v722, %v723
    %vm725 = vcmp.lt.s32.totalorder %v706, 1
    %vm726 = vcmp.lt.s32.totalorder %v706, 2
    %vm727 = vcmp.lt.s32.totalorder %v706, 3
    %vm728 = vcmp.lt.s32.totalorder %v706, 4
    %v729 = vsel %vm725, %v709, %v712
    %v730 = vsel %vm728, %v718, 2102212464
    %v731 = vsel %vm727, %v715, %v730
    %v732 = vsel %vm726, %v729, %v731
    %v733 = vsel %vm725, %v712, %v715
    %v734 = vsel %vm728, %v721, 920167782
    %v735 = vsel %vm727, %v718, %v734
    %v736 = vsel %vm726, %v733, %v735
    %v737 = vsel %vm725, %v715, %v718
    %v738 = vsel %vm728, %v724, 1326507024
    %v739 = vsel %vm727, %v721, %v738
    %v740 = vsel %vm726, %v737, %v739
    %v741 = vshll.u32 %v701, 8
    %v742 = vmul.u32.u64.compose %v741, %v740
    %v743 = vextract.low.u32 %v742
    %v744 = vextract.high.u32 %v742
    %v745 = vmul.u32.u64.compose %v741, %v736
    %v746 = vextract.low.u32 %v745
    %v747 = vextract.high.u32 %v745
    %v748 = vmul.u32 %v741, %v732
    %v749 = vadd.s32 %v744, %v746
    %vm750 = vc.u32 %v744, %v746
    %v751 = vadd.s32 %v747, 1
    %v752 = vsel %vm750, %v751, %v747
    %v753 = vadd.s32 %v748, %v752
    %v754 = vadd.s32 %v753, 536870912
    %v755 = vshrl.u32 %v754, 30
    %v756 = vshll.u32 %v755, 30
    %v757 = vsub.s32 %v753, %v756
    %vm758 = vcmp.lt.s32.totalorder %v757, 0
    %v759 = vsub.s32 0, %v757
    %v760 = vsel %vm758, %v759, %v757
    %v761 = vclz %v760
    %v762 = vsub.s32 %v761, 2
    %vm763 = vcmp.gt.s32.totalorder 0, %v762
    %v764 = vsel %vm763, 0, %v762
    %v765 = vsub.s32 32, %v764
    %v766 = vshll.u32 %v757, %v764
    %v767 = vshrl.u32 %v749, %v765
    %v768 = vor.u32 %v766, %v767
    %v769 = vsub.s32 4294967266, %v764
    %v770 = vadd.s32 %v769, 127
    %v771 = vshll.u32 %v770, 23
    %v772 = vor.u32 4788187, %v771
    %v773 = vand.u32 2147483647, %v772
    %v775 = vcvt.s32.f32 %v768
    %v776 = vmul.f32 %v775, %v773
    %v777 = vxor.u32 %v776, 2147483648
    %v778 = vsel %vm695, %v777, %v776
    %v779 = vsub.s32 4, %v755
    %v780 = vsel %vm695, %v779, %v755
    %v781 = vsel %vm694, %v240, %v778
    %v782 = vsel %vm694, 0, %v780
    %v783 = vcosq.f32.pop %v781
    %v784 = vsinq.f32.pop %v781
    %vm785 = vweird.f32 %v240
    %v786 = vand.u32 %v782, 3
    %vm787 = vcmp.lt.s32.totalorder %v786, 2
    %vm788 = vcmp.eq.s32.totalorder %v786, 0
    %v789 = vxor.u32 %v784, 2147483648
    %v790 = vsel %vm788, %v783, %v789
    %vm791 = vcmp.eq.s32.totalorder %v786, 2
    %v792 = vxor.u32 %v783, 2147483648
    %v793 = vsel %vm791, %v792, %v784
    %v794 = vsel %vm787, %v790, %v793
    %v795 = vsel %vm785, nan, %v794
    %v796 = vand.u32 2147483647, %v309
    %vm797 = vcmp.le.f32.partialorder %v796, 0.7853982
    %vm798 = vcmp.lt.s32.totalorder %v309, 0
    %v799 = vand.u32 %v309, 2139095040
    %v800 = vshrl.u32 %v799, 23
    %v801 = vsub.s32 %v800, 127
    %v802 = vand.u32 2147483647, %v309
    %v803 = vand.u32 %v802, 8388607
    %v804 = vor.u32 %v803, 8388608
    %v805 = vsub.s32 0, %v804
    %v806 = vadd.s32 %v801, 1
    %vm807 = vcmp.gt.s32.totalorder %v806, 0
    %v808 = vsel %vm807, %v806, 0
    %v809 = vshrl.u32 %v808, 5
    %v810 = vand.u32 %v808, 31
    %v811 = vsub.s32 32, %v810
    %v812 = vshrl.u32 683565275, %v811
    %v813 = vshll.u32 683565275, %v810
    %v814 = vshrl.u32 2475754826, %v811
    %v815 = vor.u32 %v813, %v814
    %v816 = vshll.u32 2475754826, %v810
    %v817 = vshrl.u32 2131351028, %v811
    %v818 = vor.u32 %v816, %v817
    %v819 = vshll.u32 2131351028, %v810
    %v820 = vshrl.u32 2102212464, %v811
    %v821 = vor.u32 %v819, %v820
    %v822 = vshll.u32 2102212464, %v810
    %v823 = vshrl.u32 920167782, %v811
    %v824 = vor.u32 %v822, %v823
    %v825 = vshll.u32 920167782, %v810
    %v826 = vshrl.u32 1326507024, %v811
    %v827 = vor.u32 %v825, %v826
    %vm828 = vcmp.lt.s32.totalorder %v809, 1
    %vm829 = vcmp.lt.s32.totalorder %v809, 2
    %vm830 = vcmp.lt.s32.totalorder %v809, 3
    %vm831 = vcmp.lt.s32.totalorder %v809, 4
    %v832 = vsel %vm828, %v812, %v815
    %v833 = vsel %vm831, %v821, 2102212464
    %v834 = vsel %vm830, %v818, %v833
    %v835 = vsel %vm829, %v832, %v834
    %v836 = vsel %vm828, %v815, %v818
    %v837 = vsel %vm831, %v824, 920167782
    %v838 = vsel %vm830, %v821, %v837
    %v839 = vsel %vm829, %v836, %v838
    %v840 = vsel %vm828, %v818, %v821
    %v841 = vsel %vm831, %v827, 1326507024
    %v842 = vsel %vm830, %v824, %v841
    %v843 = vsel %vm829, %v840, %v842
    %v844 = vshll.u32 %v804, 8
    %v845 = vmul.u32.u64.compose %v844, %v843
    %v846 = vextract.low.u32 %v845
    %v847 = vextract.high.u32 %v845
    %v848 = vmul.u32.u64.compose %v844, %v839
    %v849 = vextract.low.u32 %v848
    %v850 = vextract.high.u32 %v848
    %v851 = vmul.u32 %v844, %v835
    %v852 = vadd.s32 %v847, %v849
    %vm853 = vc.u32 %v847, %v849
    %v854 = vadd.s32 %v850, 1
    %v855 = vsel %vm853, %v854, %v850
    %v856 = vadd.s32 %v851, %v855
    %v857 = vadd.s32 %v856, 536870912
    %v858 = vshrl.u32 %v857, 30
    %v859 = vshll.u32 %v858, 30
    %v860 = vsub.s32 %v856, %v859
    %vm861 = vcmp.lt.s32.totalorder %v860, 0
    %v862 = vsub.s32 0, %v860
    %v863 = vsel %vm861, %v862, %v860
    %v864 = vclz %v863
    %v865 = vsub.s32 %v864, 2
    %vm866 = vcmp.gt.s32.totalorder 0, %v865
    %v867 = vsel %vm866, 0, %v865
    %v868 = vsub.s32 32, %v867
    %v869 = vshll.u32 %v860, %v867
    %v870 = vshrl.u32 %v852, %v868
    %v871 = vor.u32 %v869, %v870
    %v872 = vsub.s32 4294967266, %v867
    %v873 = vadd.s32 %v872, 127
    %v874 = vshll.u32 %v873, 23
    %v875 = vor.u32 4788187, %v874
    %v876 = vand.u32 2147483647, %v875
    %v878 = vcvt.s32.f32 %v871
    %v879 = vmul.f32 %v878, %v876
    %v880 = vxor.u32 %v879, 2147483648
    %v881 = vsel %vm798, %v880, %v879
    %v882 = vsub.s32 4, %v858
    %v883 = vsel %vm798, %v882, %v858
    %v884 = vsel %vm797, %v309, %v881
    %v885 = vsel %vm797, 0, %v883
    %v886 = vcosq.f32.pop %v884
    %v887 = vsinq.f32.pop %v884
    %vm888 = vweird.f32 %v309
    %v889 = vand.u32 %v885, 3
    %vm890 = vcmp.lt.s32.totalorder %v889, 2
    %vm891 = vcmp.eq.s32.totalorder %v889, 0
    %v892 = vxor.u32 %v887, 2147483648
    %v893 = vsel %vm891, %v886, %v892
    %vm894 = vcmp.eq.s32.totalorder %v889, 2
    %v895 = vxor.u32 %v886, 2147483648
    %v896 = vsel %vm894, %v895, %v887
    %v897 = vsel %vm890, %v893, %v896
    %v898 = vsel %vm888, nan, %v897
    %v899 = vand.u32 2147483647, %v311
    %vm900 = vcmp.le.f32.partialorder %v899, 0.7853982
    %vm901 = vcmp.lt.s32.totalorder %v311, 0
    %v902 = vand.u32 %v311, 2139095040
    %v903 = vshrl.u32 %v902, 23
    %v904 = vsub.s32 %v903, 127
    %v905 = vand.u32 2147483647, %v311
    %v906 = vand.u32 %v905, 8388607
    %v907 = vor.u32 %v906, 8388608
    %v908 = vsub.s32 0, %v907
    %v909 = vadd.s32 %v904, 1
    %vm910 = vcmp.gt.s32.totalorder %v909, 0
    %v911 = vsel %vm910, %v909, 0
    %v912 = vshrl.u32 %v911, 5
    %v913 = vand.u32 %v911, 31
    %v914 = vsub.s32 32, %v913
    %v915 = vshrl.u32 683565275, %v914
    %v916 = vshll.u32 683565275, %v913
    %v917 = vshrl.u32 2475754826, %v914
    %v918 = vor.u32 %v916, %v917
    %v919 = vshll.u32 2475754826, %v913
    %v920 = vshrl.u32 2131351028, %v914
    %v921 = vor.u32 %v919, %v920
    %v922 = vshll.u32 2131351028, %v913
    %v923 = vshrl.u32 2102212464, %v914
    %v924 = vor.u32 %v922, %v923
    %v925 = vshll.u32 2102212464, %v913
    %v926 = vshrl.u32 920167782, %v914
    %v927 = vor.u32 %v925, %v926
    %v928 = vshll.u32 920167782, %v913
    %v929 = vshrl.u32 1326507024, %v914
    %v930 = vor.u32 %v928, %v929
    %vm931 = vcmp.lt.s32.totalorder %v912, 1
    %vm932 = vcmp.lt.s32.totalorder %v912, 2
    %vm933 = vcmp.lt.s32.totalorder %v912, 3
    %vm934 = vcmp.lt.s32.totalorder %v912, 4
    %v935 = vsel %vm931, %v915, %v918
    %v936 = vsel %vm934, %v924, 2102212464
    %v937 = vsel %vm933, %v921, %v936
    %v938 = vsel %vm932, %v935, %v937
    %v939 = vsel %vm931, %v918, %v921
    %v940 = vsel %vm934, %v927, 920167782
    %v941 = vsel %vm933, %v924, %v940
    %v942 = vsel %vm932, %v939, %v941
    %v943 = vsel %vm931, %v921, %v924
    %v944 = vsel %vm934, %v930, 1326507024
    %v945 = vsel %vm933, %v927, %v944
    %v946 = vsel %vm932, %v943, %v945
    %v947 = vshll.u32 %v907, 8
    %v948 = vmul.u32.u64.compose %v947, %v946
    %v949 = vextract.low.u32 %v948
    %v950 = vextract.high.u32 %v948
    %v951 = vmul.u32.u64.compose %v947, %v942
    %v952 = vextract.low.u32 %v951
    %v953 = vextract.high.u32 %v951
    %v954 = vmul.u32 %v947, %v938
    %v955 = vadd.s32 %v950, %v952
    %vm956 = vc.u32 %v950, %v952
    %v957 = vadd.s32 %v953, 1
    %v958 = vsel %vm956, %v957, %v953
    %v959 = vadd.s32 %v954, %v958
    %v960 = vadd.s32 %v959, 536870912
    %v961 = vshrl.u32 %v960, 30
    %v962 = vshll.u32 %v961, 30
    %v963 = vsub.s32 %v959, %v962
    %vm964 = vcmp.lt.s32.totalorder %v963, 0
    %v965 = vsub.s32 0, %v963
    %v966 = vsel %vm964, %v965, %v963
    %v967 = vclz %v966
    %v968 = vsub.s32 %v967, 2
    %vm969 = vcmp.gt.s32.totalorder 0, %v968
    %v970 = vsel %vm969, 0, %v968
    %v971 = vsub.s32 32, %v970
    %v972 = vshll.u32 %v963, %v970
    %v973 = vshrl.u32 %v955, %v971
    %v974 = vor.u32 %v972, %v973
    %v975 = vsub.s32 4294967266, %v970
    %v976 = vadd.s32 %v975, 127
    %v977 = vshll.u32 %v976, 23
    %v978 = vor.u32 4788187, %v977
    %v979 = vand.u32 2147483647, %v978
    %v981 = vcvt.s32.f32 %v974
    %v982 = vmul.f32 %v981, %v979
    %v983 = vxor.u32 %v982, 2147483648
    %v984 = vsel %vm901, %v983, %v982
    %v985 = vsub.s32 4, %v961
    %v986 = vsel %vm901, %v985, %v961
    %v987 = vsel %vm900, %v311, %v984
    %v988 = vsel %vm900, 0, %v986
    %v989 = vcosq.f32.pop %v987
    %v990 = vsinq.f32.pop %v987
    %vm991 = vweird.f32 %v311
    %v992 = vand.u32 %v988, 3
    %vm993 = vcmp.lt.s32.totalorder %v992, 2
    %vm994 = vcmp.eq.s32.totalorder %v992, 0
    %v995 = vxor.u32 %v990, 2147483648
    %v996 = vsel %vm994, %v989, %v995
    %vm997 = vcmp.eq.s32.totalorder %v992, 2
    %v998 = vxor.u32 %v989, 2147483648
    %v999 = vsel %vm997, %v998, %v990
    %v1000 = vsel %vm993, %v996, %v999
    %v1001 = vsel %vm991, nan, %v1000
    %v1002 = vand.u32 2147483647, %v380
    %vm1003 = vcmp.le.f32.partialorder %v1002, 0.7853982
    %vm1004 = vcmp.lt.s32.totalorder %v380, 0
    %v1005 = vand.u32 %v380, 2139095040
    %v1006 = vshrl.u32 %v1005, 23
    %v1007 = vsub.s32 %v1006, 127
    %v1008 = vand.u32 2147483647, %v380
    %v1009 = vand.u32 %v1008, 8388607
    %v1010 = vor.u32 %v1009, 8388608
    %v1011 = vsub.s32 0, %v1010
    %v1012 = vadd.s32 %v1007, 1
    %vm1013 = vcmp.gt.s32.totalorder %v1012, 0
    %v1014 = vsel %vm1013, %v1012, 0
    %v1015 = vshrl.u32 %v1014, 5
    %v1016 = vand.u32 %v1014, 31
    %v1017 = vsub.s32 32, %v1016
    %v1018 = vshrl.u32 683565275, %v1017
    %v1019 = vshll.u32 683565275, %v1016
    %v1020 = vshrl.u32 2475754826, %v1017
    %v1021 = vor.u32 %v1019, %v1020
    %v1022 = vshll.u32 2475754826, %v1016
    %v1023 = vshrl.u32 2131351028, %v1017
    %v1024 = vor.u32 %v1022, %v1023
    %v1025 = vshll.u32 2131351028, %v1016
    %v1026 = vshrl.u32 2102212464, %v1017
    %v1027 = vor.u32 %v1025, %v1026
    %v1028 = vshll.u32 2102212464, %v1016
    %v1029 = vshrl.u32 920167782, %v1017
    %v1030 = vor.u32 %v1028, %v1029
    %v1031 = vshll.u32 920167782, %v1016
    %v1032 = vshrl.u32 1326507024, %v1017
    %v1033 = vor.u32 %v1031, %v1032
    %vm1034 = vcmp.lt.s32.totalorder %v1015, 1
    %vm1035 = vcmp.lt.s32.totalorder %v1015, 2
    %vm1036 = vcmp.lt.s32.totalorder %v1015, 3
    %vm1037 = vcmp.lt.s32.totalorder %v1015, 4
    %v1038 = vsel %vm1034, %v1018, %v1021
    %v1039 = vsel %vm1037, %v1027, 2102212464
    %v1040 = vsel %vm1036, %v1024, %v1039
    %v1041 = vsel %vm1035, %v1038, %v1040
    %v1042 = vsel %vm1034, %v1021, %v1024
    %v1043 = vsel %vm1037, %v1030, 920167782
    %v1044 = vsel %vm1036, %v1027, %v1043
    %v1045 = vsel %vm1035, %v1042, %v1044
    %v1046 = vsel %vm1034, %v1024, %v1027
    %v1047 = vsel %vm1037, %v1033, 1326507024
    %v1048 = vsel %vm1036, %v1030, %v1047
    %v1049 = vsel %vm1035, %v1046, %v1048
    %v1050 = vshll.u32 %v1010, 8
    %v1051 = vmul.u32.u64.compose %v1050, %v1049
    %v1052 = vextract.low.u32 %v1051
    %v1053 = vextract.high.u32 %v1051
    %v1054 = vmul.u32.u64.compose %v1050, %v1045
    %v1055 = vextract.low.u32 %v1054
    %v1056 = vextract.high.u32 %v1054
    %v1057 = vmul.u32 %v1050, %v1041
    %v1058 = vadd.s32 %v1053, %v1055
    %vm1059 = vc.u32 %v1053, %v1055
    %v1060 = vadd.s32 %v1056, 1
    %v1061 = vsel %vm1059, %v1060, %v1056
    %v1062 = vadd.s32 %v1057, %v1061
    %v1063 = vadd.s32 %v1062, 536870912
    %v1064 = vshrl.u32 %v1063, 30
    %v1065 = vshll.u32 %v1064, 30
    %v1066 = vsub.s32 %v1062, %v1065
    %vm1067 = vcmp.lt.s32.totalorder %v1066, 0
    %v1068 = vsub.s32 0, %v1066
    %v1069 = vsel %vm1067, %v1068, %v1066
    %v1070 = vclz %v1069
    %v1071 = vsub.s32 %v1070, 2
    %vm1072 = vcmp.gt.s32.totalorder 0, %v1071
    %v1073 = vsel %vm1072, 0, %v1071
    %v1074 = vsub.s32 32, %v1073
    %v1075 = vshll.u32 %v1066, %v1073
    %v1076 = vshrl.u32 %v1058, %v1074
    %v1077 = vor.u32 %v1075, %v1076
    %v1078 = vsub.s32 4294967266, %v1073
    %v1079 = vadd.s32 %v1078, 127
    %v1080 = vshll.u32 %v1079, 23
    %v1081 = vor.u32 4788187, %v1080
    %v1082 = vand.u32 2147483647, %v1081
    %v1084 = vcvt.s32.f32 %v1077
    %v1085 = vmul.f32 %v1084, %v1082
    %v1086 = vxor.u32 %v1085, 2147483648
    %v1087 = vsel %vm1004, %v1086, %v1085
    %v1088 = vsub.s32 4, %v1064
    %v1089 = vsel %vm1004, %v1088, %v1064
    %v1090 = vsel %vm1003, %v380, %v1087
    %v1091 = vsel %vm1003, 0, %v1089
    %v1092 = vcosq.f32.pop %v1090
    %v1093 = vsinq.f32.pop %v1090
    %vm1094 = vweird.f32 %v380
    %v1095 = vand.u32 %v1091, 3
    %vm1096 = vcmp.lt.s32.totalorder %v1095, 2
    %vm1097 = vcmp.eq.s32.totalorder %v1095, 0
    %v1098 = vxor.u32 %v1093, 2147483648
    %v1099 = vsel %vm1097, %v1092, %v1098
    %vm1100 = vcmp.eq.s32.totalorder %v1095, 2
    %v1101 = vxor.u32 %v1092, 2147483648
    %v1102 = vsel %vm1100, %v1101, %v1093
    %v1103 = vsel %vm1096, %v1099, %v1102
    %v1104 = vsel %vm1094, nan, %v1103
    %v1105 = vand.u32 2147483647, %v382
    %vm1106 = vcmp.le.f32.partialorder %v1105, 0.7853982
    %vm1107 = vcmp.lt.s32.totalorder %v382, 0
    %v1108 = vand.u32 %v382, 2139095040
    %v1109 = vshrl.u32 %v1108, 23
    %v1110 = vsub.s32 %v1109, 127
    %v1111 = vand.u32 2147483647, %v382
    %v1112 = vand.u32 %v1111, 8388607
    %v1113 = vor.u32 %v1112, 8388608
    %v1114 = vsub.s32 0, %v1113
    %v1115 = vadd.s32 %v1110, 1
    %vm1116 = vcmp.gt.s32.totalorder %v1115, 0
    %v1117 = vsel %vm1116, %v1115, 0
    %v1118 = vshrl.u32 %v1117, 5
    %v1119 = vand.u32 %v1117, 31
    %v1120 = vsub.s32 32, %v1119
    %v1121 = vshrl.u32 683565275, %v1120
    %v1122 = vshll.u32 683565275, %v1119
    %v1123 = vshrl.u32 2475754826, %v1120
    %v1124 = vor.u32 %v1122, %v1123
    %v1125 = vshll.u32 2475754826, %v1119
    %v1126 = vshrl.u32 2131351028, %v1120
    %v1127 = vor.u32 %v1125, %v1126
    %v1128 = vshll.u32 2131351028, %v1119
    %v1129 = vshrl.u32 2102212464, %v1120
    %v1130 = vor.u32 %v1128, %v1129
    %v1131 = vshll.u32 2102212464, %v1119
    %v1132 = vshrl.u32 920167782, %v1120
    %v1133 = vor.u32 %v1131, %v1132
    %v1134 = vshll.u32 920167782, %v1119
    %v1135 = vshrl.u32 1326507024, %v1120
    %v1136 = vor.u32 %v1134, %v1135
    %vm1137 = vcmp.lt.s32.totalorder %v1118, 1
    %vm1138 = vcmp.lt.s32.totalorder %v1118, 2
    %vm1139 = vcmp.lt.s32.totalorder %v1118, 3
    %vm1140 = vcmp.lt.s32.totalorder %v1118, 4
    %v1141 = vsel %vm1137, %v1121, %v1124
    %v1142 = vsel %vm1140, %v1130, 2102212464
    %v1143 = vsel %vm1139, %v1127, %v1142
    %v1144 = vsel %vm1138, %v1141, %v1143
    %v1145 = vsel %vm1137, %v1124, %v1127
    %v1146 = vsel %vm1140, %v1133, 920167782
    %v1147 = vsel %vm1139, %v1130, %v1146
    %v1148 = vsel %vm1138, %v1145, %v1147
    %v1149 = vsel %vm1137, %v1127, %v1130
    %v1150 = vsel %vm1140, %v1136, 1326507024
    %v1151 = vsel %vm1139, %v1133, %v1150
    %v1152 = vsel %vm1138, %v1149, %v1151
    %v1153 = vshll.u32 %v1113, 8
    %v1154 = vmul.u32.u64.compose %v1153, %v1152
    %v1155 = vextract.low.u32 %v1154
    %v1156 = vextract.high.u32 %v1154
    %v1157 = vmul.u32.u64.compose %v1153, %v1148
    %v1158 = vextract.low.u32 %v1157
    %v1159 = vextract.high.u32 %v1157
    %v1160 = vmul.u32 %v1153, %v1144
    %v1161 = vadd.s32 %v1156, %v1158
    %vm1162 = vc.u32 %v1156, %v1158
    %v1163 = vadd.s32 %v1159, 1
    %v1164 = vsel %vm1162, %v1163, %v1159
    %v1165 = vadd.s32 %v1160, %v1164
    %v1166 = vadd.s32 %v1165, 536870912
    %v1167 = vshrl.u32 %v1166, 30
    %v1168 = vshll.u32 %v1167, 30
    %v1169 = vsub.s32 %v1165, %v1168
    %vm1170 = vcmp.lt.s32.totalorder %v1169, 0
    %v1171 = vsub.s32 0, %v1169
    %v1172 = vsel %vm1170, %v1171, %v1169
    %v1173 = vclz %v1172
    %v1174 = vsub.s32 %v1173, 2
    %vm1175 = vcmp.gt.s32.totalorder 0, %v1174
    %v1176 = vsel %vm1175, 0, %v1174
    %v1177 = vsub.s32 32, %v1176
    %v1178 = vshll.u32 %v1169, %v1176
    %v1179 = vshrl.u32 %v1161, %v1177
    %v1180 = vor.u32 %v1178, %v1179
    %v1181 = vsub.s32 4294967266, %v1176
    %v1182 = vadd.s32 %v1181, 127
    %v1183 = vshll.u32 %v1182, 23
    %v1184 = vor.u32 4788187, %v1183
    %v1185 = vand.u32 2147483647, %v1184
    %v1187 = vcvt.s32.f32 %v1180
    %v1188 = vmul.f32 %v1187, %v1185
    %v1189 = vxor.u32 %v1188, 2147483648
    %v1190 = vsel %vm1107, %v1189, %v1188
    %v1191 = vsub.s32 4, %v1167
    %v1192 = vsel %vm1107, %v1191, %v1167
    %v1193 = vsel %vm1106, %v382, %v1190
    %v1194 = vsel %vm1106, 0, %v1192
    %v1195 = vcosq.f32.pop %v1193
    %v1196 = vsinq.f32.pop %v1193
    %vm1197 = vweird.f32 %v382
    %v1198 = vand.u32 %v1194, 3
    %vm1199 = vcmp.lt.s32.totalorder %v1198, 2
    %vm1200 = vcmp.eq.s32.totalorder %v1198, 0
    %v1201 = vxor.u32 %v1196, 2147483648
    %v1202 = vsel %vm1200, %v1195, %v1201
    %vm1203 = vcmp.eq.s32.totalorder %v1198, 2
    %v1204 = vxor.u32 %v1195, 2147483648
    %v1205 = vsel %vm1203, %v1204, %v1196
    %v1206 = vsel %vm1199, %v1202, %v1205
    %v1207 = vsel %vm1197, nan, %v1206
    %v1208 = vld [vmem:[%s3] sm:$0xff]
    %v1209 = vld [vmem:[%s3 + $0x8] sm:$0xff]
    %v1210 = vld [vmem:[%s3 + $0x10] sm:$0xff]
    %v1211 = vld [vmem:[%s3 + $0x18] sm:$0xff]
    %v1212 = vld [vmem:[%s3 + $0x20] sm:$0xff]
    %v1213 = vld [vmem:[%s3 + $0x28] sm:$0xff]
    %v1214 = vld [vmem:[%s3 + $0x30] sm:$0xff]
    %v1215 = vld [vmem:[%s3 + $0x38] sm:$0xff]
    %v1216 = vld [vmem:[%s3 + $0x40] sm:$0xff]
    %v1217 = vld [vmem:[%s3 + $0x48] sm:$0xff]
    %v1218 = vld [vmem:[%s3 + $0x50] sm:$0xff]
    %v1219 = vld [vmem:[%s3 + $0x58] sm:$0xff]
    %v1220 = vld [vmem:[%s3 + $0x60] sm:$0xff]
    %v1221 = vld [vmem:[%s3 + $0x68] sm:$0xff]
    %v1222 = vld [vmem:[%s3 + $0x70] sm:$0xff]
    %v1223 = vld [vmem:[%s3 + $0x78] sm:$0xff]
    %v1224 = vld [vmem:[%s3 + $0x80] sm:$0xff]
    %v1225 = vld [vmem:[%s3 + $0x88] sm:$0xff]
    %v1226 = vld [vmem:[%s3 + $0x90] sm:$0xff]
    %v1227 = vld [vmem:[%s3 + $0x98] sm:$0xff]
    %v1228 = vld [vmem:[%s3 + $0xa0] sm:$0xff]
    %v1229 = vld [vmem:[%s3 + $0xa8] sm:$0xff]
    %v1230 = vld [vmem:[%s3 + $0xb0] sm:$0xff]
    %v1231 = vld [vmem:[%s3 + $0xb8] sm:$0xff]
    %v1232 = vld [vmem:[%s3 + $0xc0] sm:$0xff]
    %v1233 = vld [vmem:[%s3 + $0xc8] sm:$0xff]
    %v1234 = vld [vmem:[%s3 + $0xd0] sm:$0xff]
    %v1235 = vld [vmem:[%s3 + $0xd8] sm:$0xff]
    %v1236 = vld [vmem:[%s3 + $0xe0] sm:$0xff]
    %v1237 = vld [vmem:[%s3 + $0xe8] sm:$0xff]
    %v1238 = vld [vmem:[%s3 + $0xf0] sm:$0xff]
    %v1239 = vld [vmem:[%s3 + $0xf8] sm:$0xff]
    %v1240 = vld [vmem:[%s3 + $0x100] sm:$0xff]
    %v1241 = vld [vmem:[%s3 + $0x108] sm:$0xff]
    %v1242 = vld [vmem:[%s3 + $0x110] sm:$0xff]
    %v1243 = vld [vmem:[%s3 + $0x118] sm:$0xff]
    %v1244 = vld [vmem:[%s3 + $0x120] sm:$0xff]
    %v1245 = vld [vmem:[%s3 + $0x128] sm:$0xff]
    %v1246 = vld [vmem:[%s3 + $0x130] sm:$0xff]
    %v1247 = vld [vmem:[%s3 + $0x138] sm:$0xff]
    %v1248 = vld [vmem:[%s3 + $0x140] sm:$0xff]
    %v1249 = vld [vmem:[%s3 + $0x148] sm:$0xff]
    %v1250 = vld [vmem:[%s3 + $0x150] sm:$0xff]
    %v1251 = vld [vmem:[%s3 + $0x158] sm:$0xff]
    %v1252 = vld [vmem:[%s3 + $0x160] sm:$0xff]
    %v1253 = vld [vmem:[%s3 + $0x168] sm:$0xff]
    %v1254 = vld [vmem:[%s3 + $0x170] sm:$0xff]
    %v1255 = vld [vmem:[%s3 + $0x178] sm:$0xff]
    %v1256 = vld [vmem:[%s3 + $0x180] sm:$0xff]
    %v1257 = vld [vmem:[%s3 + $0x188] sm:$0xff]
    %v1258 = vld [vmem:[%s3 + $0x190] sm:$0xff]
    %v1259 = vld [vmem:[%s3 + $0x198] sm:$0xff]
    %v1260 = vld [vmem:[%s3 + $0x1a0] sm:$0xff]
    %v1261 = vld [vmem:[%s3 + $0x1a8] sm:$0xff]
    %v1262 = vld [vmem:[%s3 + $0x1b0] sm:$0xff]
    %v1263 = vld [vmem:[%s3 + $0x1b8] sm:$0xff]
    %v1264 = vld [vmem:[%s3 + $0x1c0] sm:$0xff]
    %v1265 = vld [vmem:[%s3 + $0x1c8] sm:$0xff]
    %v1266 = vld [vmem:[%s3 + $0x1d0] sm:$0xff]
    %v1267 = vld [vmem:[%s3 + $0x1d8] sm:$0xff]
    %v1268 = vld [vmem:[%s3 + $0x1e0] sm:$0xff]
    %v1269 = vld [vmem:[%s3 + $0x1e8] sm:$0xff]
    %v1270 = vld [vmem:[%s3 + $0x1f0] sm:$0xff]
    %v1271 = vld [vmem:[%s3 + $0x1f8] sm:$0xff]
    %v1272 = vld [vmem:[%s3 + $0x200] sm:$0xff]
    %v1273 = vld [vmem:[%s3 + $0x208] sm:$0xff]
    %v1274 = vld [vmem:[%s3 + $0x210] sm:$0xff]
    %v1275 = vld [vmem:[%s3 + $0x218] sm:$0xff]
    %v1276 = vld [vmem:[%s3 + $0x220] sm:$0xff]
    %v1277 = vld [vmem:[%s3 + $0x228] sm:$0xff]
    %v1278 = vld [vmem:[%s3 + $0x230] sm:$0xff]
    %v1279 = vld [vmem:[%s3 + $0x238] sm:$0xff]
    %v1280 = vld [vmem:[%s3 + $0x240] sm:$0xff]
    %v1281 = vld [vmem:[%s3 + $0x248] sm:$0xff]
    %v1282 = vld [vmem:[%s3 + $0x250] sm:$0xff]
    %v1283 = vld [vmem:[%s3 + $0x258] sm:$0xff]
    %v1284 = vld [vmem:[%s3 + $0x260] sm:$0xff]
    %v1285 = vld [vmem:[%s3 + $0x268] sm:$0xff]
    %v1286 = vld [vmem:[%s3 + $0x270] sm:$0xff]
    %v1287 = vld [vmem:[%s3 + $0x278] sm:$0xff]
    %v1288 = vld [vmem:[%s3 + $0x280] sm:$0xff]
    %v1289 = vld [vmem:[%s3 + $0x288] sm:$0xff]
    %v1290 = vld [vmem:[%s3 + $0x290] sm:$0xff]
    %v1291 = vld [vmem:[%s3 + $0x298] sm:$0xff]
    %v1292 = vld [vmem:[%s3 + $0x2a0] sm:$0xff]
    %v1293 = vld [vmem:[%s3 + $0x2a8] sm:$0xff]
    %v1294 = vld [vmem:[%s3 + $0x2b0] sm:$0xff]
    %v1295 = vld [vmem:[%s3 + $0x2b8] sm:$0xff]
    %v1296 = vld [vmem:[%s3 + $0x2c0] sm:$0xff]
    %v1297 = vld [vmem:[%s3 + $0x2c8] sm:$0xff]
    %v1298 = vld [vmem:[%s3 + $0x2d0] sm:$0xff]
    %v1299 = vld [vmem:[%s3 + $0x2d8] sm:$0xff]
    %v1300 = vld [vmem:[%s3 + $0x2e0] sm:$0xff]
    %v1301 = vld [vmem:[%s3 + $0x2e8] sm:$0xff]
    %v1302 = vld [vmem:[%s3 + $0x2f0] sm:$0xff]
    %v1303 = vld [vmem:[%s3 + $0x2f8] sm:$0xff]
    %v1304 = vld [vmem:[%s3 + $0x300] sm:$0xff]
    %v1305 = vld [vmem:[%s3 + $0x308] sm:$0xff]
    %v1306 = vld [vmem:[%s3 + $0x310] sm:$0xff]
    %v1307 = vld [vmem:[%s3 + $0x318] sm:$0xff]
    %v1308 = vld [vmem:[%s3 + $0x320] sm:$0xff]
    %v1309 = vld [vmem:[%s3 + $0x328] sm:$0xff]
    %v1310 = vld [vmem:[%s3 + $0x330] sm:$0xff]
    %v1311 = vld [vmem:[%s3 + $0x338] sm:$0xff]
    %v1312 = vld [vmem:[%s3 + $0x340] sm:$0xff]
    %v1313 = vld [vmem:[%s3 + $0x348] sm:$0xff]
    %v1314 = vld [vmem:[%s3 + $0x350] sm:$0xff]
    %v1315 = vld [vmem:[%s3 + $0x358] sm:$0xff]
    %v1316 = vld [vmem:[%s3 + $0x360] sm:$0xff]
    %v1317 = vld [vmem:[%s3 + $0x368] sm:$0xff]
    %v1318 = vld [vmem:[%s3 + $0x370] sm:$0xff]
    %v1319 = vld [vmem:[%s3 + $0x378] sm:$0xff]
    %v1320 = vld [vmem:[%s3 + $0x380] sm:$0xff]
    %v1321 = vld [vmem:[%s3 + $0x388] sm:$0xff]
    %v1322 = vld [vmem:[%s3 + $0x390] sm:$0xff]
    %v1323 = vld [vmem:[%s3 + $0x398] sm:$0xff]
    %v1324 = vld [vmem:[%s3 + $0x3a0] sm:$0xff]
    %v1325 = vld [vmem:[%s3 + $0x3a8] sm:$0xff]
    %v1326 = vld [vmem:[%s3 + $0x3b0] sm:$0xff]
    %v1327 = vld [vmem:[%s3 + $0x3b8] sm:$0xff]
    %v1328 = vld [vmem:[%s3 + $0x3c0] sm:$0xff]
    %v1329 = vld [vmem:[%s3 + $0x3c8] sm:$0xff]
    %v1330 = vld [vmem:[%s3 + $0x3d0] sm:$0xff]
    %v1331 = vld [vmem:[%s3 + $0x3d8] sm:$0xff]
    %v1332 = vld [vmem:[%s3 + $0x3e0] sm:$0xff]
    %v1333 = vld [vmem:[%s3 + $0x3e8] sm:$0xff]
    %v1334 = vld [vmem:[%s3 + $0x3f0] sm:$0xff]
    %v1335 = vld [vmem:[%s3 + $0x3f8] sm:$0xff]
    %v1336 = vld [vmem:[%s4] sm:$0x1]
    %v1338 = vlaneseq
    %v1339 = vshrl.u32 %v1338, 7
    %v1340 = vsub.s32 0, %v1339
    %v1341 = vrot.slane %v1336, %v1340
    %1343 = vmatprep.subr.mxu0 0.0
    %1344 = vmatpush1.msra.mxu0 %v1223
    %1345 = vmatprep.subr.mxu0 0.0
    %1346 = vmatpush1.msra.mxu0 %v1222
    %1347 = vmatprep.subr.mxu0 0.0
    %1348 = vmatpush1.msra.mxu0 %v1221
    %1349 = vmatprep.subr.mxu0 0.0
    %1350 = vmatpush1.msra.mxu0 %v1220
    %1351 = vmatprep.subr.mxu0 0.0
    %1352 = vmatpush1.msra.mxu0 %v1219
    %1353 = vmatprep.subr.mxu0 0.0
    %1354 = vmatpush1.msra.mxu0 %v1218
    %1355 = vmatprep.subr.mxu0 0.0
    %1356 = vmatpush1.msra.mxu0 %v1217
    %1357 = vmatprep.subr.mxu0 0.0
    %1358 = vmatpush1.msra.mxu0 %v1216
    %1359 = vmatprep.subr.mxu0 0.0
    %1360 = vmatpush1.msra.mxu0 %v1215
    %1361 = vmatprep.subr.mxu0 0.0
    %1362 = vmatpush1.msra.mxu0 %v1214
    %1363 = vmatprep.subr.mxu0 0.0
    %1364 = vmatpush1.msra.mxu0 %v1213
    %1365 = vmatprep.subr.mxu0 0.0
    %1366 = vmatpush1.msra.mxu0 %v1212
    %1367 = vmatprep.subr.mxu0 0.0
    %1368 = vmatpush1.msra.mxu0 %v1211
    %1369 = vmatprep.subr.mxu0 0.0
    %1370 = vmatpush1.msra.mxu0 %v1210
    %1371 = vmatprep.subr.mxu0 0.0
    %1372 = vmatpush1.msra.mxu0 %v1209
    %1373 = vmatprep.subr.mxu0 0.0
    %1374 = vmatpush1.msra.mxu0 %v1208
    %1375 = vmatprep.subr.mxu0 0.0
    %1376 = vmatpush2.msra.mxu0 %v1239
    %1377 = vmatprep.subr.mxu0 0.0
    %1378 = vmatpush2.msra.mxu0 %v1238
    %1379 = vmatprep.subr.mxu0 0.0
    %1380 = vmatpush2.msra.mxu0 %v1237
    %1381 = vmatprep.subr.mxu0 0.0
    %1382 = vmatpush2.msra.mxu0 %v1236
    %1383 = vmatprep.subr.mxu0 0.0
    %1384 = vmatpush2.msra.mxu0 %v1235
    %1385 = vmatprep.subr.mxu0 0.0
    %1386 = vmatpush2.msra.mxu0 %v1234
    %1387 = vmatprep.subr.mxu0 0.0
    %1388 = vmatpush2.msra.mxu0 %v1233
    %1389 = vmatprep.subr.mxu0 0.0
    %1390 = vmatpush2.msra.mxu0 %v1232
    %1391 = vmatprep.subr.mxu0 0.0
    %1392 = vmatpush2.msra.mxu0 %v1231
    %1393 = vmatprep.subr.mxu0 0.0
    %1394 = vmatpush2.msra.mxu0 %v1230
    %1395 = vmatprep.subr.mxu0 0.0
    %1396 = vmatpush2.msra.mxu0 %v1229
    %1397 = vmatprep.subr.mxu0 0.0
    %1398 = vmatpush2.msra.mxu0 %v1228
    %1399 = vmatprep.subr.mxu0 0.0
    %1400 = vmatpush2.msra.mxu0 %v1227
    %1401 = vmatprep.subr.mxu0 0.0
    %1402 = vmatpush2.msra.mxu0 %v1226
    %1403 = vmatprep.subr.mxu0 0.0
    %1404 = vmatpush2.msra.mxu0 %v1225
    %1405 = vmatprep.subr.mxu0 0.0
    %1406 = vmatpush2.msra.mxu0 %v1224
    %1407 = vmatprep.mubr.f32.mxu0 %v589
    %1408 = vmatmul.mubr.f32.gmra.mxu0 %v486
    %v1409 = vpop.f32.mrf.mxu0
    %v1410 = vadd.f32 %v1341, %v1409
    %v1411 = vpop.f32.mrf.mxu0
    %1412 = vdwg.mxu0
    %1413 = vmatprep.subr.mxu0 0.0
    %1414 = vmatpush1.msra.mxu0 %v1255
    %1415 = vmatprep.subr.mxu0 0.0
    %1416 = vmatpush1.msra.mxu0 %v1254
    %1417 = vmatprep.subr.mxu0 0.0
    %1418 = vmatpush1.msra.mxu0 %v1253
    %1419 = vmatprep.subr.mxu0 0.0
    %1420 = vmatpush1.msra.mxu0 %v1252
    %1421 = vmatprep.subr.mxu0 0.0
    %1422 = vmatpush1.msra.mxu0 %v1251
    %1423 = vmatprep.subr.mxu0 0.0
    %1424 = vmatpush1.msra.mxu0 %v1250
    %1425 = vmatprep.subr.mxu0 0.0
    %1426 = vmatpush1.msra.mxu0 %v1249
    %1427 = vmatprep.subr.mxu0 0.0
    %1428 = vmatpush1.msra.mxu0 %v1248
    %1429 = vmatprep.subr.mxu0 0.0
    %1430 = vmatpush1.msra.mxu0 %v1247
    %1431 = vmatprep.subr.mxu0 0.0
    %1432 = vmatpush1.msra.mxu0 %v1246
    %1433 = vmatprep.subr.mxu0 0.0
    %1434 = vmatpush1.msra.mxu0 %v1245
    %1435 = vmatprep.subr.mxu0 0.0
    %1436 = vmatpush1.msra.mxu0 %v1244
    %1437 = vmatprep.subr.mxu0 0.0
    %1438 = vmatpush1.msra.mxu0 %v1243
    %1439 = vmatprep.subr.mxu0 0.0
    %1440 = vmatpush1.msra.mxu0 %v1242
    %1441 = vmatprep.subr.mxu0 0.0
    %1442 = vmatpush1.msra.mxu0 %v1241
    %1443 = vmatprep.subr.mxu0 0.0
    %1444 = vmatpush1.msra.mxu0 %v1240
    %1445 = vmatprep.subr.mxu0 0.0
    %1446 = vmatpush2.msra.mxu0 %v1271
    %1447 = vmatprep.subr.mxu0 0.0
    %1448 = vmatpush2.msra.mxu0 %v1270
    %1449 = vmatprep.subr.mxu0 0.0
    %1450 = vmatpush2.msra.mxu0 %v1269
    %1451 = vmatprep.subr.mxu0 0.0
    %1452 = vmatpush2.msra.mxu0 %v1268
    %1453 = vmatprep.subr.mxu0 0.0
    %1454 = vmatpush2.msra.mxu0 %v1267
    %1455 = vmatprep.subr.mxu0 0.0
    %1456 = vmatpush2.msra.mxu0 %v1266
    %1457 = vmatprep.subr.mxu0 0.0
    %1458 = vmatpush2.msra.mxu0 %v1265
    %1459 = vmatprep.subr.mxu0 0.0
    %1460 = vmatpush2.msra.mxu0 %v1264
    %1461 = vmatprep.subr.mxu0 0.0
    %1462 = vmatpush2.msra.mxu0 %v1263
    %1463 = vmatprep.subr.mxu0 0.0
    %1464 = vmatpush2.msra.mxu0 %v1262
    %1465 = vmatprep.subr.mxu0 0.0
    %1466 = vmatpush2.msra.mxu0 %v1261
    %1467 = vmatprep.subr.mxu0 0.0
    %1468 = vmatpush2.msra.mxu0 %v1260
    %1469 = vmatprep.subr.mxu0 0.0
    %1470 = vmatpush2.msra.mxu0 %v1259
    %1471 = vmatprep.subr.mxu0 0.0
    %1472 = vmatpush2.msra.mxu0 %v1258
    %1473 = vmatprep.subr.mxu0 0.0
    %1474 = vmatpush2.msra.mxu0 %v1257
    %1475 = vmatprep.subr.mxu0 0.0
    %1476 = vmatpush2.msra.mxu0 %v1256
    %1477 = vmatprep.mubr.f32.mxu0 %v795
    %1478 = vmatmul.mubr.f32.gmra.mxu0 %v692
    %v1479 = vpop.f32.mrf.mxu0
    %v1480 = vadd.f32 %v1410, %v1479
    %v1481 = vpop.f32.mrf.mxu0
    %1482 = vdwg.mxu0
    %1483 = vmatprep.subr.mxu0 0.0
    %1484 = vmatpush1.msra.mxu0 %v1287
    %1485 = vmatprep.subr.mxu0 0.0
    %1486 = vmatpush1.msra.mxu0 %v1286
    %1487 = vmatprep.subr.mxu0 0.0
    %1488 = vmatpush1.msra.mxu0 %v1285
    %1489 = vmatprep.subr.mxu0 0.0
    %1490 = vmatpush1.msra.mxu0 %v1284
    %1491 = vmatprep.subr.mxu0 0.0
    %1492 = vmatpush1.msra.mxu0 %v1283
    %1493 = vmatprep.subr.mxu0 0.0
    %1494 = vmatpush1.msra.mxu0 %v1282
    %1495 = vmatprep.subr.mxu0 0.0
    %1496 = vmatpush1.msra.mxu0 %v1281
    %1497 = vmatprep.subr.mxu0 0.0
    %1498 = vmatpush1.msra.mxu0 %v1280
    %1499 = vmatprep.subr.mxu0 0.0
    %1500 = vmatpush1.msra.mxu0 %v1279
    %1501 = vmatprep.subr.mxu0 0.0
    %1502 = vmatpush1.msra.mxu0 %v1278
    %1503 = vmatprep.subr.mxu0 0.0
    %1504 = vmatpush1.msra.mxu0 %v1277
    %1505 = vmatprep.subr.mxu0 0.0
    %1506 = vmatpush1.msra.mxu0 %v1276
    %1507 = vmatprep.subr.mxu0 0.0
    %1508 = vmatpush1.msra.mxu0 %v1275
    %1509 = vmatprep.subr.mxu0 0.0
    %1510 = vmatpush1.msra.mxu0 %v1274
    %1511 = vmatprep.subr.mxu0 0.0
    %1512 = vmatpush1.msra.mxu0 %v1273
    %1513 = vmatprep.subr.mxu0 0.0
    %1514 = vmatpush1.msra.mxu0 %v1272
    %1515 = vmatprep.subr.mxu0 0.0
    %1516 = vmatpush2.msra.mxu0 %v1303
    %1517 = vmatprep.subr.mxu0 0.0
    %1518 = vmatpush2.msra.mxu0 %v1302
    %1519 = vmatprep.subr.mxu0 0.0
    %1520 = vmatpush2.msra.mxu0 %v1301
    %1521 = vmatprep.subr.mxu0 0.0
    %1522 = vmatpush2.msra.mxu0 %v1300
    %1523 = vmatprep.subr.mxu0 0.0
    %1524 = vmatpush2.msra.mxu0 %v1299
    %1525 = vmatprep.subr.mxu0 0.0
    %1526 = vmatpush2.msra.mxu0 %v1298
    %1527 = vmatprep.subr.mxu0 0.0
    %1528 = vmatpush2.msra.mxu0 %v1297
    %1529 = vmatprep.subr.mxu0 0.0
    %1530 = vmatpush2.msra.mxu0 %v1296
    %1531 = vmatprep.subr.mxu0 0.0
    %1532 = vmatpush2.msra.mxu0 %v1295
    %1533 = vmatprep.subr.mxu0 0.0
    %1534 = vmatpush2.msra.mxu0 %v1294
    %1535 = vmatprep.subr.mxu0 0.0
    %1536 = vmatpush2.msra.mxu0 %v1293
    %1537 = vmatprep.subr.mxu0 0.0
    %1538 = vmatpush2.msra.mxu0 %v1292
    %1539 = vmatprep.subr.mxu0 0.0
    %1540 = vmatpush2.msra.mxu0 %v1291
    %1541 = vmatprep.subr.mxu0 0.0
    %1542 = vmatpush2.msra.mxu0 %v1290
    %1543 = vmatprep.subr.mxu0 0.0
    %1544 = vmatpush2.msra.mxu0 %v1289
    %1545 = vmatprep.subr.mxu0 0.0
    %1546 = vmatpush2.msra.mxu0 %v1288
    %1547 = vmatprep.mubr.f32.mxu0 %v1001
    %1548 = vmatmul.mubr.f32.gmra.mxu0 %v898
    %v1549 = vpop.f32.mrf.mxu0
    %v1550 = vadd.f32 %v1480, %v1549
    %v1551 = vpop.f32.mrf.mxu0
    %1552 = vdwg.mxu0
    %1553 = vmatprep.subr.mxu0 0.0
    %1554 = vmatpush1.msra.mxu0 %v1319
    %1555 = vmatprep.subr.mxu0 0.0
    %1556 = vmatpush1.msra.mxu0 %v1318
    %1557 = vmatprep.subr.mxu0 0.0
    %1558 = vmatpush1.msra.mxu0 %v1317
    %1559 = vmatprep.subr.mxu0 0.0
    %1560 = vmatpush1.msra.mxu0 %v1316
    %1561 = vmatprep.subr.mxu0 0.0
    %1562 = vmatpush1.msra.mxu0 %v1315
    %1563 = vmatprep.subr.mxu0 0.0
    %1564 = vmatpush1.msra.mxu0 %v1314
    %1565 = vmatprep.subr.mxu0 0.0
    %1566 = vmatpush1.msra.mxu0 %v1313
    %1567 = vmatprep.subr.mxu0 0.0
    %1568 = vmatpush1.msra.mxu0 %v1312
    %1569 = vmatprep.subr.mxu0 0.0
    %1570 = vmatpush1.msra.mxu0 %v1311
    %1571 = vmatprep.subr.mxu0 0.0
    %1572 = vmatpush1.msra.mxu0 %v1310
    %1573 = vmatprep.subr.mxu0 0.0
    %1574 = vmatpush1.msra.mxu0 %v1309
    %1575 = vmatprep.subr.mxu0 0.0
    %1576 = vmatpush1.msra.mxu0 %v1308
    %1577 = vmatprep.subr.mxu0 0.0
    %1578 = vmatpush1.msra.mxu0 %v1307
    %1579 = vmatprep.subr.mxu0 0.0
    %1580 = vmatpush1.msra.mxu0 %v1306
    %1581 = vmatprep.subr.mxu0 0.0
    %1582 = vmatpush1.msra.mxu0 %v1305
    %1583 = vmatprep.subr.mxu0 0.0
    %1584 = vmatpush1.msra.mxu0 %v1304
    %1585 = vmatprep.subr.mxu0 0.0
    %1586 = vmatpush2.msra.mxu0 %v1335
    %1587 = vmatprep.subr.mxu0 0.0
    %1588 = vmatpush2.msra.mxu0 %v1334
    %1589 = vmatprep.subr.mxu0 0.0
    %1590 = vmatpush2.msra.mxu0 %v1333
    %1591 = vmatprep.subr.mxu0 0.0
    %1592 = vmatpush2.msra.mxu0 %v1332
    %1593 = vmatprep.subr.mxu0 0.0
    %1594 = vmatpush2.msra.mxu0 %v1331
    %1595 = vmatprep.subr.mxu0 0.0
    %1596 = vmatpush2.msra.mxu0 %v1330
    %1597 = vmatprep.subr.mxu0 0.0
    %1598 = vmatpush2.msra.mxu0 %v1329
    %1599 = vmatprep.subr.mxu0 0.0
    %1600 = vmatpush2.msra.mxu0 %v1328
    %1601 = vmatprep.subr.mxu0 0.0
    %1602 = vmatpush2.msra.mxu0 %v1327
    %1603 = vmatprep.subr.mxu0 0.0
    %1604 = vmatpush2.msra.mxu0 %v1326
    %1605 = vmatprep.subr.mxu0 0.0
    %1606 = vmatpush2.msra.mxu0 %v1325
    %1607 = vmatprep.subr.mxu0 0.0
    %1608 = vmatpush2.msra.mxu0 %v1324
    %1609 = vmatprep.subr.mxu0 0.0
    %1610 = vmatpush2.msra.mxu0 %v1323
    %1611 = vmatprep.subr.mxu0 0.0
    %1612 = vmatpush2.msra.mxu0 %v1322
    %1613 = vmatprep.subr.mxu0 0.0
    %1614 = vmatpush2.msra.mxu0 %v1321
    %1615 = vmatprep.subr.mxu0 0.0
    %1616 = vmatpush2.msra.mxu0 %v1320
    %1617 = vmatprep.mubr.f32.mxu0 %v1207
    %1618 = vmatmul.mubr.f32.gmra.mxu0 %v1104
    %v1619 = vpop.f32.mrf.mxu0
    %v1620 = vadd.f32 %v1550, %v1619
    %v1621 = vpop.f32.mrf.mxu0
    %1622 = vdwg.mxu0
    %vm1623 = vcmask 130048
    %1624 = vst.msk [vmem:[#allocation2] sm:$0xff] %vm1623, %v1620
    // Predicated region
    $region22: #{tpu_custom_call.1} parent=1 // pred_check
      _
    $region23: #{tpu_custom_call.1} parent=1 // pred_check_branch
      %1626 = sbr.rel (0) target = $region25
    $region24: #{tpu_custom_call.1} parent=1 // pred_region
      %s1628 = ssub.s32 128, 128
      %1629 = vsyncadd [#allocation3], %s1628
      %s1631 = sshll.u32 [#allocation2], 4
      %s1632 = int_to_ptr.vmem [resolvable:$true] %s1631
      %1634 = dma.vmem_to_hbm [thread:$0]  %s1632, 128, %s5, [#allocation3]
    $region25: #{tpu_custom_call.1} parent=1 // pred_fallthru
      _
    // Predicated region
    $region26: #{tpu_custom_call.1} parent=1 // pred_check
      _
    $region27: #{tpu_custom_call.1} parent=1 // pred_check_branch
      %1636 = sbr.rel (0) target = $region29
    $region28: #{tpu_custom_call.1} parent=1 // pred_region
      %1637 = dma.done [#allocation3], 128
    $region29: #{tpu_custom_call.1} parent=1 // pred_fallthru
      _
    %1638 = vsyncpa [#allocation3], 1

// kernel: tpu_custom_call.1
$region0: #{tpu_custom_call.1}
  #allocation0 [shape = 'u32[]', space=smem, size = 0x4, offset = 0x4, fixed_abs, tag = 'smem constant byte address 0x4 - core index']
  #allocation1 [shape = 'u32[144,128]{1,0:T(1,128)}', space=vmem, size = 0x12000, scoped, tag = 'internal scratch']
  %s0 = inlined_call_operand.vmem [shape: f32[8,32], index: 0, kind: input, shape index: {}]
  %s1 = inlined_call_operand.vmem [shape: f32[32,1024], index: 1, kind: input, shape index: {}]
  %s2 = inlined_call_operand.vmem [shape: f32[1,1024], index: 2, kind: input, shape index: {}]
  %s3 = inlined_call_operand.vmem [shape: f32[1024,16], index: 3, kind: input, shape index: {}]
  %s4 = inlined_call_operand.vmem [shape: f32[1,16], index: 4, kind: input, shape index: {}]
  %s5 = inlined_call_operand.hbm [shape: f32[8,16], index: 5, kind: output, shape index: {}]
  %s6 = sld [smem:[#allocation0]]
  $region30: #{tpu_custom_call.1} parent=0
    _
  %s8 = ssub.s32 1, %s6
  %s9 = scalar_select 0, %s8, %s6
  $region1: #{tpu_custom_call.1} parent=0
    #allocation2 [shape = 'u8[4096]{0}', space=vmem, size = 0x1000, scoped, tag = 'output window, operand 0, single buffered']
    #allocation3 [shape = 's32[1]{0}', space=sflag, size = 0x4, scoped, tag = 'scoped memory for tpu_custom_call.1']
    %10 = vsyncpa [#allocation3], 0
    // Predicated region
    $region2: #{tpu_custom_call.1} parent=1 // pred_check
      _
    $region3: #{tpu_custom_call.1} parent=1 // pred_check_branch
      %12 = sbr.rel (0) target = $region5
    $region4: #{tpu_custom_call.1} parent=1 // pred_region
      _
    $region5: #{tpu_custom_call.1} parent=1 // pred_fallthru
      _
    // Predicated region
    $region6: #{tpu_custom_call.1} parent=1 // pred_check
      _
    $region7: #{tpu_custom_call.1} parent=1 // pred_check_branch
      %14 = sbr.rel (0) target = $region9
    $region8: #{tpu_custom_call.1} parent=1 // pred_region
      _
    $region9: #{tpu_custom_call.1} parent=1 // pred_fallthru
      _
    // Predicated region
    $region10: #{tpu_custom_call.1} parent=1 // pred_check
      _
    $region11: #{tpu_custom_call.1} parent=1 // pred_check_branch
      %16 = sbr.rel (0) target = $region13
    $region12: #{tpu_custom_call.1} parent=1 // pred_region
      _
    $region13: #{tpu_custom_call.1} parent=1 // pred_fallthru
      _
    // Predicated region
    $region14: #{tpu_custom_call.1} parent=1 // pred_check
      _
    $region15: #{tpu_custom_call.1} parent=1 // pred_check_branch
      %18 = sbr.rel (0) target = $region17
    $region16: #{tpu_custom_call.1} parent=1 // pred_region
      _
    $region17: #{tpu_custom_call.1} parent=1 // pred_fallthru
      _
    // Predicated region
    $region18: #{tpu_custom_call.1} parent=1 // pred_check
      _
    $region19: #{tpu_custom_call.1} parent=1 // pred_check_branch
      %20 = sbr.rel (0) target = $region21
    $region20: #{tpu_custom_call.1} parent=1 // pred_region
      _
    $region21: #{tpu_custom_call.1} parent=1 // pred_fallthru
      _
    %v21 = vld [vmem:[%s0] sm:$0xff]
    %v22 = vld [vmem:[%s1] sm:$0xff]
    %v23 = vld [vmem:[%s1 + $0x8] sm:$0xff]
    %v24 = vld [vmem:[%s1 + $0x10] sm:$0xff]
    %v25 = vld [vmem:[%s1 + $0x18] sm:$0xff]
    %v26 = vld [vmem:[%s1 + $0x20] sm:$0xff]
    %v27 = vld [vmem:[%s1 + $0x28] sm:$0xff]
    %v28 = vld [vmem:[%s1 + $0x30] sm:$0xff]
    %v29 = vld [vmem:[%s1 + $0x38] sm:$0xff]
    %v30 = vld [vmem:[%s1 + $0x40] sm:$0xff]
    %v31 = vld [vmem:[%s1 + $0x48] sm:$0xff]
    %v32 = vld [vmem:[%s1 + $0x50] sm:$0xff]
    %v33 = vld [vmem:[%s1 + $0x58] sm:$0xff]
    %v34 = vld [vmem:[%s1 + $0x60] sm:$0xff]
    %v35 = vld [vmem:[%s1 + $0x68] sm:$0xff]
    %v36 = vld [vmem:[%s1 + $0x70] sm:$0xff]
    %v37 = vld [vmem:[%s1 + $0x78] sm:$0xff]
    %v38 = vld [vmem:[%s1 + $0x80] sm:$0xff]
    %v39 = vld [vmem:[%s1 + $0x88] sm:$0xff]
    %v40 = vld [vmem:[%s1 + $0x90] sm:$0xff]
    %v41 = vld [vmem:[%s1 + $0x98] sm:$0xff]
    %v42 = vld [vmem:[%s1 + $0xa0] sm:$0xff]
    %v43 = vld [vmem:[%s1 + $0xa8] sm:$0xff]
    %v44 = vld [vmem:[%s1 + $0xb0] sm:$0xff]
    %v45 = vld [vmem:[%s1 + $0xb8] sm:$0xff]
    %v46 = vld [vmem:[%s1 + $0xc0] sm:$0xff]
    %v47 = vld [vmem:[%s1 + $0xc8] sm:$0xff]
    %v48 = vld [vmem:[%s1 + $0xd0] sm:$0xff]
    %v49 = vld [vmem:[%s1 + $0xd8] sm:$0xff]
    %v50 = vld [vmem:[%s1 + $0xe0] sm:$0xff]
    %v51 = vld [vmem:[%s1 + $0xe8] sm:$0xff]
    %v52 = vld [vmem:[%s1 + $0xf0] sm:$0xff]
    %v53 = vld [vmem:[%s1 + $0xf8] sm:$0xff]
    %v54 = vld [vmem:[%s2] sm:$0xff]
    %v56 = vlaneseq
    %v57 = vshrl.u32 %v56, 7
    %v58 = vsub.s32 0, %v57
    %v59 = vrot.slane %v54, %v58
    %v60 = vlaneseq
    %v61 = vshrl.u32 %v60, 7
    %v62 = vsub.s32 1, %v61
    %v63 = vrot.slane %v54, %v62
    %v64 = vlaneseq
    %v65 = vshrl.u32 %v64, 7
    %v66 = vsub.s32 2, %v65
    %v67 = vrot.slane %v54, %v66
    %v68 = vlaneseq
    %v69 = vshrl.u32 %v68, 7
    %v70 = vsub.s32 3, %v69
    %v71 = vrot.slane %v54, %v70
    %v72 = vlaneseq
    %v73 = vshrl.u32 %v72, 7
    %v74 = vsub.s32 4, %v73
    %v75 = vrot.slane %v54, %v74
    %v76 = vlaneseq
    %v77 = vshrl.u32 %v76, 7
    %v78 = vsub.s32 5, %v77
    %v79 = vrot.slane %v54, %v78
    %v80 = vlaneseq
    %v81 = vshrl.u32 %v80, 7
    %v82 = vsub.s32 6, %v81
    %v83 = vrot.slane %v54, %v82
    %v84 = vlaneseq
    %v85 = vshrl.u32 %v84, 7
    %v86 = vsub.s32 7, %v85
    %v87 = vrot.slane %v54, %v86
    %vm96 = vcmask 261120
    %v98 = vsel %vm96, %v21, 0
    %100 = vmatprep.subr.mxu0 0.0
    %101 = vmatpush1.msra.mxu0 0.0
    %102 = vmatprep.subr.mxu0 0.0
    %103 = vmatpush1.msra.mxu0 0.0
    %104 = vmatprep.subr.mxu0 0.0
    %105 = vmatpush1.msra.mxu0 0.0
    %106 = vmatprep.subr.mxu0 0.0
    %107 = vmatpush1.msra.mxu0 0.0
    %108 = vmatprep.subr.mxu0 0.0
    %109 = vmatpush1.msra.mxu0 0.0
    %110 = vmatprep.subr.mxu0 0.0
    %111 = vmatpush1.msra.mxu0 0.0
    %112 = vmatprep.subr.mxu0 0.0
    %113 = vmatpush1.msra.mxu0 0.0
    %114 = vmatprep.subr.mxu0 0.0
    %115 = vmatpush1.msra.mxu0 0.0
    %116 = vmatprep.subr.mxu0 0.0
    %117 = vmatpush1.msra.mxu0 0.0
    %118 = vmatprep.subr.mxu0 0.0
    %119 = vmatpush1.msra.mxu0 0.0
    %120 = vmatprep.subr.mxu0 0.0
    %121 = vmatpush1.msra.mxu0 0.0
    %122 = vmatprep.subr.mxu0 0.0
    %123 = vmatpush1.msra.mxu0 0.0
    %124 = vmatprep.subr.mxu0 %v47
    %125 = vmatpush1.msra.mxu0 %v46
    %126 = vmatprep.subr.mxu0 %v39
    %127 = vmatpush1.msra.mxu0 %v38
    %128 = vmatprep.subr.mxu0 %v31
    %129 = vmatpush1.msra.mxu0 %v30
    %130 = vmatprep.subr.mxu0 %v23
    %131 = vmatpush1.msra.mxu0 %v22
    %132 = vmatprep.subr.mxu0 0.0
    %133 = vmatpush2.msra.mxu0 0.0
    %134 = vmatprep.subr.mxu0 0.0
    %135 = vmatpush2.msra.mxu0 0.0
    %136 = vmatprep.subr.mxu0 0.0
    %137 = vmatpush2.msra.mxu0 0.0
    %138 = vmatprep.subr.mxu0 0.0
    %139 = vmatpush2.msra.mxu0 0.0
    %140 = vmatprep.subr.mxu0 0.0
    %141 = vmatpush2.msra.mxu0 0.0
    %142 = vmatprep.subr.mxu0 0.0
    %143 = vmatpush2.msra.mxu0 0.0
    %144 = vmatprep.subr.mxu0 0.0
    %145 = vmatpush2.msra.mxu0 0.0
    %146 = vmatprep.subr.mxu0 0.0
    %147 = vmatpush2.msra.mxu0 0.0
    %148 = vmatprep.subr.mxu0 0.0
    %149 = vmatpush2.msra.mxu0 0.0
    %150 = vmatprep.subr.mxu0 0.0
    %151 = vmatpush2.msra.mxu0 0.0
    %152 = vmatprep.subr.mxu0 0.0
    %153 = vmatpush2.msra.mxu0 0.0
    %154 = vmatprep.subr.mxu0 0.0
    %155 = vmatpush2.msra.mxu0 0.0
    %156 = vmatprep.subr.mxu0 0.0
    %157 = vmatpush2.msra.mxu0 0.0
    %158 = vmatprep.subr.mxu0 0.0
    %159 = vmatpush2.msra.mxu0 0.0
    %160 = vmatprep.subr.mxu0 0.0
    %161 = vmatpush2.msra.mxu0 0.0
    %162 = vmatprep.subr.mxu0 0.0
    %163 = vmatpush2.msra.mxu0 0.0
    %164 = vmatprep.mubr.f32.mxu0 0.0
    %165 = vmatmul.mubr.f32.gmra.mxu0 %v98
    %v166 = vpop.f32.mrf.mxu0
    %v167 = vadd.f32 %v59, %v166
    %v168 = vpop.f32.mrf.mxu0
    %v169 = vadd.f32 %v63, %v168
    %170 = vdwg.mxu0
    %171 = vmatprep.subr.mxu0 0.0
    %172 = vmatpush1.msra.mxu0 0.0
    %173 = vmatprep.subr.mxu0 0.0
    %174 = vmatpush1.msra.mxu0 0.0
    %175 = vmatprep.subr.mxu0 0.0
    %176 = vmatpush1.msra.mxu0 0.0
    %177 = vmatprep.subr.mxu0 0.0
    %178 = vmatpush1.msra.mxu0 0.0
    %179 = vmatprep.subr.mxu0 0.0
    %180 = vmatpush1.msra.mxu0 0.0
    %181 = vmatprep.subr.mxu0 0.0
    %182 = vmatpush1.msra.mxu0 0.0
    %183 = vmatprep.subr.mxu0 0.0
    %184 = vmatpush1.msra.mxu0 0.0
    %185 = vmatprep.subr.mxu0 0.0
    %186 = vmatpush1.msra.mxu0 0.0
    %187 = vmatprep.subr.mxu0 0.0
    %188 = vmatpush1.msra.mxu0 0.0
    %189 = vmatprep.subr.mxu0 0.0
    %190 = vmatpush1.msra.mxu0 0.0
    %191 = vmatprep.subr.mxu0 0.0
    %192 = vmatpush1.msra.mxu0 0.0
    %193 = vmatprep.subr.mxu0 0.0
    %194 = vmatpush1.msra.mxu0 0.0
    %195 = vmatprep.subr.mxu0 %v49
    %196 = vmatpush1.msra.mxu0 %v48
    %197 = vmatprep.subr.mxu0 %v41
    %198 = vmatpush1.msra.mxu0 %v40
    %199 = vmatprep.subr.mxu0 %v33
    %200 = vmatpush1.msra.mxu0 %v32
    %201 = vmatprep.subr.mxu0 %v25
    %202 = vmatpush1.msra.mxu0 %v24
    %203 = vmatprep.subr.mxu0 0.0
    %204 = vmatpush2.msra.mxu0 0.0
    %205 = vmatprep.subr.mxu0 0.0
    %206 = vmatpush2.msra.mxu0 0.0
    %207 = vmatprep.subr.mxu0 0.0
    %208 = vmatpush2.msra.mxu0 0.0
    %209 = vmatprep.subr.mxu0 0.0
    %210 = vmatpush2.msra.mxu0 0.0
    %211 = vmatprep.subr.mxu0 0.0
    %212 = vmatpush2.msra.mxu0 0.0
    %213 = vmatprep.subr.mxu0 0.0
    %214 = vmatpush2.msra.mxu0 0.0
    %215 = vmatprep.subr.mxu0 0.0
    %216 = vmatpush2.msra.mxu0 0.0
    %217 = vmatprep.subr.mxu0 0.0
    %218 = vmatpush2.msra.mxu0 0.0
    %219 = vmatprep.subr.mxu0 0.0
    %220 = vmatpush2.msra.mxu0 0.0
    %221 = vmatprep.subr.mxu0 0.0
    %222 = vmatpush2.msra.mxu0 0.0
    %223 = vmatprep.subr.mxu0 0.0
    %224 = vmatpush2.msra.mxu0 0.0
    %225 = vmatprep.subr.mxu0 0.0
    %226 = vmatpush2.msra.mxu0 0.0
    %227 = vmatprep.subr.mxu0 0.0
    %228 = vmatpush2.msra.mxu0 0.0
    %229 = vmatprep.subr.mxu0 0.0
    %230 = vmatpush2.msra.mxu0 0.0
    %231 = vmatprep.subr.mxu0 0.0
    %232 = vmatpush2.msra.mxu0 0.0
    %233 = vmatprep.subr.mxu0 0.0
    %234 = vmatpush2.msra.mxu0 0.0
    %235 = vmatprep.mubr.f32.mxu0 0.0
    %236 = vmatmul.mubr.f32.gmra.mxu0 %v98
    %v237 = vpop.f32.mrf.mxu0
    %v238 = vadd.f32 %v67, %v237
    %v239 = vpop.f32.mrf.mxu0
    %v240 = vadd.f32 %v71, %v239
    %241 = vdwg.mxu0
    %242 = vmatprep.subr.mxu0 0.0
    %243 = vmatpush1.msra.mxu0 0.0
    %244 = vmatprep.subr.mxu0 0.0
    %245 = vmatpush1.msra.mxu0 0.0
    %246 = vmatprep.subr.mxu0 0.0
    %247 = vmatpush1.msra.mxu0 0.0
    %248 = vmatprep.subr.mxu0 0.0
    %249 = vmatpush1.msra.mxu0 0.0
    %250 = vmatprep.subr.mxu0 0.0
    %251 = vmatpush1.msra.mxu0 0.0
    %252 = vmatprep.subr.mxu0 0.0
    %253 = vmatpush1.msra.mxu0 0.0
    %254 = vmatprep.subr.mxu0 0.0
    %255 = vmatpush1.msra.mxu0 0.0
    %256 = vmatprep.subr.mxu0 0.0
    %257 = vmatpush1.msra.mxu0 0.0
    %258 = vmatprep.subr.mxu0 0.0
    %259 = vmatpush1.msra.mxu0 0.0
    %260 = vmatprep.subr.mxu0 0.0
    %261 = vmatpush1.msra.mxu0 0.0
    %262 = vmatprep.subr.mxu0 0.0
    %263 = vmatpush1.msra.mxu0 0.0
    %264 = vmatprep.subr.mxu0 0.0
    %265 = vmatpush1.msra.mxu0 0.0
    %266 = vmatprep.subr.mxu0 %v51
    %267 = vmatpush1.msra.mxu0 %v50
    %268 = vmatprep.subr.mxu0 %v43
    %269 = vmatpush1.msra.mxu0 %v42
    %270 = vmatprep.subr.mxu0 %v35
    %271 = vmatpush1.msra.mxu0 %v34
    %272 = vmatprep.subr.mxu0 %v27
    %273 = vmatpush1.msra.mxu0 %v26
    %274 = vmatprep.subr.mxu0 0.0
    %275 = vmatpush2.msra.mxu0 0.0
    %276 = vmatprep.subr.mxu0 0.0
    %277 = vmatpush2.msra.mxu0 0.0
    %278 = vmatprep.subr.mxu0 0.0
    %279 = vmatpush2.msra.mxu0 0.0
    %280 = vmatprep.subr.mxu0 0.0
    %281 = vmatpush2.msra.mxu0 0.0
    %282 = vmatprep.subr.mxu0 0.0
    %283 = vmatpush2.msra.mxu0 0.0
    %284 = vmatprep.subr.mxu0 0.0
    %285 = vmatpush2.msra.mxu0 0.0
    %286 = vmatprep.subr.mxu0 0.0
    %287 = vmatpush2.msra.mxu0 0.0
    %288 = vmatprep.subr.mxu0 0.0
    %289 = vmatpush2.msra.mxu0 0.0
    %290 = vmatprep.subr.mxu0 0.0
    %291 = vmatpush2.msra.mxu0 0.0
    %292 = vmatprep.subr.mxu0 0.0
    %293 = vmatpush2.msra.mxu0 0.0
    %294 = vmatprep.subr.mxu0 0.0
    %295 = vmatpush2.msra.mxu0 0.0
    %296 = vmatprep.subr.mxu0 0.0
    %297 = vmatpush2.msra.mxu0 0.0
    %298 = vmatprep.subr.mxu0 0.0
    %299 = vmatpush2.msra.mxu0 0.0
    %300 = vmatprep.subr.mxu0 0.0
    %301 = vmatpush2.msra.mxu0 0.0
    %302 = vmatprep.subr.mxu0 0.0
    %303 = vmatpush2.msra.mxu0 0.0
    %304 = vmatprep.subr.mxu0 0.0
    %305 = vmatpush2.msra.mxu0 0.0
    %306 = vmatprep.mubr.f32.mxu0 0.0
    %307 = vmatmul.mubr.f32.gmra.mxu0 %v98
    %v308 = vpop.f32.mrf.mxu0
    %v309 = vadd.f32 %v75, %v308
    %v310 = vpop.f32.mrf.mxu0
    %v311 = vadd.f32 %v79, %v310
    %312 = vdwg.mxu0
    %313 = vmatprep.subr.mxu0 0.0
    %314 = vmatpush1.msra.mxu0 0.0
    %315 = vmatprep.subr.mxu0 0.0
    %316 = vmatpush1.msra.mxu0 0.0
    %317 = vmatprep.subr.mxu0 0.0
    %318 = vmatpush1.msra.mxu0 0.0
    %319 = vmatprep.subr.mxu0 0.0
    %320 = vmatpush1.msra.mxu0 0.0
    %321 = vmatprep.subr.mxu0 0.0
    %322 = vmatpush1.msra.mxu0 0.0
    %323 = vmatprep.subr.mxu0 0.0
    %324 = vmatpush1.msra.mxu0 0.0
    %325 = vmatprep.subr.mxu0 0.0
    %326 = vmatpush1.msra.mxu0 0.0
    %327 = vmatprep.subr.mxu0 0.0
    %328 = vmatpush1.msra.mxu0 0.0
    %329 = vmatprep.subr.mxu0 0.0
    %330 = vmatpush1.msra.mxu0 0.0
    %331 = vmatprep.subr.mxu0 0.0
    %332 = vmatpush1.msra.mxu0 0.0
    %333 = vmatprep.subr.mxu0 0.0
    %334 = vmatpush1.msra.mxu0 0.0
    %335 = vmatprep.subr.mxu0 0.0
    %336 = vmatpush1.msra.mxu0 0.0
    %337 = vmatprep.subr.mxu0 %v53
    %338 = vmatpush1.msra.mxu0 %v52
    %339 = vmatprep.subr.mxu0 %v45
    %340 = vmatpush1.msra.mxu0 %v44
    %341 = vmatprep.subr.mxu0 %v37
    %342 = vmatpush1.msra.mxu0 %v36
    %343 = vmatprep.subr.mxu0 %v29
    %344 = vmatpush1.msra.mxu0 %v28
    %345 = vmatprep.subr.mxu0 0.0
    %346 = vmatpush2.msra.mxu0 0.0
    %347 = vmatprep.subr.mxu0 0.0
    %348 = vmatpush2.msra.mxu0 0.0
    %349 = vmatprep.subr.mxu0 0.0
    %350 = vmatpush2.msra.mxu0 0.0
    %351 = vmatprep.subr.mxu0 0.0
    %352 = vmatpush2.msra.mxu0 0.0
    %353 = vmatprep.subr.mxu0 0.0
    %354 = vmatpush2.msra.mxu0 0.0
    %355 = vmatprep.subr.mxu0 0.0
    %356 = vmatpush2.msra.mxu0 0.0
    %357 = vmatprep.subr.mxu0 0.0
    %358 = vmatpush2.msra.mxu0 0.0
    %359 = vmatprep.subr.mxu0 0.0
    %360 = vmatpush2.msra.mxu0 0.0
    %361 = vmatprep.subr.mxu0 0.0
    %362 = vmatpush2.msra.mxu0 0.0
    %363 = vmatprep.subr.mxu0 0.0
    %364 = vmatpush2.msra.mxu0 0.0
    %365 = vmatprep.subr.mxu0 0.0
    %366 = vmatpush2.msra.mxu0 0.0
    %367 = vmatprep.subr.mxu0 0.0
    %368 = vmatpush2.msra.mxu0 0.0
    %369 = vmatprep.subr.mxu0 0.0
    %370 = vmatpush2.msra.mxu0 0.0
    %371 = vmatprep.subr.mxu0 0.0
    %372 = vmatpush2.msra.mxu0 0.0
    %373 = vmatprep.subr.mxu0 0.0
    %374 = vmatpush2.msra.mxu0 0.0
    %375 = vmatprep.subr.mxu0 0.0
    %376 = vmatpush2.msra.mxu0 0.0
    %377 = vmatprep.mubr.f32.mxu0 0.0
    %378 = vmatmul.mubr.f32.gmra.mxu0 %v98
    %v379 = vpop.f32.mrf.mxu0
    %v380 = vadd.f32 %v83, %v379
    %v381 = vpop.f32.mrf.mxu0
    %v382 = vadd.f32 %v87, %v381
    %383 = vdwg.mxu0
    %v384 = vand.u32 2147483647, %v167
    %vm385 = vcmp.le.f32.partialorder %v384, 0.7853982
    %vm386 = vcmp.lt.s32.totalorder %v167, 0
    %v387 = vand.u32 %v167, 2139095040
    %v388 = vshrl.u32 %v387, 23
    %v389 = vsub.s32 %v388, 127
    %v390 = vand.u32 2147483647, %v167
    %v391 = vand.u32 %v390, 8388607
    %v392 = vor.u32 %v391, 8388608
    %v393 = vsub.s32 0, %v392
    %v394 = vadd.s32 %v389, 1
    %vm395 = vcmp.gt.s32.totalorder %v394, 0
    %v396 = vsel %vm395, %v394, 0
    %v397 = vshrl.u32 %v396, 5
    %v398 = vand.u32 %v396, 31
    %v399 = vsub.s32 32, %v398
    %v400 = vshrl.u32 683565275, %v399
    %v401 = vshll.u32 683565275, %v398
    %v402 = vshrl.u32 2475754826, %v399
    %v403 = vor.u32 %v401, %v402
    %v404 = vshll.u32 2475754826, %v398
    %v405 = vshrl.u32 2131351028, %v399
    %v406 = vor.u32 %v404, %v405
    %v407 = vshll.u32 2131351028, %v398
    %v408 = vshrl.u32 2102212464, %v399
    %v409 = vor.u32 %v407, %v408
    %v410 = vshll.u32 2102212464, %v398
    %v411 = vshrl.u32 920167782, %v399
    %v412 = vor.u32 %v410, %v411
    %v413 = vshll.u32 920167782, %v398
    %v414 = vshrl.u32 1326507024, %v399
    %v415 = vor.u32 %v413, %v414
    %vm416 = vcmp.lt.s32.totalorder %v397, 1
    %vm417 = vcmp.lt.s32.totalorder %v397, 2
    %vm418 = vcmp.lt.s32.totalorder %v397, 3
    %vm419 = vcmp.lt.s32.totalorder %v397, 4
    %v420 = vsel %vm416, %v400, %v403
    %v421 = vsel %vm419, %v409, 2102212464
    %v422 = vsel %vm418, %v406, %v421
    %v423 = vsel %vm417, %v420, %v422
    %v424 = vsel %vm416, %v403, %v406
    %v425 = vsel %vm419, %v412, 920167782
    %v426 = vsel %vm418, %v409, %v425
    %v427 = vsel %vm417, %v424, %v426
    %v428 = vsel %vm416, %v406, %v409
    %v429 = vsel %vm419, %v415, 1326507024
    %v430 = vsel %vm418, %v412, %v429
    %v431 = vsel %vm417, %v428, %v430
    %v432 = vshll.u32 %v392, 8
    %v433 = vmul.u32.u64.compose %v432, %v431
    %v434 = vextract.low.u32 %v433
    %v435 = vextract.high.u32 %v433
    %v436 = vmul.u32.u64.compose %v432, %v427
    %v437 = vextract.low.u32 %v436
    %v438 = vextract.high.u32 %v436
    %v439 = vmul.u32 %v432, %v423
    %v440 = vadd.s32 %v435, %v437
    %vm441 = vc.u32 %v435, %v437
    %v442 = vadd.s32 %v438, 1
    %v443 = vsel %vm441, %v442, %v438
    %v444 = vadd.s32 %v439, %v443
    %v445 = vadd.s32 %v444, 536870912
    %v446 = vshrl.u32 %v445, 30
    %v447 = vshll.u32 %v446, 30
    %v448 = vsub.s32 %v444, %v447
    %vm449 = vcmp.lt.s32.totalorder %v448, 0
    %v450 = vsub.s32 0, %v448
    %v451 = vsel %vm449, %v450, %v448
    %v452 = vclz %v451
    %v453 = vsub.s32 %v452, 2
    %vm454 = vcmp.gt.s32.totalorder 0, %v453
    %v455 = vsel %vm454, 0, %v453
    %v456 = vsub.s32 32, %v455
    %v457 = vshll.u32 %v448, %v455
    %v458 = vshrl.u32 %v440, %v456
    %v459 = vor.u32 %v457, %v458
    %v460 = vsub.s32 4294967266, %v455
    %v461 = vadd.s32 %v460, 127
    %v462 = vshll.u32 %v461, 23
    %v463 = vor.u32 4788187, %v462
    %v464 = vand.u32 2147483647, %v463
    %v466 = vcvt.s32.f32 %v459
    %v467 = vmul.f32 %v466, %v464
    %v468 = vxor.u32 %v467, 2147483648
    %v469 = vsel %vm386, %v468, %v467
    %v470 = vsub.s32 4, %v446
    %v471 = vsel %vm386, %v470, %v446
    %v472 = vsel %vm385, %v167, %v469
    %v473 = vsel %vm385, 0, %v471
    %v474 = vcosq.f32.pop %v472
    %v475 = vsinq.f32.pop %v472
    %vm476 = vweird.f32 %v167
    %v477 = vand.u32 %v473, 3
    %vm478 = vcmp.lt.s32.totalorder %v477, 2
    %vm479 = vcmp.eq.s32.totalorder %v477, 0
    %v480 = vxor.u32 %v475, 2147483648
    %v481 = vsel %vm479, %v474, %v480
    %vm482 = vcmp.eq.s32.totalorder %v477, 2
    %v483 = vxor.u32 %v474, 2147483648
    %v484 = vsel %vm482, %v483, %v475
    %v485 = vsel %vm478, %v481, %v484
    %v486 = vsel %vm476, nan, %v485
    %v487 = vand.u32 2147483647, %v169
    %vm488 = vcmp.le.f32.partialorder %v487, 0.7853982
    %vm489 = vcmp.lt.s32.totalorder %v169, 0
    %v490 = vand.u32 %v169, 2139095040
    %v491 = vshrl.u32 %v490, 23
    %v492 = vsub.s32 %v491, 127
    %v493 = vand.u32 2147483647, %v169
    %v494 = vand.u32 %v493, 8388607
    %v495 = vor.u32 %v494, 8388608
    %v496 = vsub.s32 0, %v495
    %v497 = vadd.s32 %v492, 1
    %vm498 = vcmp.gt.s32.totalorder %v497, 0
    %v499 = vsel %vm498, %v497, 0
    %v500 = vshrl.u32 %v499, 5
    %v501 = vand.u32 %v499, 31
    %v502 = vsub.s32 32, %v501
    %v503 = vshrl.u32 683565275, %v502
    %v504 = vshll.u32 683565275, %v501
    %v505 = vshrl.u32 2475754826, %v502
    %v506 = vor.u32 %v504, %v505
    %v507 = vshll.u32 2475754826, %v501
    %v508 = vshrl.u32 2131351028, %v502
    %v509 = vor.u32 %v507, %v508
    %v510 = vshll.u32 2131351028, %v501
    %v511 = vshrl.u32 2102212464, %v502
    %v512 = vor.u32 %v510, %v511
    %v513 = vshll.u32 2102212464, %v501
    %v514 = vshrl.u32 920167782, %v502
    %v515 = vor.u32 %v513, %v514
    %v516 = vshll.u32 920167782, %v501
    %v517 = vshrl.u32 1326507024, %v502
    %v518 = vor.u32 %v516, %v517
    %vm519 = vcmp.lt.s32.totalorder %v500, 1
    %vm520 = vcmp.lt.s32.totalorder %v500, 2
    %vm521 = vcmp.lt.s32.totalorder %v500, 3
    %vm522 = vcmp.lt.s32.totalorder %v500, 4
    %v523 = vsel %vm519, %v503, %v506
    %v524 = vsel %vm522, %v512, 2102212464
    %v525 = vsel %vm521, %v509, %v524
    %v526 = vsel %vm520, %v523, %v525
    %v527 = vsel %vm519, %v506, %v509
    %v528 = vsel %vm522, %v515, 920167782
    %v529 = vsel %vm521, %v512, %v528
    %v530 = vsel %vm520, %v527, %v529
    %v531 = vsel %vm519, %v509, %v512
    %v532 = vsel %vm522, %v518, 1326507024
    %v533 = vsel %vm521, %v515, %v532
    %v534 = vsel %vm520, %v531, %v533
    %v535 = vshll.u32 %v495, 8
    %v536 = vmul.u32.u64.compose %v535, %v534
    %v537 = vextract.low.u32 %v536
    %v538 = vextract.high.u32 %v536
    %v539 = vmul.u32.u64.compose %v535, %v530
    %v540 = vextract.low.u32 %v539
    %v541 = vextract.high.u32 %v539
    %v542 = vmul.u32 %v535, %v526
    %v543 = vadd.s32 %v538, %v540
    %vm544 = vc.u32 %v538, %v540
    %v545 = vadd.s32 %v541, 1
    %v546 = vsel %vm544, %v545, %v541
    %v547 = vadd.s32 %v542, %v546
    %v548 = vadd.s32 %v547, 536870912
    %v549 = vshrl.u32 %v548, 30
    %v550 = vshll.u32 %v549, 30
    %v551 = vsub.s32 %v547, %v550
    %vm552 = vcmp.lt.s32.totalorder %v551, 0
    %v553 = vsub.s32 0, %v551
    %v554 = vsel %vm552, %v553, %v551
    %v555 = vclz %v554
    %v556 = vsub.s32 %v555, 2
    %vm557 = vcmp.gt.s32.totalorder 0, %v556
    %v558 = vsel %vm557, 0, %v556
    %v559 = vsub.s32 32, %v558
    %v560 = vshll.u32 %v551, %v558
    %v561 = vshrl.u32 %v543, %v559
    %v562 = vor.u32 %v560, %v561
    %v563 = vsub.s32 4294967266, %v558
    %v564 = vadd.s32 %v563, 127
    %v565 = vshll.u32 %v564, 23
    %v566 = vor.u32 4788187, %v565
    %v567 = vand.u32 2147483647, %v566
    %v569 = vcvt.s32.f32 %v562
    %v570 = vmul.f32 %v569, %v567
    %v571 = vxor.u32 %v570, 2147483648
    %v572 = vsel %vm489, %v571, %v570
    %v573 = vsub.s32 4, %v549
    %v574 = vsel %vm489, %v573, %v549
    %v575 = vsel %vm488, %v169, %v572
    %v576 = vsel %vm488, 0, %v574
    %v577 = vcosq.f32.pop %v575
    %v578 = vsinq.f32.pop %v575
    %vm579 = vweird.f32 %v169
    %v580 = vand.u32 %v576, 3
    %vm581 = vcmp.lt.s32.totalorder %v580, 2
    %vm582 = vcmp.eq.s32.totalorder %v580, 0
    %v583 = vxor.u32 %v578, 2147483648
    %v584 = vsel %vm582, %v577, %v583
    %vm585 = vcmp.eq.s32.totalorder %v580, 2
    %v586 = vxor.u32 %v577, 2147483648
    %v587 = vsel %vm585, %v586, %v578
    %v588 = vsel %vm581, %v584, %v587
    %v589 = vsel %vm579, nan, %v588
    %v590 = vand.u32 2147483647, %v238
    %vm591 = vcmp.le.f32.partialorder %v590, 0.7853982
    %vm592 = vcmp.lt.s32.totalorder %v238, 0
    %v593 = vand.u32 %v238, 2139095040
    %v594 = vshrl.u32 %v593, 23
    %v595 = vsub.s32 %v594, 127
    %v596 = vand.u32 2147483647, %v238
    %v597 = vand.u32 %v596, 8388607
    %v598 = vor.u32 %v597, 8388608
    %v599 = vsub.s32 0, %v598
    %v600 = vadd.s32 %v595, 1
    %vm601 = vcmp.gt.s32.totalorder %v600, 0
    %v602 = vsel %vm601, %v600, 0
    %v603 = vshrl.u32 %v602, 5
    %v604 = vand.u32 %v602, 31
    %v605 = vsub.s32 32, %v604
    %v606 = vshrl.u32 683565275, %v605
    %v607 = vshll.u32 683565275, %v604
    %v608 = vshrl.u32 2475754826, %v605
    %v609 = vor.u32 %v607, %v608
    %v610 = vshll.u32 2475754826, %v604
    %v611 = vshrl.u32 2131351028, %v605
    %v612 = vor.u32 %v610, %v611
    %v613 = vshll.u32 2131351028, %v604
    %v614 = vshrl.u32 2102212464, %v605
    %v615 = vor.u32 %v613, %v614
    %v616 = vshll.u32 2102212464, %v604
    %v617 = vshrl.u32 920167782, %v605
    %v618 = vor.u32 %v616, %v617
    %v619 = vshll.u32 920167782, %v604
    %v620 = vshrl.u32 1326507024, %v605
    %v621 = vor.u32 %v619, %v620
    %vm622 = vcmp.lt.s32.totalorder %v603, 1
    %vm623 = vcmp.lt.s32.totalorder %v603, 2
    %vm624 = vcmp.lt.s32.totalorder %v603, 3
    %vm625 = vcmp.lt.s32.totalorder %v603, 4
    %v626 = vsel %vm622, %v606, %v609
    %v627 = vsel %vm625, %v615, 2102212464
    %v628 = vsel %vm624, %v612, %v627
    %v629 = vsel %vm623, %v626, %v628
    %v630 = vsel %vm622, %v609, %v612
    %v631 = vsel %vm625, %v618, 920167782
    %v632 = vsel %vm624, %v615, %v631
    %v633 = vsel %vm623, %v630, %v632
    %v634 = vsel %vm622, %v612, %v615
    %v635 = vsel %vm625, %v621, 1326507024
    %v636 = vsel %vm624, %v618, %v635
    %v637 = vsel %vm623, %v634, %v636
    %v638 = vshll.u32 %v598, 8
    %v639 = vmul.u32.u64.compose %v638, %v637
    %v640 = vextract.low.u32 %v639
    %v641 = vextract.high.u32 %v639
    %v642 = vmul.u32.u64.compose %v638, %v633
    %v643 = vextract.low.u32 %v642
    %v644 = vextract.high.u32 %v642
    %v645 = vmul.u32 %v638, %v629
    %v646 = vadd.s32 %v641, %v643
    %vm647 = vc.u32 %v641, %v643
    %v648 = vadd.s32 %v644, 1
    %v649 = vsel %vm647, %v648, %v644
    %v650 = vadd.s32 %v645, %v649
    %v651 = vadd.s32 %v650, 536870912
    %v652 = vshrl.u32 %v651, 30
    %v653 = vshll.u32 %v652, 30
    %v654 = vsub.s32 %v650, %v653
    %vm655 = vcmp.lt.s32.totalorder %v654, 0
    %v656 = vsub.s32 0, %v654
    %v657 = vsel %vm655, %v656, %v654
    %v658 = vclz %v657
    %v659 = vsub.s32 %v658, 2
    %vm660 = vcmp.gt.s32.totalorder 0, %v659
    %v661 = vsel %vm660, 0, %v659
    %v662 = vsub.s32 32, %v661
    %v663 = vshll.u32 %v654, %v661
    %v664 = vshrl.u32 %v646, %v662
    %v665 = vor.u32 %v663, %v664
    %v666 = vsub.s32 4294967266, %v661
    %v667 = vadd.s32 %v666, 127
    %v668 = vshll.u32 %v667, 23
    %v669 = vor.u32 4788187, %v668
    %v670 = vand.u32 2147483647, %v669
    %v672 = vcvt.s32.f32 %v665
    %v673 = vmul.f32 %v672, %v670
    %v674 = vxor.u32 %v673, 2147483648
    %v675 = vsel %vm592, %v674, %v673
    %v676 = vsub.s32 4, %v652
    %v677 = vsel %vm592, %v676, %v652
    %v678 = vsel %vm591, %v238, %v675
    %v679 = vsel %vm591, 0, %v677
    %v680 = vcosq.f32.pop %v678
    %v681 = vsinq.f32.pop %v678
    %vm682 = vweird.f32 %v238
    %v683 = vand.u32 %v679, 3
    %vm684 = vcmp.lt.s32.totalorder %v683, 2
    %vm685 = vcmp.eq.s32.totalorder %v683, 0
    %v686 = vxor.u32 %v681, 2147483648
    %v687 = vsel %vm685, %v680, %v686
    %vm688 = vcmp.eq.s32.totalorder %v683, 2
    %v689 = vxor.u32 %v680, 2147483648
    %v690 = vsel %vm688, %v689, %v681
    %v691 = vsel %vm684, %v687, %v690
    %v692 = vsel %vm682, nan, %v691
    %v693 = vand.u32 2147483647, %v240
    %vm694 = vcmp.le.f32.partialorder %v693, 0.7853982
    %vm695 = vcmp.lt.s32.totalorder %v240, 0
    %v696 = vand.u32 %v240, 2139095040
    %v697 = vshrl.u32 %v696, 23
    %v698 = vsub.s32 %v697, 127
    %v699 = vand.u32 2147483647, %v240
    %v700 = vand.u32 %v699, 8388607
    %v701 = vor.u32 %v700, 8388608
    %v702 = vsub.s32 0, %v701
    %v703 = vadd.s32 %v698, 1
    %vm704 = vcmp.gt.s32.totalorder %v703, 0
    %v705 = vsel %vm704, %v703, 0
    %v706 = vshrl.u32 %v705, 5
    %v707 = vand.u32 %v705, 31
    %v708 = vsub.s32 32, %v707
    %v709 = vshrl.u32 683565275, %v708
    %v710 = vshll.u32 683565275, %v707
    %v711 = vshrl.u32 2475754826, %v708
    %v712 = vor.u32 %v710, %v711
    %v713 = vshll.u32 2475754826, %v707
    %v714 = vshrl.u32 2131351028, %v708
    %v715 = vor.u32 %v713, %v714
    %v716 = vshll.u32 2131351028, %v707
    %v717 = vshrl.u32 2102212464, %v708
    %v718 = vor.u32 %v716, %v717
    %v719 = vshll.u32 2102212464, %v707
    %v720 = vshrl.u32 920167782, %v708
    %v721 = vor.u32 %v719, %v720
    %v722 = vshll.u32 920167782, %v707
    %v723 = vshrl.u32 1326507024, %v708
    %v724 = vor.u32 %v722, %v723
    %vm725 = vcmp.lt.s32.totalorder %v706, 1
    %vm726 = vcmp.lt.s32.totalorder %v706, 2
    %vm727 = vcmp.lt.s32.totalorder %v706, 3
    %vm728 = vcmp.lt.s32.totalorder %v706, 4
    %v729 = vsel %vm725, %v709, %v712
    %v730 = vsel %vm728, %v718, 2102212464
    %v731 = vsel %vm727, %v715, %v730
    %v732 = vsel %vm726, %v729, %v731
    %v733 = vsel %vm725, %v712, %v715
    %v734 = vsel %vm728, %v721, 920167782
    %v735 = vsel %vm727, %v718, %v734
    %v736 = vsel %vm726, %v733, %v735
    %v737 = vsel %vm725, %v715, %v718
    %v738 = vsel %vm728, %v724, 1326507024
    %v739 = vsel %vm727, %v721, %v738
    %v740 = vsel %vm726, %v737, %v739
    %v741 = vshll.u32 %v701, 8
    %v742 = vmul.u32.u64.compose %v741, %v740
    %v743 = vextract.low.u32 %v742
    %v744 = vextract.high.u32 %v742
    %v745 = vmul.u32.u64.compose %v741, %v736
    %v746 = vextract.low.u32 %v745
    %v747 = vextract.high.u32 %v745
    %v748 = vmul.u32 %v741, %v732
    %v749 = vadd.s32 %v744, %v746
    %vm750 = vc.u32 %v744, %v746
    %v751 = vadd.s32 %v747, 1
    %v752 = vsel %vm750, %v751, %v747
    %v753 = vadd.s32 %v748, %v752
    %v754 = vadd.s32 %v753, 536870912
    %v755 = vshrl.u32 %v754, 30
    %v756 = vshll.u32 %v755, 30
    %v757 = vsub.s32 %v753, %v756
    %vm758 = vcmp.lt.s32.totalorder %v757, 0
    %v759 = vsub.s32 0, %v757
    %v760 = vsel %vm758, %v759, %v757
    %v761 = vclz %v760
    %v762 = vsub.s32 %v761, 2
    %vm763 = vcmp.gt.s32.totalorder 0, %v762
    %v764 = vsel %vm763, 0, %v762
    %v765 = vsub.s32 32, %v764
    %v766 = vshll.u32 %v757, %v764
    %v767 = vshrl.u32 %v749, %v765
    %v768 = vor.u32 %v766, %v767
    %v769 = vsub.s32 4294967266, %v764
    %v770 = vadd.s32 %v769, 127
    %v771 = vshll.u32 %v770, 23
    %v772 = vor.u32 4788187, %v771
    %v773 = vand.u32 2147483647, %v772
    %v775 = vcvt.s32.f32 %v768
    %v776 = vmul.f32 %v775, %v773
    %v777 = vxor.u32 %v776, 2147483648
    %v778 = vsel %vm695, %v777, %v776
    %v779 = vsub.s32 4, %v755
    %v780 = vsel %vm695, %v779, %v755
    %v781 = vsel %vm694, %v240, %v778
    %v782 = vsel %vm694, 0, %v780
    %v783 = vcosq.f32.pop %v781
    %v784 = vsinq.f32.pop %v781
    %vm785 = vweird.f32 %v240
    %v786 = vand.u32 %v782, 3
    %vm787 = vcmp.lt.s32.totalorder %v786, 2
    %vm788 = vcmp.eq.s32.totalorder %v786, 0
    %v789 = vxor.u32 %v784, 2147483648
    %v790 = vsel %vm788, %v783, %v789
    %vm791 = vcmp.eq.s32.totalorder %v786, 2
    %v792 = vxor.u32 %v783, 2147483648
    %v793 = vsel %vm791, %v792, %v784
    %v794 = vsel %vm787, %v790, %v793
    %v795 = vsel %vm785, nan, %v794
    %v796 = vand.u32 2147483647, %v309
    %vm797 = vcmp.le.f32.partialorder %v796, 0.7853982
    %vm798 = vcmp.lt.s32.totalorder %v309, 0
    %v799 = vand.u32 %v309, 2139095040
    %v800 = vshrl.u32 %v799, 23
    %v801 = vsub.s32 %v800, 127
    %v802 = vand.u32 2147483647, %v309
    %v803 = vand.u32 %v802, 8388607
    %v804 = vor.u32 %v803, 8388608
    %v805 = vsub.s32 0, %v804
    %v806 = vadd.s32 %v801, 1
    %vm807 = vcmp.gt.s32.totalorder %v806, 0
    %v808 = vsel %vm807, %v806, 0
    %v809 = vshrl.u32 %v808, 5
    %v810 = vand.u32 %v808, 31
    %v811 = vsub.s32 32, %v810
    %v812 = vshrl.u32 683565275, %v811
    %v813 = vshll.u32 683565275, %v810
    %v814 = vshrl.u32 2475754826, %v811
    %v815 = vor.u32 %v813, %v814
    %v816 = vshll.u32 2475754826, %v810
    %v817 = vshrl.u32 2131351028, %v811
    %v818 = vor.u32 %v816, %v817
    %v819 = vshll.u32 2131351028, %v810
    %v820 = vshrl.u32 2102212464, %v811
    %v821 = vor.u32 %v819, %v820
    %v822 = vshll.u32 2102212464, %v810
    %v823 = vshrl.u32 920167782, %v811
    %v824 = vor.u32 %v822, %v823
    %v825 = vshll.u32 920167782, %v810
    %v826 = vshrl.u32 1326507024, %v811
    %v827 = vor.u32 %v825, %v826
    %vm828 = vcmp.lt.s32.totalorder %v809, 1
    %vm829 = vcmp.lt.s32.totalorder %v809, 2
    %vm830 = vcmp.lt.s32.totalorder %v809, 3
    %vm831 = vcmp.lt.s32.totalorder %v809, 4
    %v832 = vsel %vm828, %v812, %v815
    %v833 = vsel %vm831, %v821, 2102212464
    %v834 = vsel %vm830, %v818, %v833
    %v835 = vsel %vm829, %v832, %v834
    %v836 = vsel %vm828, %v815, %v818
    %v837 = vsel %vm831, %v824, 920167782
    %v838 = vsel %vm830, %v821, %v837
    %v839 = vsel %vm829, %v836, %v838
    %v840 = vsel %vm828, %v818, %v821
    %v841 = vsel %vm831, %v827, 1326507024
    %v842 = vsel %vm830, %v824, %v841
    %v843 = vsel %vm829, %v840, %v842
    %v844 = vshll.u32 %v804, 8
    %v845 = vmul.u32.u64.compose %v844, %v843
    %v846 = vextract.low.u32 %v845
    %v847 = vextract.high.u32 %v845
    %v848 = vmul.u32.u64.compose %v844, %v839
    %v849 = vextract.low.u32 %v848
    %v850 = vextract.high.u32 %v848
    %v851 = vmul.u32 %v844, %v835
    %v852 = vadd.s32 %v847, %v849
    %vm853 = vc.u32 %v847, %v849
    %v854 = vadd.s32 %v850, 1
    %v855 = vsel %vm853, %v854, %v850
    %v856 = vadd.s32 %v851, %v855
    %v857 = vadd.s32 %v856, 536870912
    %v858 = vshrl.u32 %v857, 30
    %v859 = vshll.u32 %v858, 30
    %v860 = vsub.s32 %v856, %v859
    %vm861 = vcmp.lt.s32.totalorder %v860, 0
    %v862 = vsub.s32 0, %v860
    %v863 = vsel %vm861, %v862, %v860
    %v864 = vclz %v863
    %v865 = vsub.s32 %v864, 2
    %vm866 = vcmp.gt.s32.totalorder 0, %v865
    %v867 = vsel %vm866, 0, %v865
    %v868 = vsub.s32 32, %v867
    %v869 = vshll.u32 %v860, %v867
    %v870 = vshrl.u32 %v852, %v868
    %v871 = vor.u32 %v869, %v870
    %v872 = vsub.s32 4294967266, %v867
    %v873 = vadd.s32 %v872, 127
    %v874 = vshll.u32 %v873, 23
    %v875 = vor.u32 4788187, %v874
    %v876 = vand.u32 2147483647, %v875
    %v878 = vcvt.s32.f32 %v871
    %v879 = vmul.f32 %v878, %v876
    %v880 = vxor.u32 %v879, 2147483648
    %v881 = vsel %vm798, %v880, %v879
    %v882 = vsub.s32 4, %v858
    %v883 = vsel %vm798, %v882, %v858
    %v884 = vsel %vm797, %v309, %v881
    %v885 = vsel %vm797, 0, %v883
    %v886 = vcosq.f32.pop %v884
    %v887 = vsinq.f32.pop %v884
    %vm888 = vweird.f32 %v309
    %v889 = vand.u32 %v885, 3
    %vm890 = vcmp.lt.s32.totalorder %v889, 2
    %vm891 = vcmp.eq.s32.totalorder %v889, 0
    %v892 = vxor.u32 %v887, 2147483648
    %v893 = vsel %vm891, %v886, %v892
    %vm894 = vcmp.eq.s32.totalorder %v889, 2
    %v895 = vxor.u32 %v886, 2147483648
    %v896 = vsel %vm894, %v895, %v887
    %v897 = vsel %vm890, %v893, %v896
    %v898 = vsel %vm888, nan, %v897
    %v899 = vand.u32 2147483647, %v311
    %vm900 = vcmp.le.f32.partialorder %v899, 0.7853982
    %vm901 = vcmp.lt.s32.totalorder %v311, 0
    %v902 = vand.u32 %v311, 2139095040
    %v903 = vshrl.u32 %v902, 23
    %v904 = vsub.s32 %v903, 127
    %v905 = vand.u32 2147483647, %v311
    %v906 = vand.u32 %v905, 8388607
    %v907 = vor.u32 %v906, 8388608
    %v908 = vsub.s32 0, %v907
    %v909 = vadd.s32 %v904, 1
    %vm910 = vcmp.gt.s32.totalorder %v909, 0
    %v911 = vsel %vm910, %v909, 0
    %v912 = vshrl.u32 %v911, 5
    %v913 = vand.u32 %v911, 31
    %v914 = vsub.s32 32, %v913
    %v915 = vshrl.u32 683565275, %v914
    %v916 = vshll.u32 683565275, %v913
    %v917 = vshrl.u32 2475754826, %v914
    %v918 = vor.u32 %v916, %v917
    %v919 = vshll.u32 2475754826, %v913
    %v920 = vshrl.u32 2131351028, %v914
    %v921 = vor.u32 %v919, %v920
    %v922 = vshll.u32 2131351028, %v913
    %v923 = vshrl.u32 2102212464, %v914
    %v924 = vor.u32 %v922, %v923
    %v925 = vshll.u32 2102212464, %v913
    %v926 = vshrl.u32 920167782, %v914
    %v927 = vor.u32 %v925, %v926
    %v928 = vshll.u32 920167782, %v913
    %v929 = vshrl.u32 1326507024, %v914
    %v930 = vor.u32 %v928, %v929
    %vm931 = vcmp.lt.s32.totalorder %v912, 1
    %vm932 = vcmp.lt.s32.totalorder %v912, 2
    %vm933 = vcmp.lt.s32.totalorder %v912, 3
    %vm934 = vcmp.lt.s32.totalorder %v912, 4
    %v935 = vsel %vm931, %v915, %v918
    %v936 = vsel %vm934, %v924, 2102212464
    %v937 = vsel %vm933, %v921, %v936
    %v938 = vsel %vm932, %v935, %v937
    %v939 = vsel %vm931, %v918, %v921
    %v940 = vsel %vm934, %v927, 920167782
    %v941 = vsel %vm933, %v924, %v940
    %v942 = vsel %vm932, %v939, %v941
    %v943 = vsel %vm931, %v921, %v924
    %v944 = vsel %vm934, %v930, 1326507024
    %v945 = vsel %vm933, %v927, %v944
    %v946 = vsel %vm932, %v943, %v945
    %v947 = vshll.u32 %v907, 8
    %v948 = vmul.u32.u64.compose %v947, %v946
    %v949 = vextract.low.u32 %v948
    %v950 = vextract.high.u32 %v948
    %v951 = vmul.u32.u64.compose %v947, %v942
    %v952 = vextract.low.u32 %v951
    %v953 = vextract.high.u32 %v951
    %v954 = vmul.u32 %v947, %v938
    %v955 = vadd.s32 %v950, %v952
    %vm956 = vc.u32 %v950, %v952
    %v957 = vadd.s32 %v953, 1
    %v958 = vsel %vm956, %v957, %v953
    %v959 = vadd.s32 %v954, %v958
    %v960 = vadd.s32 %v959, 536870912
    %v961 = vshrl.u32 %v960, 30
    %v962 = vshll.u32 %v961, 30
    %v963 = vsub.s32 %v959, %v962
    %vm964 = vcmp.lt.s32.totalorder %v963, 0
    %v965 = vsub.s32 0, %v963
    %v966 = vsel %vm964, %v965, %v963
    %v967 = vclz %v966
    %v968 = vsub.s32 %v967, 2
    %vm969 = vcmp.gt.s32.totalorder 0, %v968
    %v970 = vsel %vm969, 0, %v968
    %v971 = vsub.s32 32, %v970
    %v972 = vshll.u32 %v963, %v970
    %v973 = vshrl.u32 %v955, %v971
    %v974 = vor.u32 %v972, %v973
    %v975 = vsub.s32 4294967266, %v970
    %v976 = vadd.s32 %v975, 127
    %v977 = vshll.u32 %v976, 23
    %v978 = vor.u32 4788187, %v977
    %v979 = vand.u32 2147483647, %v978
    %v981 = vcvt.s32.f32 %v974
    %v982 = vmul.f32 %v981, %v979
    %v983 = vxor.u32 %v982, 2147483648
    %v984 = vsel %vm901, %v983, %v982
    %v985 = vsub.s32 4, %v961
    %v986 = vsel %vm901, %v985, %v961
    %v987 = vsel %vm900, %v311, %v984
    %v988 = vsel %vm900, 0, %v986
    %v989 = vcosq.f32.pop %v987
    %v990 = vsinq.f32.pop %v987
    %vm991 = vweird.f32 %v311
    %v992 = vand.u32 %v988, 3
    %vm993 = vcmp.lt.s32.totalorder %v992, 2
    %vm994 = vcmp.eq.s32.totalorder %v992, 0
    %v995 = vxor.u32 %v990, 2147483648
    %v996 = vsel %vm994, %v989, %v995
    %vm997 = vcmp.eq.s32.totalorder %v992, 2
    %v998 = vxor.u32 %v989, 2147483648
    %v999 = vsel %vm997, %v998, %v990
    %v1000 = vsel %vm993, %v996, %v999
    %v1001 = vsel %vm991, nan, %v1000
    %v1002 = vand.u32 2147483647, %v380
    %vm1003 = vcmp.le.f32.partialorder %v1002, 0.7853982
    %vm1004 = vcmp.lt.s32.totalorder %v380, 0
    %v1005 = vand.u32 %v380, 2139095040
    %v1006 = vshrl.u32 %v1005, 23
    %v1007 = vsub.s32 %v1006, 127
    %v1008 = vand.u32 2147483647, %v380
    %v1009 = vand.u32 %v1008, 8388607
    %v1010 = vor.u32 %v1009, 8388608
    %v1011 = vsub.s32 0, %v1010
    %v1012 = vadd.s32 %v1007, 1
    %vm1013 = vcmp.gt.s32.totalorder %v1012, 0
    %v1014 = vsel %vm1013, %v1012, 0
    %v1015 = vshrl.u32 %v1014, 5
    %v1016 = vand.u32 %v1014, 31
    %v1017 = vsub.s32 32, %v1016
    %v1018 = vshrl.u32 683565275, %v1017
    %v1019 = vshll.u32 683565275, %v1016
    %v1020 = vshrl.u32 2475754826, %v1017
    %v1021 = vor.u32 %v1019, %v1020
    %v1022 = vshll.u32 2475754826, %v1016
    %v1023 = vshrl.u32 2131351028, %v1017
    %v1024 = vor.u32 %v1022, %v1023
    %v1025 = vshll.u32 2131351028, %v1016
    %v1026 = vshrl.u32 2102212464, %v1017
    %v1027 = vor.u32 %v1025, %v1026
    %v1028 = vshll.u32 2102212464, %v1016
    %v1029 = vshrl.u32 920167782, %v1017
    %v1030 = vor.u32 %v1028, %v1029
    %v1031 = vshll.u32 920167782, %v1016
    %v1032 = vshrl.u32 1326507024, %v1017
    %v1033 = vor.u32 %v1031, %v1032
    %vm1034 = vcmp.lt.s32.totalorder %v1015, 1
    %vm1035 = vcmp.lt.s32.totalorder %v1015, 2
    %vm1036 = vcmp.lt.s32.totalorder %v1015, 3
    %vm1037 = vcmp.lt.s32.totalorder %v1015, 4
    %v1038 = vsel %vm1034, %v1018, %v1021
    %v1039 = vsel %vm1037, %v1027, 2102212464
    %v1040 = vsel %vm1036, %v1024, %v1039
    %v1041 = vsel %vm1035, %v1038, %v1040
    %v1042 = vsel %vm1034, %v1021, %v1024
    %v1043 = vsel %vm1037, %v1030, 920167782
    %v1044 = vsel %vm1036, %v1027, %v1043
    %v1045 = vsel %vm1035, %v1042, %v1044
    %v1046 = vsel %vm1034, %v1024, %v1027
    %v1047 = vsel %vm1037, %v1033, 1326507024
    %v1048 = vsel %vm1036, %v1030, %v1047
    %v1049 = vsel %vm1035, %v1046, %v1048
    %v1050 = vshll.u32 %v1010, 8
    %v1051 = vmul.u32.u64.compose %v1050, %v1049
    %v1052 = vextract.low.u32 %v1051
    %v1053 = vextract.high.u32 %v1051
    %v1054 = vmul.u32.u64.compose %v1050, %v1045
    %v1055 = vextract.low.u32 %v1054
    %v1056 = vextract.high.u32 %v1054
    %v1057 = vmul.u32 %v1050, %v1041
    %v1058 = vadd.s32 %v1053, %v1055
    %vm1059 = vc.u32 %v1053, %v1055
    %v1060 = vadd.s32 %v1056, 1
    %v1061 = vsel %vm1059, %v1060, %v1056
    %v1062 = vadd.s32 %v1057, %v1061
    %v1063 = vadd.s32 %v1062, 536870912
    %v1064 = vshrl.u32 %v1063, 30
    %v1065 = vshll.u32 %v1064, 30
    %v1066 = vsub.s32 %v1062, %v1065
    %vm1067 = vcmp.lt.s32.totalorder %v1066, 0
    %v1068 = vsub.s32 0, %v1066
    %v1069 = vsel %vm1067, %v1068, %v1066
    %v1070 = vclz %v1069
    %v1071 = vsub.s32 %v1070, 2
    %vm1072 = vcmp.gt.s32.totalorder 0, %v1071
    %v1073 = vsel %vm1072, 0, %v1071
    %v1074 = vsub.s32 32, %v1073
    %v1075 = vshll.u32 %v1066, %v1073
    %v1076 = vshrl.u32 %v1058, %v1074
    %v1077 = vor.u32 %v1075, %v1076
    %v1078 = vsub.s32 4294967266, %v1073
    %v1079 = vadd.s32 %v1078, 127
    %v1080 = vshll.u32 %v1079, 23
    %v1081 = vor.u32 4788187, %v1080
    %v1082 = vand.u32 2147483647, %v1081
    %v1084 = vcvt.s32.f32 %v1077
    %v1085 = vmul.f32 %v1084, %v1082
    %v1086 = vxor.u32 %v1085, 2147483648
    %v1087 = vsel %vm1004, %v1086, %v1085
    %v1088 = vsub.s32 4, %v1064
    %v1089 = vsel %vm1004, %v1088, %v1064
    %v1090 = vsel %vm1003, %v380, %v1087
    %v1091 = vsel %vm1003, 0, %v1089
    %v1092 = vcosq.f32.pop %v1090
    %v1093 = vsinq.f32.pop %v1090
    %vm1094 = vweird.f32 %v380
    %v1095 = vand.u32 %v1091, 3
    %vm1096 = vcmp.lt.s32.totalorder %v1095, 2
    %vm1097 = vcmp.eq.s32.totalorder %v1095, 0
    %v1098 = vxor.u32 %v1093, 2147483648
    %v1099 = vsel %vm1097, %v1092, %v1098
    %vm1100 = vcmp.eq.s32.totalorder %v1095, 2
    %v1101 = vxor.u32 %v1092, 2147483648
    %v1102 = vsel %vm1100, %v1101, %v1093
    %v1103 = vsel %vm1096, %v1099, %v1102
    %v1104 = vsel %vm1094, nan, %v1103
    %v1105 = vand.u32 2147483647, %v382
    %vm1106 = vcmp.le.f32.partialorder %v1105, 0.7853982
    %vm1107 = vcmp.lt.s32.totalorder %v382, 0
    %v1108 = vand.u32 %v382, 2139095040
    %v1109 = vshrl.u32 %v1108, 23
    %v1110 = vsub.s32 %v1109, 127
    %v1111 = vand.u32 2147483647, %v382
    %v1112 = vand.u32 %v1111, 8388607
    %v1113 = vor.u32 %v1112, 8388608
    %v1114 = vsub.s32 0, %v1113
    %v1115 = vadd.s32 %v1110, 1
    %vm1116 = vcmp.gt.s32.totalorder %v1115, 0
    %v1117 = vsel %vm1116, %v1115, 0
    %v1118 = vshrl.u32 %v1117, 5
    %v1119 = vand.u32 %v1117, 31
    %v1120 = vsub.s32 32, %v1119
    %v1121 = vshrl.u32 683565275, %v1120
    %v1122 = vshll.u32 683565275, %v1119
    %v1123 = vshrl.u32 2475754826, %v1120
    %v1124 = vor.u32 %v1122, %v1123
    %v1125 = vshll.u32 2475754826, %v1119
    %v1126 = vshrl.u32 2131351028, %v1120
    %v1127 = vor.u32 %v1125, %v1126
    %v1128 = vshll.u32 2131351028, %v1119
    %v1129 = vshrl.u32 2102212464, %v1120
    %v1130 = vor.u32 %v1128, %v1129
    %v1131 = vshll.u32 2102212464, %v1119
    %v1132 = vshrl.u32 920167782, %v1120
    %v1133 = vor.u32 %v1131, %v1132
    %v1134 = vshll.u32 920167782, %v1119
    %v1135 = vshrl.u32 1326507024, %v1120
    %v1136 = vor.u32 %v1134, %v1135
    %vm1137 = vcmp.lt.s32.totalorder %v1118, 1
    %vm1138 = vcmp.lt.s32.totalorder %v1118, 2
    %vm1139 = vcmp.lt.s32.totalorder %v1118, 3
    %vm1140 = vcmp.lt.s32.totalorder %v1118, 4
    %v1141 = vsel %vm1137, %v1121, %v1124
    %v1142 = vsel %vm1140, %v1130, 2102212464
    %v1143 = vsel %vm1139, %v1127, %v1142
    %v1144 = vsel %vm1138, %v1141, %v1143
    %v1145 = vsel %vm1137, %v1124, %v1127
    %v1146 = vsel %vm1140, %v1133, 920167782
    %v1147 = vsel %vm1139, %v1130, %v1146
    %v1148 = vsel %vm1138, %v1145, %v1147
    %v1149 = vsel %vm1137, %v1127, %v1130
    %v1150 = vsel %vm1140, %v1136, 1326507024
    %v1151 = vsel %vm1139, %v1133, %v1150
    %v1152 = vsel %vm1138, %v1149, %v1151
    %v1153 = vshll.u32 %v1113, 8
    %v1154 = vmul.u32.u64.compose %v1153, %v1152
    %v1155 = vextract.low.u32 %v1154
    %v1156 = vextract.high.u32 %v1154
    %v1157 = vmul.u32.u64.compose %v1153, %v1148
    %v1158 = vextract.low.u32 %v1157
    %v1159 = vextract.high.u32 %v1157
    %v1160 = vmul.u32 %v1153, %v1144
    %v1161 = vadd.s32 %v1156, %v1158
    %vm1162 = vc.u32 %v1156, %v1158
    %v1163 = vadd.s32 %v1159, 1
    %v1164 = vsel %vm1162, %v1163, %v1159
    %v1165 = vadd.s32 %v1160, %v1164
    %v1166 = vadd.s32 %v1165, 536870912
    %v1167 = vshrl.u32 %v1166, 30
    %v1168 = vshll.u32 %v1167, 30
    %v1169 = vsub.s32 %v1165, %v1168
    %vm1170 = vcmp.lt.s32.totalorder %v1169, 0
    %v1171 = vsub.s32 0, %v1169
    %v1172 = vsel %vm1170, %v1171, %v1169
    %v1173 = vclz %v1172
    %v1174 = vsub.s32 %v1173, 2
    %vm1175 = vcmp.gt.s32.totalorder 0, %v1174
    %v1176 = vsel %vm1175, 0, %v1174
    %v1177 = vsub.s32 32, %v1176
    %v1178 = vshll.u32 %v1169, %v1176
    %v1179 = vshrl.u32 %v1161, %v1177
    %v1180 = vor.u32 %v1178, %v1179
    %v1181 = vsub.s32 4294967266, %v1176
    %v1182 = vadd.s32 %v1181, 127
    %v1183 = vshll.u32 %v1182, 23
    %v1184 = vor.u32 4788187, %v1183
    %v1185 = vand.u32 2147483647, %v1184
    %v1187 = vcvt.s32.f32 %v1180
    %v1188 = vmul.f32 %v1187, %v1185
    %v1189 = vxor.u32 %v1188, 2147483648
    %v1190 = vsel %vm1107, %v1189, %v1188
    %v1191 = vsub.s32 4, %v1167
    %v1192 = vsel %vm1107, %v1191, %v1167
    %v1193 = vsel %vm1106, %v382, %v1190
    %v1194 = vsel %vm1106, 0, %v1192
    %v1195 = vcosq.f32.pop %v1193
    %v1196 = vsinq.f32.pop %v1193
    %vm1197 = vweird.f32 %v382
    %v1198 = vand.u32 %v1194, 3
    %vm1199 = vcmp.lt.s32.totalorder %v1198, 2
    %vm1200 = vcmp.eq.s32.totalorder %v1198, 0
    %v1201 = vxor.u32 %v1196, 2147483648
    %v1202 = vsel %vm1200, %v1195, %v1201
    %vm1203 = vcmp.eq.s32.totalorder %v1198, 2
    %v1204 = vxor.u32 %v1195, 2147483648
    %v1205 = vsel %vm1203, %v1204, %v1196
    %v1206 = vsel %vm1199, %v1202, %v1205
    %v1207 = vsel %vm1197, nan, %v1206
    %v1208 = vld [vmem:[%s3] sm:$0xff]
    %v1209 = vld [vmem:[%s3 + $0x8] sm:$0xff]
    %v1210 = vld [vmem:[%s3 + $0x10] sm:$0xff]
    %v1211 = vld [vmem:[%s3 + $0x18] sm:$0xff]
    %v1212 = vld [vmem:[%s3 + $0x20] sm:$0xff]
    %v1213 = vld [vmem:[%s3 + $0x28] sm:$0xff]
    %v1214 = vld [vmem:[%s3 + $0x30] sm:$0xff]
    %v1215 = vld [vmem:[%s3 + $0x38] sm:$0xff]
    %v1216 = vld [vmem:[%s3 + $0x40] sm:$0xff]
    %v1217 = vld [vmem:[%s3 + $0x48] sm:$0xff]
    %v1218 = vld [vmem:[%s3 + $0x50] sm:$0xff]
    %v1219 = vld [vmem:[%s3 + $0x58] sm:$0xff]
    %v1220 = vld [vmem:[%s3 + $0x60] sm:$0xff]
    %v1221 = vld [vmem:[%s3 + $0x68] sm:$0xff]
    %v1222 = vld [vmem:[%s3 + $0x70] sm:$0xff]
    %v1223 = vld [vmem:[%s3 + $0x78] sm:$0xff]
    %v1224 = vld [vmem:[%s3 + $0x80] sm:$0xff]
    %v1225 = vld [vmem:[%s3 + $0x88] sm:$0xff]
    %v1226 = vld [vmem:[%s3 + $0x90] sm:$0xff]
    %v1227 = vld [vmem:[%s3 + $0x98] sm:$0xff]
    %v1228 = vld [vmem:[%s3 + $0xa0] sm:$0xff]
    %v1229 = vld [vmem:[%s3 + $0xa8] sm:$0xff]
    %v1230 = vld [vmem:[%s3 + $0xb0] sm:$0xff]
    %v1231 = vld [vmem:[%s3 + $0xb8] sm:$0xff]
    %v1232 = vld [vmem:[%s3 + $0xc0] sm:$0xff]
    %v1233 = vld [vmem:[%s3 + $0xc8] sm:$0xff]
    %v1234 = vld [vmem:[%s3 + $0xd0] sm:$0xff]
    %v1235 = vld [vmem:[%s3 + $0xd8] sm:$0xff]
    %v1236 = vld [vmem:[%s3 + $0xe0] sm:$0xff]
    %v1237 = vld [vmem:[%s3 + $0xe8] sm:$0xff]
    %v1238 = vld [vmem:[%s3 + $0xf0] sm:$0xff]
    %v1239 = vld [vmem:[%s3 + $0xf8] sm:$0xff]
    %v1240 = vld [vmem:[%s3 + $0x100] sm:$0xff]
    %v1241 = vld [vmem:[%s3 + $0x108] sm:$0xff]
    %v1242 = vld [vmem:[%s3 + $0x110] sm:$0xff]
    %v1243 = vld [vmem:[%s3 + $0x118] sm:$0xff]
    %v1244 = vld [vmem:[%s3 + $0x120] sm:$0xff]
    %v1245 = vld [vmem:[%s3 + $0x128] sm:$0xff]
    %v1246 = vld [vmem:[%s3 + $0x130] sm:$0xff]
    %v1247 = vld [vmem:[%s3 + $0x138] sm:$0xff]
    %v1248 = vld [vmem:[%s3 + $0x140] sm:$0xff]
    %v1249 = vld [vmem:[%s3 + $0x148] sm:$0xff]
    %v1250 = vld [vmem:[%s3 + $0x150] sm:$0xff]
    %v1251 = vld [vmem:[%s3 + $0x158] sm:$0xff]
    %v1252 = vld [vmem:[%s3 + $0x160] sm:$0xff]
    %v1253 = vld [vmem:[%s3 + $0x168] sm:$0xff]
    %v1254 = vld [vmem:[%s3 + $0x170] sm:$0xff]
    %v1255 = vld [vmem:[%s3 + $0x178] sm:$0xff]
    %v1256 = vld [vmem:[%s3 + $0x180] sm:$0xff]
    %v1257 = vld [vmem:[%s3 + $0x188] sm:$0xff]
    %v1258 = vld [vmem:[%s3 + $0x190] sm:$0xff]
    %v1259 = vld [vmem:[%s3 + $0x198] sm:$0xff]
    %v1260 = vld [vmem:[%s3 + $0x1a0] sm:$0xff]
    %v1261 = vld [vmem:[%s3 + $0x1a8] sm:$0xff]
    %v1262 = vld [vmem:[%s3 + $0x1b0] sm:$0xff]
    %v1263 = vld [vmem:[%s3 + $0x1b8] sm:$0xff]
    %v1264 = vld [vmem:[%s3 + $0x1c0] sm:$0xff]
    %v1265 = vld [vmem:[%s3 + $0x1c8] sm:$0xff]
    %v1266 = vld [vmem:[%s3 + $0x1d0] sm:$0xff]
    %v1267 = vld [vmem:[%s3 + $0x1d8] sm:$0xff]
    %v1268 = vld [vmem:[%s3 + $0x1e0] sm:$0xff]
    %v1269 = vld [vmem:[%s3 + $0x1e8] sm:$0xff]
    %v1270 = vld [vmem:[%s3 + $0x1f0] sm:$0xff]
    %v1271 = vld [vmem:[%s3 + $0x1f8] sm:$0xff]
    %v1272 = vld [vmem:[%s3 + $0x200] sm:$0xff]
    %v1273 = vld [vmem:[%s3 + $0x208] sm:$0xff]
    %v1274 = vld [vmem:[%s3 + $0x210] sm:$0xff]
    %v1275 = vld [vmem:[%s3 + $0x218] sm:$0xff]
    %v1276 = vld [vmem:[%s3 + $0x220] sm:$0xff]
    %v1277 = vld [vmem:[%s3 + $0x228] sm:$0xff]
    %v1278 = vld [vmem:[%s3 + $0x230] sm:$0xff]
    %v1279 = vld [vmem:[%s3 + $0x238] sm:$0xff]
    %v1280 = vld [vmem:[%s3 + $0x240] sm:$0xff]
    %v1281 = vld [vmem:[%s3 + $0x248] sm:$0xff]
    %v1282 = vld [vmem:[%s3 + $0x250] sm:$0xff]
    %v1283 = vld [vmem:[%s3 + $0x258] sm:$0xff]
    %v1284 = vld [vmem:[%s3 + $0x260] sm:$0xff]
    %v1285 = vld [vmem:[%s3 + $0x268] sm:$0xff]
    %v1286 = vld [vmem:[%s3 + $0x270] sm:$0xff]
    %v1287 = vld [vmem:[%s3 + $0x278] sm:$0xff]
    %v1288 = vld [vmem:[%s3 + $0x280] sm:$0xff]
    %v1289 = vld [vmem:[%s3 + $0x288] sm:$0xff]
    %v1290 = vld [vmem:[%s3 + $0x290] sm:$0xff]
    %v1291 = vld [vmem:[%s3 + $0x298] sm:$0xff]
    %v1292 = vld [vmem:[%s3 + $0x2a0] sm:$0xff]
    %v1293 = vld [vmem:[%s3 + $0x2a8] sm:$0xff]
    %v1294 = vld [vmem:[%s3 + $0x2b0] sm:$0xff]
    %v1295 = vld [vmem:[%s3 + $0x2b8] sm:$0xff]
    %v1296 = vld [vmem:[%s3 + $0x2c0] sm:$0xff]
    %v1297 = vld [vmem:[%s3 + $0x2c8] sm:$0xff]
    %v1298 = vld [vmem:[%s3 + $0x2d0] sm:$0xff]
    %v1299 = vld [vmem:[%s3 + $0x2d8] sm:$0xff]
    %v1300 = vld [vmem:[%s3 + $0x2e0] sm:$0xff]
    %v1301 = vld [vmem:[%s3 + $0x2e8] sm:$0xff]
    %v1302 = vld [vmem:[%s3 + $0x2f0] sm:$0xff]
    %v1303 = vld [vmem:[%s3 + $0x2f8] sm:$0xff]
    %v1304 = vld [vmem:[%s3 + $0x300] sm:$0xff]
    %v1305 = vld [vmem:[%s3 + $0x308] sm:$0xff]
    %v1306 = vld [vmem:[%s3 + $0x310] sm:$0xff]
    %v1307 = vld [vmem:[%s3 + $0x318] sm:$0xff]
    %v1308 = vld [vmem:[%s3 + $0x320] sm:$0xff]
    %v1309 = vld [vmem:[%s3 + $0x328] sm:$0xff]
    %v1310 = vld [vmem:[%s3 + $0x330] sm:$0xff]
    %v1311 = vld [vmem:[%s3 + $0x338] sm:$0xff]
    %v1312 = vld [vmem:[%s3 + $0x340] sm:$0xff]
    %v1313 = vld [vmem:[%s3 + $0x348] sm:$0xff]
    %v1314 = vld [vmem:[%s3 + $0x350] sm:$0xff]
    %v1315 = vld [vmem:[%s3 + $0x358] sm:$0xff]
    %v1316 = vld [vmem:[%s3 + $0x360] sm:$0xff]
    %v1317 = vld [vmem:[%s3 + $0x368] sm:$0xff]
    %v1318 = vld [vmem:[%s3 + $0x370] sm:$0xff]
    %v1319 = vld [vmem:[%s3 + $0x378] sm:$0xff]
    %v1320 = vld [vmem:[%s3 + $0x380] sm:$0xff]
    %v1321 = vld [vmem:[%s3 + $0x388] sm:$0xff]
    %v1322 = vld [vmem:[%s3 + $0x390] sm:$0xff]
    %v1323 = vld [vmem:[%s3 + $0x398] sm:$0xff]
    %v1324 = vld [vmem:[%s3 + $0x3a0] sm:$0xff]
    %v1325 = vld [vmem:[%s3 + $0x3a8] sm:$0xff]
    %v1326 = vld [vmem:[%s3 + $0x3b0] sm:$0xff]
    %v1327 = vld [vmem:[%s3 + $0x3b8] sm:$0xff]
    %v1328 = vld [vmem:[%s3 + $0x3c0] sm:$0xff]
    %v1329 = vld [vmem:[%s3 + $0x3c8] sm:$0xff]
    %v1330 = vld [vmem:[%s3 + $0x3d0] sm:$0xff]
    %v1331 = vld [vmem:[%s3 + $0x3d8] sm:$0xff]
    %v1332 = vld [vmem:[%s3 + $0x3e0] sm:$0xff]
    %v1333 = vld [vmem:[%s3 + $0x3e8] sm:$0xff]
    %v1334 = vld [vmem:[%s3 + $0x3f0] sm:$0xff]
    %v1335 = vld [vmem:[%s3 + $0x3f8] sm:$0xff]
    %v1336 = vld [vmem:[%s4] sm:$0x1]
    %v1338 = vlaneseq
    %v1339 = vshrl.u32 %v1338, 7
    %v1340 = vsub.s32 0, %v1339
    %v1341 = vrot.slane %v1336, %v1340
    %1343 = vmatprep.subr.mxu0 0.0
    %1344 = vmatpush1.msra.mxu0 %v1223
    %1345 = vmatprep.subr.mxu0 0.0
    %1346 = vmatpush1.msra.mxu0 %v1222
    %1347 = vmatprep.subr.mxu0 0.0
    %1348 = vmatpush1.msra.mxu0 %v1221
    %1349 = vmatprep.subr.mxu0 0.0
    %1350 = vmatpush1.msra.mxu0 %v1220
    %1351 = vmatprep.subr.mxu0 0.0
    %1352 = vmatpush1.msra.mxu0 %v1219
    %1353 = vmatprep.subr.mxu0 0.0
    %1354 = vmatpush1.msra.mxu0 %v1218
    %1355 = vmatprep.subr.mxu0 0.0
    %1356 = vmatpush1.msra.mxu0 %v1217
    %1357 = vmatprep.subr.mxu0 0.0
    %1358 = vmatpush1.msra.mxu0 %v1216
    %1359 = vmatprep.subr.mxu0 0.0
    %1360 = vmatpush1.msra.mxu0 %v1215
    %1361 = vmatprep.subr.mxu0 0.0
    %1362 = vmatpush1.msra.mxu0 %v1214
    %1363 = vmatprep.subr.mxu0 0.0
    %1364 = vmatpush1.msra.mxu0 %v1213
    %1365 = vmatprep.subr.mxu0 0.0
    %1366 = vmatpush1.msra.mxu0 %v1212
    %1367 = vmatprep.subr.mxu0 0.0
    %1368 = vmatpush1.msra.mxu0 %v1211
    %1369 = vmatprep.subr.mxu0 0.0
    %1370 = vmatpush1.msra.mxu0 %v1210
    %1371 = vmatprep.subr.mxu0 0.0
    %1372 = vmatpush1.msra.mxu0 %v1209
    %1373 = vmatprep.subr.mxu0 0.0
    %1374 = vmatpush1.msra.mxu0 %v1208
    %1375 = vmatprep.subr.mxu0 0.0
    %1376 = vmatpush2.msra.mxu0 %v1239
    %1377 = vmatprep.subr.mxu0 0.0
    %1378 = vmatpush2.msra.mxu0 %v1238
    %1379 = vmatprep.subr.mxu0 0.0
    %1380 = vmatpush2.msra.mxu0 %v1237
    %1381 = vmatprep.subr.mxu0 0.0
    %1382 = vmatpush2.msra.mxu0 %v1236
    %1383 = vmatprep.subr.mxu0 0.0
    %1384 = vmatpush2.msra.mxu0 %v1235
    %1385 = vmatprep.subr.mxu0 0.0
    %1386 = vmatpush2.msra.mxu0 %v1234
    %1387 = vmatprep.subr.mxu0 0.0
    %1388 = vmatpush2.msra.mxu0 %v1233
    %1389 = vmatprep.subr.mxu0 0.0
    %1390 = vmatpush2.msra.mxu0 %v1232
    %1391 = vmatprep.subr.mxu0 0.0
    %1392 = vmatpush2.msra.mxu0 %v1231
    %1393 = vmatprep.subr.mxu0 0.0
    %1394 = vmatpush2.msra.mxu0 %v1230
    %1395 = vmatprep.subr.mxu0 0.0
    %1396 = vmatpush2.msra.mxu0 %v1229
    %1397 = vmatprep.subr.mxu0 0.0
    %1398 = vmatpush2.msra.mxu0 %v1228
    %1399 = vmatprep.subr.mxu0 0.0
    %1400 = vmatpush2.msra.mxu0 %v1227
    %1401 = vmatprep.subr.mxu0 0.0
    %1402 = vmatpush2.msra.mxu0 %v1226
    %1403 = vmatprep.subr.mxu0 0.0
    %1404 = vmatpush2.msra.mxu0 %v1225
    %1405 = vmatprep.subr.mxu0 0.0
    %1406 = vmatpush2.msra.mxu0 %v1224
    %1407 = vmatprep.mubr.f32.mxu0 %v589
    %1408 = vmatmul.mubr.f32.gmra.mxu0 %v486
    %v1409 = vpop.f32.mrf.mxu0
    %v1410 = vadd.f32 %v1341, %v1409
    %v1411 = vpop.f32.mrf.mxu0
    %1412 = vdwg.mxu0
    %1413 = vmatprep.subr.mxu0 0.0
    %1414 = vmatpush1.msra.mxu0 %v1255
    %1415 = vmatprep.subr.mxu0 0.0
    %1416 = vmatpush1.msra.mxu0 %v1254
    %1417 = vmatprep.subr.mxu0 0.0
    %1418 = vmatpush1.msra.mxu0 %v1253
    %1419 = vmatprep.subr.mxu0 0.0
    %1420 = vmatpush1.msra.mxu0 %v1252
    %1421 = vmatprep.subr.mxu0 0.0
    %1422 = vmatpush1.msra.mxu0 %v1251
    %1423 = vmatprep.subr.mxu0 0.0
    %1424 = vmatpush1.msra.mxu0 %v1250
    %1425 = vmatprep.subr.mxu0 0.0
    %1426 = vmatpush1.msra.mxu0 %v1249
    %1427 = vmatprep.subr.mxu0 0.0
    %1428 = vmatpush1.msra.mxu0 %v1248
    %1429 = vmatprep.subr.mxu0 0.0
    %1430 = vmatpush1.msra.mxu0 %v1247
    %1431 = vmatprep.subr.mxu0 0.0
    %1432 = vmatpush1.msra.mxu0 %v1246
    %1433 = vmatprep.subr.mxu0 0.0
    %1434 = vmatpush1.msra.mxu0 %v1245
    %1435 = vmatprep.subr.mxu0 0.0
    %1436 = vmatpush1.msra.mxu0 %v1244
    %1437 = vmatprep.subr.mxu0 0.0
    %1438 = vmatpush1.msra.mxu0 %v1243
    %1439 = vmatprep.subr.mxu0 0.0
    %1440 = vmatpush1.msra.mxu0 %v1242
    %1441 = vmatprep.subr.mxu0 0.0
    %1442 = vmatpush1.msra.mxu0 %v1241
    %1443 = vmatprep.subr.mxu0 0.0
    %1444 = vmatpush1.msra.mxu0 %v1240
    %1445 = vmatprep.subr.mxu0 0.0
    %1446 = vmatpush2.msra.mxu0 %v1271
    %1447 = vmatprep.subr.mxu0 0.0
    %1448 = vmatpush2.msra.mxu0 %v1270
    %1449 = vmatprep.subr.mxu0 0.0
    %1450 = vmatpush2.msra.mxu0 %v1269
    %1451 = vmatprep.subr.mxu0 0.0
    %1452 = vmatpush2.msra.mxu0 %v1268
    %1453 = vmatprep.subr.mxu0 0.0
    %1454 = vmatpush2.msra.mxu0 %v1267
    %1455 = vmatprep.subr.mxu0 0.0
    %1456 = vmatpush2.msra.mxu0 %v1266
    %1457 = vmatprep.subr.mxu0 0.0
    %1458 = vmatpush2.msra.mxu0 %v1265
    %1459 = vmatprep.subr.mxu0 0.0
    %1460 = vmatpush2.msra.mxu0 %v1264
    %1461 = vmatprep.subr.mxu0 0.0
    %1462 = vmatpush2.msra.mxu0 %v1263
    %1463 = vmatprep.subr.mxu0 0.0
    %1464 = vmatpush2.msra.mxu0 %v1262
    %1465 = vmatprep.subr.mxu0 0.0
    %1466 = vmatpush2.msra.mxu0 %v1261
    %1467 = vmatprep.subr.mxu0 0.0
    %1468 = vmatpush2.msra.mxu0 %v1260
    %1469 = vmatprep.subr.mxu0 0.0
    %1470 = vmatpush2.msra.mxu0 %v1259
    %1471 = vmatprep.subr.mxu0 0.0
    %1472 = vmatpush2.msra.mxu0 %v1258
    %1473 = vmatprep.subr.mxu0 0.0
    %1474 = vmatpush2.msra.mxu0 %v1257
    %1475 = vmatprep.subr.mxu0 0.0
    %1476 = vmatpush2.msra.mxu0 %v1256
    %1477 = vmatprep.mubr.f32.mxu0 %v795
    %1478 = vmatmul.mubr.f32.gmra.mxu0 %v692
    %v1479 = vpop.f32.mrf.mxu0
    %v1480 = vadd.f32 %v1410, %v1479
    %v1481 = vpop.f32.mrf.mxu0
    %1482 = vdwg.mxu0
    %1483 = vmatprep.subr.mxu0 0.0
    %1484 = vmatpush1.msra.mxu0 %v1287
    %1485 = vmatprep.subr.mxu0 0.0
    %1486 = vmatpush1.msra.mxu0 %v1286
    %1487 = vmatprep.subr.mxu0 0.0
    %1488 = vmatpush1.msra.mxu0 %v1285
    %1489 = vmatprep.subr.mxu0 0.0
    %1490 = vmatpush1.msra.mxu0 %v1284
    %1491 = vmatprep.subr.mxu0 0.0
    %1492 = vmatpush1.msra.mxu0 %v1283
    %1493 = vmatprep.subr.mxu0 0.0
    %1494 = vmatpush1.msra.mxu0 %v1282
    %1495 = vmatprep.subr.mxu0 0.0
    %1496 = vmatpush1.msra.mxu0 %v1281
    %1497 = vmatprep.subr.mxu0 0.0
    %1498 = vmatpush1.msra.mxu0 %v1280
    %1499 = vmatprep.subr.mxu0 0.0
    %1500 = vmatpush1.msra.mxu0 %v1279
    %1501 = vmatprep.subr.mxu0 0.0
    %1502 = vmatpush1.msra.mxu0 %v1278
    %1503 = vmatprep.subr.mxu0 0.0
    %1504 = vmatpush1.msra.mxu0 %v1277
    %1505 = vmatprep.subr.mxu0 0.0
    %1506 = vmatpush1.msra.mxu0 %v1276
    %1507 = vmatprep.subr.mxu0 0.0
    %1508 = vmatpush1.msra.mxu0 %v1275
    %1509 = vmatprep.subr.mxu0 0.0
    %1510 = vmatpush1.msra.mxu0 %v1274
    %1511 = vmatprep.subr.mxu0 0.0
    %1512 = vmatpush1.msra.mxu0 %v1273
    %1513 = vmatprep.subr.mxu0 0.0
    %1514 = vmatpush1.msra.mxu0 %v1272
    %1515 = vmatprep.subr.mxu0 0.0
    %1516 = vmatpush2.msra.mxu0 %v1303
    %1517 = vmatprep.subr.mxu0 0.0
    %1518 = vmatpush2.msra.mxu0 %v1302
    %1519 = vmatprep.subr.mxu0 0.0
    %1520 = vmatpush2.msra.mxu0 %v1301
    %1521 = vmatprep.subr.mxu0 0.0
    %1522 = vmatpush2.msra.mxu0 %v1300
    %1523 = vmatprep.subr.mxu0 0.0
    %1524 = vmatpush2.msra.mxu0 %v1299
    %1525 = vmatprep.subr.mxu0 0.0
    %1526 = vmatpush2.msra.mxu0 %v1298
    %1527 = vmatprep.subr.mxu0 0.0
    %1528 = vmatpush2.msra.mxu0 %v1297
    %1529 = vmatprep.subr.mxu0 0.0
    %1530 = vmatpush2.msra.mxu0 %v1296
    %1531 = vmatprep.subr.mxu0 0.0
    %1532 = vmatpush2.msra.mxu0 %v1295
    %1533 = vmatprep.subr.mxu0 0.0
    %1534 = vmatpush2.msra.mxu0 %v1294
    %1535 = vmatprep.subr.mxu0 0.0
    %1536 = vmatpush2.msra.mxu0 %v1293
    %1537 = vmatprep.subr.mxu0 0.0
    %1538 = vmatpush2.msra.mxu0 %v1292
    %1539 = vmatprep.subr.mxu0 0.0
    %1540 = vmatpush2.msra.mxu0 %v1291
    %1541 = vmatprep.subr.mxu0 0.0
    %1542 = vmatpush2.msra.mxu0 %v1290
    %1543 = vmatprep.subr.mxu0 0.0
    %1544 = vmatpush2.msra.mxu0 %v1289
    %1545 = vmatprep.subr.mxu0 0.0
    %1546 = vmatpush2.msra.mxu0 %v1288
    %1547 = vmatprep.mubr.f32.mxu0 %v1001
    %1548 = vmatmul.mubr.f32.gmra.mxu0 %v898
    %v1549 = vpop.f32.mrf.mxu0
    %v1550 = vadd.f32 %v1480, %v1549
    %v1551 = vpop.f32.mrf.mxu0
    %1552 = vdwg.mxu0
    %1553 = vmatprep.subr.mxu0 0.0
    %1554 = vmatpush1.msra.mxu0 %v1319
    %1555 = vmatprep.subr.mxu0 0.0
    %1556 = vmatpush1.msra.mxu0 %v1318
    %1557 = vmatprep.subr.mxu0 0.0
    %1558 = vmatpush1.msra.mxu0 %v1317
    %1559 = vmatprep.subr.mxu0 0.0
    %1560 = vmatpush1.msra.mxu0 %v1316
    %1561 = vmatprep.subr.mxu0 0.0
    %1562 = vmatpush1.msra.mxu0 %v1315
    %1563 = vmatprep.subr.mxu0 0.0
    %1564 = vmatpush1.msra.mxu0 %v1314
    %1565 = vmatprep.subr.mxu0 0.0
    %1566 = vmatpush1.msra.mxu0 %v1313
    %1567 = vmatprep.subr.mxu0 0.0
    %1568 = vmatpush1.msra.mxu0 %v1312
    %1569 = vmatprep.subr.mxu0 0.0
    %1570 = vmatpush1.msra.mxu0 %v1311
    %1571 = vmatprep.subr.mxu0 0.0
    %1572 = vmatpush1.msra.mxu0 %v1310
    %1573 = vmatprep.subr.mxu0 0.0
    %1574 = vmatpush1.msra.mxu0 %v1309
    %1575 = vmatprep.subr.mxu0 0.0
    %1576 = vmatpush1.msra.mxu0 %v1308
    %1577 = vmatprep.subr.mxu0 0.0
    %1578 = vmatpush1.msra.mxu0 %v1307
    %1579 = vmatprep.subr.mxu0 0.0
    %1580 = vmatpush1.msra.mxu0 %v1306
    %1581 = vmatprep.subr.mxu0 0.0
    %1582 = vmatpush1.msra.mxu0 %v1305
    %1583 = vmatprep.subr.mxu0 0.0
    %1584 = vmatpush1.msra.mxu0 %v1304
    %1585 = vmatprep.subr.mxu0 0.0
    %1586 = vmatpush2.msra.mxu0 %v1335
    %1587 = vmatprep.subr.mxu0 0.0
    %1588 = vmatpush2.msra.mxu0 %v1334
    %1589 = vmatprep.subr.mxu0 0.0
    %1590 = vmatpush2.msra.mxu0 %v1333
    %1591 = vmatprep.subr.mxu0 0.0
    %1592 = vmatpush2.msra.mxu0 %v1332
    %1593 = vmatprep.subr.mxu0 0.0
    %1594 = vmatpush2.msra.mxu0 %v1331
    %1595 = vmatprep.subr.mxu0 0.0
    %1596 = vmatpush2.msra.mxu0 %v1330
    %1597 = vmatprep.subr.mxu0 0.0
    %1598 = vmatpush2.msra.mxu0 %v1329
    %1599 = vmatprep.subr.mxu0 0.0
    %1600 = vmatpush2.msra.mxu0 %v1328
    %1601 = vmatprep.subr.mxu0 0.0
    %1602 = vmatpush2.msra.mxu0 %v1327
    %1603 = vmatprep.subr.mxu0 0.0
    %1604 = vmatpush2.msra.mxu0 %v1326
    %1605 = vmatprep.subr.mxu0 0.0
    %1606 = vmatpush2.msra.mxu0 %v1325
    %1607 = vmatprep.subr.mxu0 0.0
    %1608 = vmatpush2.msra.mxu0 %v1324
    %1609 = vmatprep.subr.mxu0 0.0
    %1610 = vmatpush2.msra.mxu0 %v1323
    %1611 = vmatprep.subr.mxu0 0.0
    %1612 = vmatpush2.msra.mxu0 %v1322
    %1613 = vmatprep.subr.mxu0 0.0
    %1614 = vmatpush2.msra.mxu0 %v1321
    %1615 = vmatprep.subr.mxu0 0.0
    %1616 = vmatpush2.msra.mxu0 %v1320
    %1617 = vmatprep.mubr.f32.mxu0 %v1207
    %1618 = vmatmul.mubr.f32.gmra.mxu0 %v1104
    %v1619 = vpop.f32.mrf.mxu0
    %v1620 = vadd.f32 %v1550, %v1619
    %v1621 = vpop.f32.mrf.mxu0
    %1622 = vdwg.mxu0
    %vm1623 = vcmask 130048
    %1624 = vst.msk [vmem:[#allocation2] sm:$0xff] %vm1623, %v1620
    // Predicated region
    $region22: #{tpu_custom_call.1} parent=1 // pred_check
      _
    $region23: #{tpu_custom_call.1} parent=1 // pred_check_branch
      %1626 = sbr.rel (0) target = $region25
    $region24: #{tpu_custom_call.1} parent=1 // pred_region
      %s1628 = ssub.s32 128, 128
      %1629 = vsyncadd [#allocation3], %s1628
      %s1631 = sshll.u32 [#allocation2], 4
      %s1632 = int_to_ptr.vmem [resolvable:$true] %s1631
      %1634 = dma.vmem_to_hbm [thread:$0]  %s1632, 128, %s5, [#allocation3]
    $region25: #{tpu_custom_call.1} parent=1 // pred_fallthru
      _
    // Predicated region
    $region26: #{tpu_custom_call.1} parent=1 // pred_check
      _
    $region27: #{tpu_custom_call.1} parent=1 // pred_check_branch
      %1636 = sbr.rel (0) target = $region29
    $region28: #{tpu_custom_call.1} parent=1 // pred_region
      %1637 = dma.done [#allocation3], 128
    $region29: #{tpu_custom_call.1} parent=1 // pred_fallthru
      _
    %1638 = vsyncpa [#allocation3], 1

</llo_original>
